<compile_context>
chip_gen: v6e
topology: v6e:2x2x1
jax: 0.10.0
libtpu: 0.0.40
codegen_flags: <defaults>
</compile_context>

<pallas_src>
from functools import partial

import jax
import jax.numpy as jnp
from jax.experimental import pallas as pl
from jax.experimental.pallas import tpu as pltpu

SELU_ALPHA = 1.6732632423543772
SELU_SCALE = 1.0507009873554805


def _round_up(n, m):
    return ((n + m - 1) // m) * m


# ----------------------------------------------------------------------------
# Fused Pallas kernel: conv1 -> SELU -> conv2 -> SELU -> fc1 -> SELU -> fc2
# (convs pre-lowered to dense matmuls; one batch tile per grid step)
# ----------------------------------------------------------------------------
def _net_kernel(compute_dtype,
                x_ref,
                w1_ref, b1_ref, w2_ref, b2_ref,
                w3_ref, b3_ref, w4_ref, b4_ref,
                o_ref):
    def dense(h, w_ref, b_ref, apply_selu):
        y = jnp.dot(h, w_ref[...], preferred_element_type=jnp.float32)
        y = y + b_ref[...]                                   # (1, N) f32 broadcast
        if apply_selu:
            neg = SELU_ALPHA * (jnp.exp(jnp.minimum(y, 0.0)) - 1.0)
            y = SELU_SCALE * jnp.where(y > 0.0, y, neg)
        return y

    h = x_ref[...]                                            # (TB, K1p)
    h = dense(h, w1_ref, b1_ref, True).astype(compute_dtype)  # conv1 (dense-lowered)
    h = dense(h, w2_ref, b2_ref, True).astype(compute_dtype)  # conv2 (dense-lowered)
    h = dense(h, w3_ref, b3_ref, True).astype(compute_dtype)  # fc1
    o_ref[...] = dense(h, w4_ref, b4_ref, False).astype(o_ref.dtype)  # fc2


# ----------------------------------------------------------------------------
# One-time parameter preprocessing (hoisted out of the forward path)
# ----------------------------------------------------------------------------
def _conv_as_dense(w, in_chw, stride):
    """Dense (Cin*H*W, Cout*OH*OW) matrix equivalent to a VALID strided conv.

    Built by pushing the identity basis through lax.conv.  Row order is the
    NCHW flatten of the input; column order is the NCHW flatten of the output
    (== PyTorch's .view ordering).  Entries are exact copies of w (one nonzero
    product per basis image), so no precision is lost here.
    """
    cin, h, wd = in_chw
    n_in = cin * h * wd
    eye = jnp.eye(n_in, dtype=jnp.float32).reshape(n_in, cin, h, wd)
    cols = jax.lax.conv_general_dilated(
        eye, w.astype(jnp.float32), (stride, stride), "VALID",
        dimension_numbers=("NCHW", "OIHW", "NCHW"))
    return cols.reshape(n_in, -1)


def preprocess_params(params, in_hw=(30, 45), compute_dtype=jnp.float32):
    """Repack PyTorch-layout params into padded, MXU-ready (K, N) matrices."""
    h, w = in_hw
    w1, b1 = params["conv1_w"], params["conv1_b"]
    w2, b2 = params["conv2_w"], params["conv2_b"]
    wf1, bf1 = params["fc1_w"], params["fc1_b"]
    wf2, bf2 = params["fc2_w"], params["fc2_b"]

    oh1, ow1 = (h - 6) // 3 + 1, (w - 6) // 3 + 1
    oh2, ow2 = (oh1 - 3) // 2 + 1, (ow1 - 3) // 2 + 1
    c1, c2 = w1.shape[0], w2.shape[0]
    n_flat = c2 * oh2 * ow2
    assert n_flat == wf1.shape[1], (n_flat, wf1.shape)

    m1 = _conv_as_dense(w1, (1, h, w), 3)            # (h*w,        c1*oh1*ow1)
    m2 = _conv_as_dense(w2, (c1, oh1, ow1), 2)       # (c1*oh1*ow1, n_flat)
    b1e = jnp.repeat(b1, oh1 * ow1)                  # NCHW column order
    b2e = jnp.repeat(b2, oh2 * ow2)

    n_act = wf2.shape[0]
    n_hid = wf1.shape[0]

    # Zero-pad every matmul dim to a multiple of 128 (lane-dense MXU + stores).
    k1 = _round_up(h * w, 128)
    n1 = _round_up(m1.shape[1], 128)
    n2 = _round_up(n_flat, 128)
    n3 = _round_up(n_hid, 128)
    n4 = _round_up(n_act, 128)

    def pad2(a, rows, cols):
        return jnp.zeros((rows, cols), jnp.float32).at[:a.shape[0], :a.shape[1]].set(a)

    def pad_bias(a, cols):
        return jnp.zeros((1, cols), jnp.float32).at[0, :a.shape[0]].set(a)

    cd = compute_dtype
    return {
        "w1": pad2(m1, k1, n1).astype(cd),     "b1": pad_bias(b1e, n1),
        "w2": pad2(m2, n1, n2).astype(cd),     "b2": pad_bias(b2e, n2),
        "w3": pad2(wf1.T, n2, n3).astype(cd),  "b3": pad_bias(bf1, n3),
        "w4": pad2(wf2.T, n3, n4).astype(cd),  "b4": pad_bias(bf2, n4),
        "n_actions": n_act,
        "in_features": 1 * h * w,
        "k_pad": k1,
        "compute_dtype": cd,
    }


# ----------------------------------------------------------------------------
# Forward pass: ONE pallas_call, grid over batch tiles only
# ----------------------------------------------------------------------------
def net_forward(x, prep, *, batch_tile=128):
    """x: (B, 1, H, W) NCHW float32 -> (B, n_actions) float32."""
    B = x.shape[0]
    cd = prep["compute_dtype"]
    k_raw, k_pad = prep["in_features"], prep["k_pad"]

    x2 = x.reshape(B, -1)                              # NCHW flatten (C=1) -> (B, H*W)
    assert x2.shape[1] == k_raw, (x2.shape, k_raw)

    tb = batch_tile if B >= batch_tile else _round_up(B, 8)
    b_pad = _round_up(B, tb)
    x2 = jnp.pad(x2, ((0, b_pad - B), (0, k_pad - k_raw))).astype(cd)

    n4 = prep["w4"].shape[1]
    weight_names = ("w1", "b1", "w2", "b2", "w3", "b3", "w4", "b4")
    weights = [prep[n] for n in weight_names]
    # Constant index maps: weights are fetched into VMEM once and stay resident.
    weight_specs = [pl.BlockSpec(wa.shape, lambda i: (0, 0)) for wa in weights]

    out = pl.pallas_call(
        partial(_net_kernel, cd),
        out_shape=jax.ShapeDtypeStruct((b_pad, n4), jnp.float32),
        grid=(b_pad // tb,),
        in_specs=[pl.BlockSpec((tb, k_pad), lambda i: (i, 0))] + weight_specs,
        out_specs=pl.BlockSpec((tb, n4), lambda i: (i, 0)),
        compiler_params=pltpu.CompilerParams(
            dimension_semantics=("parallel",),
            vmem_limit_bytes=40 * 1024 * 1024,
        ),
    )(x2, *weights)

    return out[:B, :prep["n_actions"]]


# ----------------------------------------------------------------------------
# Deterministic parameter init (synthetic; matches nn.Module shapes)
# ----------------------------------------------------------------------------
def init_params(n_actions, key):
    ks = jax.random.split(key, 8)

    def nrm(k, shape, scale=0.1):
        return (scale * jax.random.normal(k, shape)).astype(jnp.float32)

    return {
        "conv1_w": nrm(ks[0], (8, 1, 6, 6)),
        "conv1_b": nrm(ks[1], (8,)),
        "conv2_w": nrm(ks[2], (8, 8, 3, 3)),
        "conv2_b": nrm(ks[3], (8,)),
        "fc1_w":   nrm(ks[4], (128, 192)),
        "fc1_b":   nrm(ks[5], (128,)),
        "fc2_w":   nrm(ks[6], (n_actions, 128)),
        "fc2_b":   nrm(ks[7], (n_actions,)),
    }


# ----------------------------------------------------------------------------
# Pure-JAX reference (for correctness check)
# ----------------------------------------------------------------------------
def _selu(x):
    return SELU_SCALE * jnp.where(
        x > 0, x, SELU_ALPHA * (jnp.exp(jnp.minimum(x, 0.0)) - 1.0))


def net_forward_ref(x, params):
    dn = ("NCHW", "OIHW", "NCHW")
    y = jax.lax.conv_general_dilated(x, params["conv1_w"], (3, 3), "VALID",
                                     dimension_numbers=dn)
    y = _selu(y + params["conv1_b"][None, :, None, None])
    y = jax.lax.conv_general_dilated(y, params["conv2_w"], (2, 2), "VALID",
                                     dimension_numbers=dn)
    y = _selu(y + params["conv2_b"][None, :, None, None])
    y = y.reshape(y.shape[0], -1)
    y = _selu(y @ params["fc1_w"].T + params["fc1_b"])
    return y @ params["fc2_w"].T + params["fc2_b"]


if __name__ == "__main__":
    N_ACTIONS = 8
    key = jax.random.PRNGKey(0)
    kx, kx2, kp = jax.random.split(key, 3)

    params = init_params(N_ACTIONS, kp)

    # --- small batch (B=2), f32 compute: tight check vs. XLA reference ------
    x_small = jax.random.normal(kx, (2, 1, 30, 45), dtype=jnp.float32)
    ref_small = jax.block_until_ready(net_forward_ref(x_small, params))

    prep_f32 = preprocess_params(params, in_hw=(30, 45), compute_dtype=jnp.float32)
    out_small = jax.block_until_ready(net_forward(x_small, prep_f32))
    assert out_small.shape == (2, N_ACTIONS), out_small.shape
    if not jnp.allclose(out_small, ref_small, atol=2e-3, rtol=2e-3):
        raise AssertionError("f32 fused kernel does not match JAX reference (B=2)")

    # --- larger batch (B=200): exercises the batch-tiled 'parallel' grid ----
    x_big = jax.random.normal(kx2, (200, 1, 30, 45), dtype=jnp.float32)
    ref_big = jax.block_until_ready(net_forward_ref(x_big, params))
    out_big = jax.block_until_ready(net_forward(x_big, prep_f32, batch_tile=128))
    assert out_big.shape == (200, N_ACTIONS), out_big.shape
    if not jnp.allclose(out_big, ref_big, atol=2e-3, rtol=2e-3):
        raise AssertionError("f32 fused kernel does not match JAX reference (B=200)")

    # --- bf16 MXU path (f32 accumulation): looser tolerance -----------------
    prep_bf16 = preprocess_params(params, in_hw=(30, 45), compute_dtype=jnp.bfloat16)
    out_bf16 = jax.block_until_ready(net_forward(x_small, prep_bf16))
    assert out_bf16.shape == (2, N_ACTIONS), out_bf16.shape
    if not jnp.allclose(out_bf16, ref_small, atol=5e-2, rtol=5e-2):
        raise AssertionError("bf16 fused kernel deviates too much from reference")

    print("KERNEL_OK")
</pallas_src>

<mosaic_0001>
module attributes {stable_mosaic.version = 11 : i64} {
  func.func @_net_kernel(%arg0: i32, %arg1: memref<8x1408xf32, #tpu.memory_space<vmem>>, %arg2: memref<1408x1024xf32, #tpu.memory_space<vmem>>, %arg3: memref<1x1024xf32, #tpu.memory_space<vmem>>, %arg4: memref<1024x256xf32, #tpu.memory_space<vmem>>, %arg5: memref<1x256xf32, #tpu.memory_space<vmem>>, %arg6: memref<256x128xf32, #tpu.memory_space<vmem>>, %arg7: memref<1x128xf32, #tpu.memory_space<vmem>>, %arg8: memref<128x128xf32, #tpu.memory_space<vmem>>, %arg9: memref<1x128xf32, #tpu.memory_space<vmem>>, %arg10: memref<8x128xf32, #tpu.memory_space<vmem>>) attributes {dimension_semantics = [#tpu.dimension_semantics<parallel>], iteration_bounds = array<i64: 1>, scalar_prefetch = 0 : i64, scratch_operands = 0 : i64, tpu.core_type = #tpu.core_type<tc>, window_params = [{transform_indices = @transform_0, window_bounds = array<i64: 8, 1408>}, {pipeline_mode = #tpu.pipeline_mode<synchronous>, transform_indices = @transform_1, window_bounds = array<i64: 1408, 1024>}, {pipeline_mode = #tpu.pipeline_mode<synchronous>, transform_indices = @transform_2, window_bounds = array<i64: 1, 1024>}, {pipeline_mode = #tpu.pipeline_mode<synchronous>, transform_indices = @transform_3, window_bounds = array<i64: 1024, 256>}, {pipeline_mode = #tpu.pipeline_mode<synchronous>, transform_indices = @transform_4, window_bounds = array<i64: 1, 256>}, {pipeline_mode = #tpu.pipeline_mode<synchronous>, transform_indices = @transform_5, window_bounds = array<i64: 256, 128>}, {pipeline_mode = #tpu.pipeline_mode<synchronous>, transform_indices = @transform_6, window_bounds = array<i64: 1, 128>}, {pipeline_mode = #tpu.pipeline_mode<synchronous>, transform_indices = @transform_7, window_bounds = array<i64: 128, 128>}, {pipeline_mode = #tpu.pipeline_mode<synchronous>, transform_indices = @transform_8, window_bounds = array<i64: 1, 128>}, {transform_indices = @transform_9, window_bounds = array<i64: 8, 128>}]} {
    %c0 = arith.constant 0 : index
    %c0_0 = arith.constant 0 : index
    %0 = vector.load %arg1[%c0, %c0_0] : memref<8x1408xf32, #tpu.memory_space<vmem>>, vector<8x1408xf32>
    %c0_1 = arith.constant 0 : index
    %c0_2 = arith.constant 0 : index
    %1 = vector.load %arg2[%c0_1, %c0_2] : memref<1408x1024xf32, #tpu.memory_space<vmem>>, vector<1408x1024xf32>
    %cst = arith.constant dense<0.000000e+00> : vector<8x1024xf32>
    %2 = tpu.matmul %0, %1, %cst {dimension_numbers = #tpu.dot_dimension_numbers<[1], [0], [0], [1], [0, 0, 1, 1], [], []>} : vector<8x1408xf32>, vector<1408x1024xf32>, vector<8x1024xf32> -> vector<8x1024xf32>
    %c0_3 = arith.constant 0 : index
    %c0_4 = arith.constant 0 : index
    %3 = vector.load %arg3[%c0_3, %c0_4] : memref<1x1024xf32, #tpu.memory_space<vmem>>, vector<1x1024xf32>
    %4 = vector.broadcast %3 : vector<1x1024xf32> to vector<8x1024xf32>
    %5 = arith.addf %2, %4 : vector<8x1024xf32>
    %cst_5 = arith.constant 0.000000e+00 : f32
    %6 = vector.broadcast %cst_5 : f32 to vector<8x1024xf32>
    %7 = arith.minimumf %5, %6 : vector<8x1024xf32>
    %8 = math.exp %7 : vector<8x1024xf32>
    %cst_6 = arith.constant 1.000000e+00 : f32
    %9 = vector.broadcast %cst_6 : f32 to vector<8x1024xf32>
    %10 = arith.subf %8, %9 : vector<8x1024xf32>
    %cst_7 = arith.constant 1.67326319 : f32
    %11 = vector.broadcast %cst_7 : f32 to vector<8x1024xf32>
    %12 = arith.mulf %11, %10 : vector<8x1024xf32>
    %cst_8 = arith.constant 0.000000e+00 : f32
    %13 = vector.broadcast %cst_8 : f32 to vector<8x1024xf32>
    %14 = arith.cmpf ogt, %5, %13 : vector<8x1024xf32>
    %15 = arith.select %14, %5, %12 : vector<8x1024xi1>, vector<8x1024xf32>
    %cst_9 = arith.constant 1.05070102 : f32
    %16 = vector.broadcast %cst_9 : f32 to vector<8x1024xf32>
    %17 = arith.mulf %16, %15 : vector<8x1024xf32>
    %c0_10 = arith.constant 0 : index
    %c0_11 = arith.constant 0 : index
    %18 = vector.load %arg4[%c0_10, %c0_11] : memref<1024x256xf32, #tpu.memory_space<vmem>>, vector<1024x256xf32>
    %cst_12 = arith.constant dense<0.000000e+00> : vector<8x256xf32>
    %19 = tpu.matmul %17, %18, %cst_12 {dimension_numbers = #tpu.dot_dimension_numbers<[1], [0], [0], [1], [0, 0, 1, 1], [], []>} : vector<8x1024xf32>, vector<1024x256xf32>, vector<8x256xf32> -> vector<8x256xf32>
    %c0_13 = arith.constant 0 : index
    %c0_14 = arith.constant 0 : index
    %20 = vector.load %arg5[%c0_13, %c0_14] : memref<1x256xf32, #tpu.memory_space<vmem>>, vector<1x256xf32>
    %21 = vector.broadcast %20 : vector<1x256xf32> to vector<8x256xf32>
    %22 = arith.addf %19, %21 : vector<8x256xf32>
    %cst_15 = arith.constant 0.000000e+00 : f32
    %23 = vector.broadcast %cst_15 : f32 to vector<8x256xf32>
    %24 = arith.minimumf %22, %23 : vector<8x256xf32>
    %25 = math.exp %24 : vector<8x256xf32>
    %cst_16 = arith.constant 1.000000e+00 : f32
    %26 = vector.broadcast %cst_16 : f32 to vector<8x256xf32>
    %27 = arith.subf %25, %26 : vector<8x256xf32>
    %cst_17 = arith.constant 1.67326319 : f32
    %28 = vector.broadcast %cst_17 : f32 to vector<8x256xf32>
    %29 = arith.mulf %28, %27 : vector<8x256xf32>
    %cst_18 = arith.constant 0.000000e+00 : f32
    %30 = vector.broadcast %cst_18 : f32 to vector<8x256xf32>
    %31 = arith.cmpf ogt, %22, %30 : vector<8x256xf32>
    %32 = arith.select %31, %22, %29 : vector<8x256xi1>, vector<8x256xf32>
    %cst_19 = arith.constant 1.05070102 : f32
    %33 = vector.broadcast %cst_19 : f32 to vector<8x256xf32>
    %34 = arith.mulf %33, %32 : vector<8x256xf32>
    %c0_20 = arith.constant 0 : index
    %c0_21 = arith.constant 0 : index
    %35 = vector.load %arg6[%c0_20, %c0_21] : memref<256x128xf32, #tpu.memory_space<vmem>>, vector<256x128xf32>
    %cst_22 = arith.constant dense<0.000000e+00> : vector<8x128xf32>
    %36 = tpu.matmul %34, %35, %cst_22 {dimension_numbers = #tpu.dot_dimension_numbers<[1], [0], [0], [1], [0, 0, 1, 1], [], []>} : vector<8x256xf32>, vector<256x128xf32>, vector<8x128xf32> -> vector<8x128xf32>
    %c0_23 = arith.constant 0 : index
    %c0_24 = arith.constant 0 : index
    %37 = vector.load %arg7[%c0_23, %c0_24] : memref<1x128xf32, #tpu.memory_space<vmem>>, vector<1x128xf32>
    %38 = vector.broadcast %37 : vector<1x128xf32> to vector<8x128xf32>
    %39 = arith.addf %36, %38 : vector<8x128xf32>
    %cst_25 = arith.constant 0.000000e+00 : f32
    %40 = vector.broadcast %cst_25 : f32 to vector<8x128xf32>
    %41 = arith.minimumf %39, %40 : vector<8x128xf32>
    %42 = math.exp %41 : vector<8x128xf32>
    %cst_26 = arith.constant 1.000000e+00 : f32
    %43 = vector.broadcast %cst_26 : f32 to vector<8x128xf32>
    %44 = arith.subf %42, %43 : vector<8x128xf32>
    %cst_27 = arith.constant 1.67326319 : f32
    %45 = vector.broadcast %cst_27 : f32 to vector<8x128xf32>
    %46 = arith.mulf %45, %44 : vector<8x128xf32>
    %cst_28 = arith.constant 0.000000e+00 : f32
    %47 = vector.broadcast %cst_28 : f32 to vector<8x128xf32>
    %48 = arith.cmpf ogt, %39, %47 : vector<8x128xf32>
    %49 = arith.select %48, %39, %46 : vector<8x128xi1>, vector<8x128xf32>
    %cst_29 = arith.constant 1.05070102 : f32
    %50 = vector.broadcast %cst_29 : f32 to vector<8x128xf32>
    %51 = arith.mulf %50, %49 : vector<8x128xf32>
    %c0_30 = arith.constant 0 : index
    %c0_31 = arith.constant 0 : index
    %52 = vector.load %arg8[%c0_30, %c0_31] : memref<128x128xf32, #tpu.memory_space<vmem>>, vector<128x128xf32>
    %cst_32 = arith.constant dense<0.000000e+00> : vector<8x128xf32>
    %53 = tpu.matmul %51, %52, %cst_32 {dimension_numbers = #tpu.dot_dimension_numbers<[1], [0], [0], [1], [0, 0, 1, 1], [], []>} : vector<8x128xf32>, vector<128x128xf32>, vector<8x128xf32> -> vector<8x128xf32>
    %c0_33 = arith.constant 0 : index
    %c0_34 = arith.constant 0 : index
    %54 = vector.load %arg9[%c0_33, %c0_34] : memref<1x128xf32, #tpu.memory_space<vmem>>, vector<1x128xf32>
    %55 = vector.broadcast %54 : vector<1x128xf32> to vector<8x128xf32>
    %56 = arith.addf %53, %55 : vector<8x128xf32>
    %c0_35 = arith.constant 0 : index
    %c0_36 = arith.constant 0 : index
    %57 = vector.load %arg10[%c0_35, %c0_36] : memref<8x128xf32, #tpu.memory_space<vmem>>, vector<8x128xf32>
    tpu.vector_store %arg10[%c0_35, %c0_36], %56 {strides = array<i32>} : memref<8x128xf32, #tpu.memory_space<vmem>>, vector<8x128xf32>,
    return
  }
  func.func @transform_0(%arg0: i32) -> (i32, i32) {
    %c0_i32 = arith.constant 0 : i32
    %c0_i32_0 = arith.constant 0 : i32
    return %arg0, %c0_i32 : i32, i32
  }
  func.func @transform_1(%arg0: i32) -> (i32, i32) {
    %c0_i32 = arith.constant 0 : i32
    %c0_i32_0 = arith.constant 0 : i32
    %c0_i32_1 = arith.constant 0 : i32
    return %c0_i32, %c0_i32_0 : i32, i32
  }
  func.func @transform_2(%arg0: i32) -> (i32, i32) {
    %c0_i32 = arith.constant 0 : i32
    %c0_i32_0 = arith.constant 0 : i32
    %c0_i32_1 = arith.constant 0 : i32
    return %c0_i32, %c0_i32_0 : i32, i32
  }
  func.func @transform_3(%arg0: i32) -> (i32, i32) {
    %c0_i32 = arith.constant 0 : i32
    %c0_i32_0 = arith.constant 0 : i32
    %c0_i32_1 = arith.constant 0 : i32
    return %c0_i32, %c0_i32_0 : i32, i32
  }
  func.func @transform_4(%arg0: i32) -> (i32, i32) {
    %c0_i32 = arith.constant 0 : i32
    %c0_i32_0 = arith.constant 0 : i32
    %c0_i32_1 = arith.constant 0 : i32
    return %c0_i32, %c0_i32_0 : i32, i32
  }
  func.func @transform_5(%arg0: i32) -> (i32, i32) {
    %c0_i32 = arith.constant 0 : i32
    %c0_i32_0 = arith.constant 0 : i32
    %c0_i32_1 = arith.constant 0 : i32
    return %c0_i32, %c0_i32_0 : i32, i32
  }
  func.func @transform_6(%arg0: i32) -> (i32, i32) {
    %c0_i32 = arith.constant 0 : i32
    %c0_i32_0 = arith.constant 0 : i32
    %c0_i32_1 = arith.constant 0 : i32
    return %c0_i32, %c0_i32_0 : i32, i32
  }
  func.func @transform_7(%arg0: i32) -> (i32, i32) {
    %c0_i32 = arith.constant 0 : i32
    %c0_i32_0 = arith.constant 0 : i32
    %c0_i32_1 = arith.constant 0 : i32
    return %c0_i32, %c0_i32_0 : i32, i32
  }
  func.func @transform_8(%arg0: i32) -> (i32, i32) {
    %c0_i32 = arith.constant 0 : i32
    %c0_i32_0 = arith.constant 0 : i32
    %c0_i32_1 = arith.constant 0 : i32
    return %c0_i32, %c0_i32_0 : i32, i32
  }
  func.func @transform_9(%arg0: i32) -> (i32, i32) {
    %c0_i32 = arith.constant 0 : i32
    %c0_i32_0 = arith.constant 0 : i32
    return %arg0, %c0_i32 : i32, i32
  }
}

</mosaic_0001>

<llo_original>
// kernel: tpu_custom_call.1
$region0: #{tpu_custom_call.1}
  #allocation0 [shape = 'u32[]', space=smem, size = 0x4, offset = 0x4, fixed_abs, tag = 'smem constant byte address 0x4 - core index']
  #allocation1 [shape = 'u32[144,128]{1,0:T(1,128)}', space=vmem, size = 0x12000, scoped, tag = 'internal scratch']
  %s0 = inlined_call_operand.hbm [shape: f32[8,1408], index: 0, kind: input, shape index: {}]
  %s1 = inlined_call_operand.hbm [shape: f32[1408,1024], index: 1, kind: input, shape index: {}]
  %s2 = inlined_call_operand.hbm [shape: f32[1,1024], index: 2, kind: input, shape index: {}]
  %s3 = inlined_call_operand.hbm [shape: f32[1024,256], index: 3, kind: input, shape index: {}]
  %s4 = inlined_call_operand.hbm [shape: f32[1,256], index: 4, kind: input, shape index: {}]
  %s5 = inlined_call_operand.hbm [shape: f32[256,128], index: 5, kind: input, shape index: {}]
  %s6 = inlined_call_operand.hbm [shape: f32[1,128], index: 6, kind: input, shape index: {}]
  %s7 = inlined_call_operand.hbm [shape: f32[128,128], index: 7, kind: input, shape index: {}]
  %s8 = inlined_call_operand.hbm [shape: f32[1,128], index: 8, kind: input, shape index: {}]
  %s9 = inlined_call_operand.hbm [shape: f32[8,128], index: 9, kind: output, shape index: {}]
  %s10 = sld [smem:[#allocation0]]
  $region82: #{tpu_custom_call.1} parent=0
    _
  %s12 = ssub.s32 1, %s10
  %s13 = scalar_select 0, %s12, %s10
  $region1: #{tpu_custom_call.1} parent=0
    #allocation2 [shape = 'u8[45056]{0}', space=vmem, size = 0xb000, scoped, tag = 'input window, operand 0, single buffered']
    #allocation3 [shape = 's32[1]{0}', space=sflag, size = 0x4, scoped, tag = 'scoped memory for tpu_custom_call.1']
    #allocation4 [shape = 's32[1]{0}', space=sflag, size = 0x4, scoped, tag = 'scoped memory for tpu_custom_call.1']
    #allocation5 [shape = 'u8[5767168]{0}', space=vmem, size = 0x580000, scoped, tag = 'input window, operand 1, single buffered']
    #allocation6 [shape = 's32[1]{0}', space=sflag, size = 0x4, scoped, tag = 'scoped memory for tpu_custom_call.1']
    #allocation7 [shape = 'u8[4096]{0}', space=vmem, size = 0x1000, scoped, tag = 'input window, operand 2, single buffered']
    #allocation8 [shape = 'u8[1048576]{0}', space=vmem, size = 0x100000, scoped, tag = 'input window, operand 3, single buffered']
    #allocation9 [shape = 's32[1]{0}', space=sflag, size = 0x4, scoped, tag = 'scoped memory for tpu_custom_call.1']
    #allocation10 [shape = 'u8[1024]{0}', space=vmem, size = 0x400, scoped, tag = 'input window, operand 4, single buffered']
    #allocation11 [shape = 'u8[131072]{0}', space=vmem, size = 0x20000, scoped, tag = 'input window, operand 5, single buffered']
    #allocation12 [shape = 's32[1]{0}', space=sflag, size = 0x4, scoped, tag = 'scoped memory for tpu_custom_call.1']
    #allocation13 [shape = 'u8[512]{0}', space=vmem, size = 0x400, scoped, tag = 'input window, operand 6, single buffered']
    #allocation14 [shape = 'u8[65536]{0}', space=vmem, size = 0x10000, scoped, tag = 'input window, operand 7, single buffered']
    #allocation15 [shape = 's32[1]{0}', space=sflag, size = 0x4, scoped, tag = 'scoped memory for tpu_custom_call.1']
    #allocation16 [shape = 'u8[512]{0}', space=vmem, size = 0x400, scoped, tag = 'input window, operand 8, single buffered']
    #allocation17 [shape = 'u8[4096]{0}', space=vmem, size = 0x1000, scoped, tag = 'output window, operand 0, single buffered']
    %14 = vsyncpa [#allocation3], 0
    %15 = vsyncpa [#allocation6], 0
    %16 = vsyncpa [#allocation9], 0
    %17 = vsyncpa [#allocation12], 0
    %18 = vsyncpa [#allocation15], 0
    %19 = vsyncpa [#allocation4], 0
    // Predicated region
    $region2: #{tpu_custom_call.1} parent=1 // pred_check
      _
    $region3: #{tpu_custom_call.1} parent=1 // pred_check_branch
      %21 = sbr.rel (0) target = $region5
    $region4: #{tpu_custom_call.1} parent=1 // pred_region
      %s23 = ssub.s32 1408, 1408
      %24 = vsyncadd [#allocation3], %s23
      %s26 = sshll.u32 [#allocation2], 4
      %s27 = int_to_ptr.vmem [resolvable:$true] %s26
      %29 = dma.hbm_to_vmem [thread:$0]  %s0, 1408, %s27, [#allocation3]
    $region5: #{tpu_custom_call.1} parent=1 // pred_fallthru
      _
    // Predicated region
    $region6: #{tpu_custom_call.1} parent=1 // pred_check
      _
    $region7: #{tpu_custom_call.1} parent=1 // pred_check_branch
      %31 = sbr.rel (0) target = $region9
    $region8: #{tpu_custom_call.1} parent=1 // pred_region
      %s33 = ssub.s32 180224, 180224
      %34 = vsyncadd [#allocation6], %s33
      %s35 = sshll.u32 [#allocation5], 4
      %s36 = int_to_ptr.vmem [resolvable:$true] %s35
      %41 = dma.hbm_to_vmem [thread:$0]  %s1, 180224, %s36, [#allocation6], 1024, 1024, 64
    $region9: #{tpu_custom_call.1} parent=1 // pred_fallthru
      _
    // Predicated region
    $region10: #{tpu_custom_call.1} parent=1 // pred_check
      _
    $region11: #{tpu_custom_call.1} parent=1 // pred_check_branch
      %43 = sbr.rel (0) target = $region13
    $region12: #{tpu_custom_call.1} parent=1 // pred_region
      %s45 = ssub.s32 128, 128
      %46 = vsyncadd [#allocation6], %s45
      %s48 = sshll.u32 [#allocation7], 4
      %s49 = int_to_ptr.vmem [resolvable:$true] %s48
      %51 = dma.hbm_to_vmem [thread:$0]  %s2, 128, %s49, [#allocation6]
    $region13: #{tpu_custom_call.1} parent=1 // pred_fallthru
      _
    // Predicated region
    $region14: #{tpu_custom_call.1} parent=1 // pred_check
      _
    $region15: #{tpu_custom_call.1} parent=1 // pred_check_branch
      %53 = sbr.rel (0) target = $region17
    $region16: #{tpu_custom_call.1} parent=1 // pred_region
      %s55 = ssub.s32 32768, 32768
      %56 = vsyncadd [#allocation9], %s55
      %s57 = sshll.u32 [#allocation8], 4
      %s58 = int_to_ptr.vmem [resolvable:$true] %s57
      %63 = dma.hbm_to_vmem [thread:$0]  %s3, 32768, %s58, [#allocation9], 256, 256, 16
    $region17: #{tpu_custom_call.1} parent=1 // pred_fallthru
      _
    // Predicated region
    $region18: #{tpu_custom_call.1} parent=1 // pred_check
      _
    $region19: #{tpu_custom_call.1} parent=1 // pred_check_branch
      %65 = sbr.rel (0) target = $region21
    $region20: #{tpu_custom_call.1} parent=1 // pred_region
      %s67 = ssub.s32 32, 32
      %68 = vsyncadd [#allocation9], %s67
      %s70 = sshll.u32 [#allocation10], 4
      %s71 = int_to_ptr.vmem [resolvable:$true] %s70
      %73 = dma.hbm_to_vmem [thread:$0]  %s4, 32, %s71, [#allocation9]
    $region21: #{tpu_custom_call.1} parent=1 // pred_fallthru
      _
    // Predicated region
    $region22: #{tpu_custom_call.1} parent=1 // pred_check
      _
    $region23: #{tpu_custom_call.1} parent=1 // pred_check_branch
      %75 = sbr.rel (0) target = $region25
    $region24: #{tpu_custom_call.1} parent=1 // pred_region
      %s77 = ssub.s32 4096, 4096
      %78 = vsyncadd [#allocation12], %s77
      %s79 = sshll.u32 [#allocation11], 4
      %s80 = int_to_ptr.vmem [resolvable:$true] %s79
      %85 = dma.hbm_to_vmem [thread:$0]  %s5, 4096, %s80, [#allocation12], 128, 128, 8
    $region25: #{tpu_custom_call.1} parent=1 // pred_fallthru
      _
    // Predicated region
    $region26: #{tpu_custom_call.1} parent=1 // pred_check
      _
    $region27: #{tpu_custom_call.1} parent=1 // pred_check_branch
      %87 = sbr.rel (0) target = $region29
    $region28: #{tpu_custom_call.1} parent=1 // pred_region
      %s89 = ssub.s32 16, 16
      %90 = vsyncadd [#allocation12], %s89
      %s92 = sshll.u32 [#allocation13], 4
      %s93 = int_to_ptr.vmem [resolvable:$true] %s92
      %95 = dma.hbm_to_vmem [thread:$0]  %s6, 16, %s93, [#allocation12]
    $region29: #{tpu_custom_call.1} parent=1 // pred_fallthru
      _
    // Predicated region
    $region30: #{tpu_custom_call.1} parent=1 // pred_check
      _
    $region31: #{tpu_custom_call.1} parent=1 // pred_check_branch
      %97 = sbr.rel (0) target = $region33
    $region32: #{tpu_custom_call.1} parent=1 // pred_region
      %s99 = ssub.s32 2048, 2048
      %100 = vsyncadd [#allocation15], %s99
      %s101 = sshll.u32 [#allocation14], 4
      %s102 = int_to_ptr.vmem [resolvable:$true] %s101
      %107 = dma.hbm_to_vmem [thread:$0]  %s7, 2048, %s102, [#allocation15], 128, 128, 8
    $region33: #{tpu_custom_call.1} parent=1 // pred_fallthru
      _
    // Predicated region
    $region34: #{tpu_custom_call.1} parent=1 // pred_check
      _
    $region35: #{tpu_custom_call.1} parent=1 // pred_check_branch
      %109 = sbr.rel (0) target = $region37
    $region36: #{tpu_custom_call.1} parent=1 // pred_region
      %s111 = ssub.s32 16, 16
      %112 = vsyncadd [#allocation15], %s111
      %s114 = sshll.u32 [#allocation16], 4
      %s115 = int_to_ptr.vmem [resolvable:$true] %s114
      %117 = dma.hbm_to_vmem [thread:$0]  %s8, 16, %s115, [#allocation15]
    $region37: #{tpu_custom_call.1} parent=1 // pred_fallthru
      _
    // Predicated region
    $region38: #{tpu_custom_call.1} parent=1 // pred_check
      _
    $region39: #{tpu_custom_call.1} parent=1 // pred_check_branch
      %119 = sbr.rel (0) target = $region41
    $region40: #{tpu_custom_call.1} parent=1 // pred_region
      %120 = dma.done [#allocation3], 1408
    $region41: #{tpu_custom_call.1} parent=1 // pred_fallthru
      _
    // Predicated region
    $region42: #{tpu_custom_call.1} parent=1 // pred_check
      _
    $region43: #{tpu_custom_call.1} parent=1 // pred_check_branch
      %122 = sbr.rel (0) target = $region45
    $region44: #{tpu_custom_call.1} parent=1 // pred_region
      %123 = dma.done [#allocation6], 180224
    $region45: #{tpu_custom_call.1} parent=1 // pred_fallthru
      _
    // Predicated region
    $region46: #{tpu_custom_call.1} parent=1 // pred_check
      _
    $region47: #{tpu_custom_call.1} parent=1 // pred_check_branch
      %125 = sbr.rel (0) target = $region49
    $region48: #{tpu_custom_call.1} parent=1 // pred_region
      %126 = dma.done [#allocation6], 128
    $region49: #{tpu_custom_call.1} parent=1 // pred_fallthru
      _
    // Predicated region
    $region50: #{tpu_custom_call.1} parent=1 // pred_check
      _
    $region51: #{tpu_custom_call.1} parent=1 // pred_check_branch
      %128 = sbr.rel (0) target = $region53
    $region52: #{tpu_custom_call.1} parent=1 // pred_region
      %129 = dma.done [#allocation9], 32768
    $region53: #{tpu_custom_call.1} parent=1 // pred_fallthru
      _
    // Predicated region
    $region54: #{tpu_custom_call.1} parent=1 // pred_check
      _
    $region55: #{tpu_custom_call.1} parent=1 // pred_check_branch
      %131 = sbr.rel (0) target = $region57
    $region56: #{tpu_custom_call.1} parent=1 // pred_region
      %132 = dma.done [#allocation9], 32
    $region57: #{tpu_custom_call.1} parent=1 // pred_fallthru
      _
    // Predicated region
    $region58: #{tpu_custom_call.1} parent=1 // pred_check
      _
    $region59: #{tpu_custom_call.1} parent=1 // pred_check_branch
      %134 = sbr.rel (0) target = $region61
    $region60: #{tpu_custom_call.1} parent=1 // pred_region
      %135 = dma.done [#allocation12], 4096
    $region61: #{tpu_custom_call.1} parent=1 // pred_fallthru
      _
    // Predicated region
    $region62: #{tpu_custom_call.1} parent=1 // pred_check
      _
    $region63: #{tpu_custom_call.1} parent=1 // pred_check_branch
      %137 = sbr.rel (0) target = $region65
    $region64: #{tpu_custom_call.1} parent=1 // pred_region
      %138 = dma.done [#allocation12], 16
    $region65: #{tpu_custom_call.1} parent=1 // pred_fallthru
      _
    // Predicated region
    $region66: #{tpu_custom_call.1} parent=1 // pred_check
      _
    $region67: #{tpu_custom_call.1} parent=1 // pred_check_branch
      %140 = sbr.rel (0) target = $region69
    $region68: #{tpu_custom_call.1} parent=1 // pred_region
      %141 = dma.done [#allocation15], 2048
    $region69: #{tpu_custom_call.1} parent=1 // pred_fallthru
      _
    // Predicated region
    $region70: #{tpu_custom_call.1} parent=1 // pred_check
      _
    $region71: #{tpu_custom_call.1} parent=1 // pred_check_branch
      %143 = sbr.rel (0) target = $region73
    $region72: #{tpu_custom_call.1} parent=1 // pred_region
      %144 = dma.done [#allocation15], 16
    $region73: #{tpu_custom_call.1} parent=1 // pred_fallthru
      _
    %v145 = vld [vmem:[#allocation2] sm:$0xff]
    %v146 = vld [vmem:[#allocation2 + $0x8] sm:$0xff]
    %v147 = vld [vmem:[#allocation2 + $0x10] sm:$0xff]
    %v148 = vld [vmem:[#allocation2 + $0x18] sm:$0xff]
    %v149 = vld [vmem:[#allocation2 + $0x20] sm:$0xff]
    %v150 = vld [vmem:[#allocation2 + $0x28] sm:$0xff]
    %v151 = vld [vmem:[#allocation2 + $0x30] sm:$0xff]
    %v152 = vld [vmem:[#allocation2 + $0x38] sm:$0xff]
    %v153 = vld [vmem:[#allocation2 + $0x40] sm:$0xff]
    %v154 = vld [vmem:[#allocation2 + $0x48] sm:$0xff]
    %v155 = vld [vmem:[#allocation2 + $0x50] sm:$0xff]
    %v156 = vld [vmem:[#allocation5] sm:$0xff]
    %v157 = vld [vmem:[#allocation5 + $0x8] sm:$0xff]
    %v158 = vld [vmem:[#allocation5 + $0x10] sm:$0xff]
    %v159 = vld [vmem:[#allocation5 + $0x18] sm:$0xff]
    %v160 = vld [vmem:[#allocation5 + $0x20] sm:$0xff]
    %v161 = vld [vmem:[#allocation5 + $0x28] sm:$0xff]
    %v162 = vld [vmem:[#allocation5 + $0x30] sm:$0xff]
    %v163 = vld [vmem:[#allocation5 + $0x38] sm:$0xff]
    %v164 = vld [vmem:[#allocation5 + $0x40] sm:$0xff]
    %v165 = vld [vmem:[#allocation5 + $0x48] sm:$0xff]
    %v166 = vld [vmem:[#allocation5 + $0x50] sm:$0xff]
    %v167 = vld [vmem:[#allocation5 + $0x58] sm:$0xff]
    %v168 = vld [vmem:[#allocation5 + $0x60] sm:$0xff]
    %v169 = vld [vmem:[#allocation5 + $0x68] sm:$0xff]
    %v170 = vld [vmem:[#allocation5 + $0x70] sm:$0xff]
    %v171 = vld [vmem:[#allocation5 + $0x78] sm:$0xff]
    %v172 = vld [vmem:[#allocation5 + $0x80] sm:$0xff]
    %v173 = vld [vmem:[#allocation5 + $0x88] sm:$0xff]
    %v174 = vld [vmem:[#allocation5 + $0x90] sm:$0xff]
    %v175 = vld [vmem:[#allocation5 + $0x98] sm:$0xff]
    %v176 = vld [vmem:[#allocation5 + $0xa0] sm:$0xff]
    %v177 = vld [vmem:[#allocation5 + $0xa8] sm:$0xff]
    %v178 = vld [vmem:[#allocation5 + $0xb0] sm:$0xff]
    %v179 = vld [vmem:[#allocation5 + $0xb8] sm:$0xff]
    %v180 = vld [vmem:[#allocation5 + $0xc0] sm:$0xff]
    %v181 = vld [vmem:[#allocation5 + $0xc8] sm:$0xff]
    %v182 = vld [vmem:[#allocation5 + $0xd0] sm:$0xff]
    %v183 = vld [vmem:[#allocation5 + $0xd8] sm:$0xff]
    %v184 = vld [vmem:[#allocation5 + $0xe0] sm:$0xff]
    %v185 = vld [vmem:[#allocation5 + $0xe8] sm:$0xff]
    %v186 = vld [vmem:[#allocation5 + $0xf0] sm:$0xff]
    %v187 = vld [vmem:[#allocation5 + $0xf8] sm:$0xff]
    %v188 = vld [vmem:[#allocation5 + $0x100] sm:$0xff]
    %v189 = vld [vmem:[#allocation5 + $0x108] sm:$0xff]
    %v190 = vld [vmem:[#allocation5 + $0x110] sm:$0xff]
    %v191 = vld [vmem:[#allocation5 + $0x118] sm:$0xff]
    %v192 = vld [vmem:[#allocation5 + $0x120] sm:$0xff]
    %v193 = vld [vmem:[#allocation5 + $0x128] sm:$0xff]
    %v194 = vld [vmem:[#allocation5 + $0x130] sm:$0xff]
    %v195 = vld [vmem:[#allocation5 + $0x138] sm:$0xff]
    %v196 = vld [vmem:[#allocation5 + $0x140] sm:$0xff]
    %v197 = vld [vmem:[#allocation5 + $0x148] sm:$0xff]
    %v198 = vld [vmem:[#allocation5 + $0x150] sm:$0xff]
    %v199 = vld [vmem:[#allocation5 + $0x158] sm:$0xff]
    %v200 = vld [vmem:[#allocation5 + $0x160] sm:$0xff]
    %v201 = vld [vmem:[#allocation5 + $0x168] sm:$0xff]
    %v202 = vld [vmem:[#allocation5 + $0x170] sm:$0xff]
    %v203 = vld [vmem:[#allocation5 + $0x178] sm:$0xff]
    %v204 = vld [vmem:[#allocation5 + $0x180] sm:$0xff]
    %v205 = vld [vmem:[#allocation5 + $0x188] sm:$0xff]
    %v206 = vld [vmem:[#allocation5 + $0x190] sm:$0xff]
    %v207 = vld [vmem:[#allocation5 + $0x198] sm:$0xff]
    %v208 = vld [vmem:[#allocation5 + $0x1a0] sm:$0xff]
    %v209 = vld [vmem:[#allocation5 + $0x1a8] sm:$0xff]
    %v210 = vld [vmem:[#allocation5 + $0x1b0] sm:$0xff]
    %v211 = vld [vmem:[#allocation5 + $0x1b8] sm:$0xff]
    %v212 = vld [vmem:[#allocation5 + $0x1c0] sm:$0xff]
    %v213 = vld [vmem:[#allocation5 + $0x1c8] sm:$0xff]
    %v214 = vld [vmem:[#allocation5 + $0x1d0] sm:$0xff]
    %v215 = vld [vmem:[#allocation5 + $0x1d8] sm:$0xff]
    %v216 = vld [vmem:[#allocation5 + $0x1e0] sm:$0xff]
    %v217 = vld [vmem:[#allocation5 + $0x1e8] sm:$0xff]
    %v218 = vld [vmem:[#allocation5 + $0x1f0] sm:$0xff]
    %v219 = vld [vmem:[#allocation5 + $0x1f8] sm:$0xff]
    %v220 = vld [vmem:[#allocation5 + $0x200] sm:$0xff]
    %v221 = vld [vmem:[#allocation5 + $0x208] sm:$0xff]
    %v222 = vld [vmem:[#allocation5 + $0x210] sm:$0xff]
    %v223 = vld [vmem:[#allocation5 + $0x218] sm:$0xff]
    %v224 = vld [vmem:[#allocation5 + $0x220] sm:$0xff]
    %v225 = vld [vmem:[#allocation5 + $0x228] sm:$0xff]
    %v226 = vld [vmem:[#allocation5 + $0x230] sm:$0xff]
    %v227 = vld [vmem:[#allocation5 + $0x238] sm:$0xff]
    %v228 = vld [vmem:[#allocation5 + $0x240] sm:$0xff]
    %v229 = vld [vmem:[#allocation5 + $0x248] sm:$0xff]
    %v230 = vld [vmem:[#allocation5 + $0x250] sm:$0xff]
    %v231 = vld [vmem:[#allocation5 + $0x258] sm:$0xff]
    %v232 = vld [vmem:[#allocation5 + $0x260] sm:$0xff]
    %v233 = vld [vmem:[#allocation5 + $0x268] sm:$0xff]
    %v234 = vld [vmem:[#allocation5 + $0x270] sm:$0xff]
    %v235 = vld [vmem:[#allocation5 + $0x278] sm:$0xff]
    %v236 = vld [vmem:[#allocation5 + $0x280] sm:$0xff]
    %v237 = vld [vmem:[#allocation5 + $0x288] sm:$0xff]
    %v238 = vld [vmem:[#allocation5 + $0x290] sm:$0xff]
    %v239 = vld [vmem:[#allocation5 + $0x298] sm:$0xff]
    %v240 = vld [vmem:[#allocation5 + $0x2a0] sm:$0xff]
    %v241 = vld [vmem:[#allocation5 + $0x2a8] sm:$0xff]
    %v242 = vld [vmem:[#allocation5 + $0x2b0] sm:$0xff]
    %v243 = vld [vmem:[#allocation5 + $0x2b8] sm:$0xff]
    %v244 = vld [vmem:[#allocation5 + $0x2c0] sm:$0xff]
    %v245 = vld [vmem:[#allocation5 + $0x2c8] sm:$0xff]
    %v246 = vld [vmem:[#allocation5 + $0x2d0] sm:$0xff]
    %v247 = vld [vmem:[#allocation5 + $0x2d8] sm:$0xff]
    %v248 = vld [vmem:[#allocation5 + $0x2e0] sm:$0xff]
    %v249 = vld [vmem:[#allocation5 + $0x2e8] sm:$0xff]
    %v250 = vld [vmem:[#allocation5 + $0x2f0] sm:$0xff]
    %v251 = vld [vmem:[#allocation5 + $0x2f8] sm:$0xff]
    %v252 = vld [vmem:[#allocation5 + $0x300] sm:$0xff]
    %v253 = vld [vmem:[#allocation5 + $0x308] sm:$0xff]
    %v254 = vld [vmem:[#allocation5 + $0x310] sm:$0xff]
    %v255 = vld [vmem:[#allocation5 + $0x318] sm:$0xff]
    %v256 = vld [vmem:[#allocation5 + $0x320] sm:$0xff]
    %v257 = vld [vmem:[#allocation5 + $0x328] sm:$0xff]
    %v258 = vld [vmem:[#allocation5 + $0x330] sm:$0xff]
    %v259 = vld [vmem:[#allocation5 + $0x338] sm:$0xff]
    %v260 = vld [vmem:[#allocation5 + $0x340] sm:$0xff]
    %v261 = vld [vmem:[#allocation5 + $0x348] sm:$0xff]
    %v262 = vld [vmem:[#allocation5 + $0x350] sm:$0xff]
    %v263 = vld [vmem:[#allocation5 + $0x358] sm:$0xff]
    %v264 = vld [vmem:[#allocation5 + $0x360] sm:$0xff]
    %v265 = vld [vmem:[#allocation5 + $0x368] sm:$0xff]
    %v266 = vld [vmem:[#allocation5 + $0x370] sm:$0xff]
    %v267 = vld [vmem:[#allocation5 + $0x378] sm:$0xff]
    %v268 = vld [vmem:[#allocation5 + $0x380] sm:$0xff]
    %v269 = vld [vmem:[#allocation5 + $0x388] sm:$0xff]
    %v270 = vld [vmem:[#allocation5 + $0x390] sm:$0xff]
    %v271 = vld [vmem:[#allocation5 + $0x398] sm:$0xff]
    %v272 = vld [vmem:[#allocation5 + $0x3a0] sm:$0xff]
    %v273 = vld [vmem:[#allocation5 + $0x3a8] sm:$0xff]
    %v274 = vld [vmem:[#allocation5 + $0x3b0] sm:$0xff]
    %v275 = vld [vmem:[#allocation5 + $0x3b8] sm:$0xff]
    %v276 = vld [vmem:[#allocation5 + $0x3c0] sm:$0xff]
    %v277 = vld [vmem:[#allocation5 + $0x3c8] sm:$0xff]
    %v278 = vld [vmem:[#allocation5 + $0x3d0] sm:$0xff]
    %v279 = vld [vmem:[#allocation5 + $0x3d8] sm:$0xff]
    %v280 = vld [vmem:[#allocation5 + $0x3e0] sm:$0xff]
    %v281 = vld [vmem:[#allocation5 + $0x3e8] sm:$0xff]
    %v282 = vld [vmem:[#allocation5 + $0x3f0] sm:$0xff]
    %v283 = vld [vmem:[#allocation5 + $0x3f8] sm:$0xff]
    %v284 = vld [vmem:[#allocation5 + $0x400] sm:$0xff]
    %v285 = vld [vmem:[#allocation5 + $0x408] sm:$0xff]
    %v286 = vld [vmem:[#allocation5 + $0x410] sm:$0xff]
    %v287 = vld [vmem:[#allocation5 + $0x418] sm:$0xff]
    %v288 = vld [vmem:[#allocation5 + $0x420] sm:$0xff]
    %v289 = vld [vmem:[#allocation5 + $0x428] sm:$0xff]
    %v290 = vld [vmem:[#allocation5 + $0x430] sm:$0xff]
    %v291 = vld [vmem:[#allocation5 + $0x438] sm:$0xff]
    %v292 = vld [vmem:[#allocation5 + $0x440] sm:$0xff]
    %v293 = vld [vmem:[#allocation5 + $0x448] sm:$0xff]
    %v294 = vld [vmem:[#allocation5 + $0x450] sm:$0xff]
    %v295 = vld [vmem:[#allocation5 + $0x458] sm:$0xff]
    %v296 = vld [vmem:[#allocation5 + $0x460] sm:$0xff]
    %v297 = vld [vmem:[#allocation5 + $0x468] sm:$0xff]
    %v298 = vld [vmem:[#allocation5 + $0x470] sm:$0xff]
    %v299 = vld [vmem:[#allocation5 + $0x478] sm:$0xff]
    %v300 = vld [vmem:[#allocation5 + $0x480] sm:$0xff]
    %v301 = vld [vmem:[#allocation5 + $0x488] sm:$0xff]
    %v302 = vld [vmem:[#allocation5 + $0x490] sm:$0xff]
    %v303 = vld [vmem:[#allocation5 + $0x498] sm:$0xff]
    %v304 = vld [vmem:[#allocation5 + $0x4a0] sm:$0xff]
    %v305 = vld [vmem:[#allocation5 + $0x4a8] sm:$0xff]
    %v306 = vld [vmem:[#allocation5 + $0x4b0] sm:$0xff]
    %v307 = vld [vmem:[#allocation5 + $0x4b8] sm:$0xff]
    %v308 = vld [vmem:[#allocation5 + $0x4c0] sm:$0xff]
    %v309 = vld [vmem:[#allocation5 + $0x4c8] sm:$0xff]
    %v310 = vld [vmem:[#allocation5 + $0x4d0] sm:$0xff]
    %v311 = vld [vmem:[#allocation5 + $0x4d8] sm:$0xff]
    %v312 = vld [vmem:[#allocation5 + $0x4e0] sm:$0xff]
    %v313 = vld [vmem:[#allocation5 + $0x4e8] sm:$0xff]
    %v314 = vld [vmem:[#allocation5 + $0x4f0] sm:$0xff]
    %v315 = vld [vmem:[#allocation5 + $0x4f8] sm:$0xff]
    %v316 = vld [vmem:[#allocation5 + $0x500] sm:$0xff]
    %v317 = vld [vmem:[#allocation5 + $0x508] sm:$0xff]
    %v318 = vld [vmem:[#allocation5 + $0x510] sm:$0xff]
    %v319 = vld [vmem:[#allocation5 + $0x518] sm:$0xff]
    %v320 = vld [vmem:[#allocation5 + $0x520] sm:$0xff]
    %v321 = vld [vmem:[#allocation5 + $0x528] sm:$0xff]
    %v322 = vld [vmem:[#allocation5 + $0x530] sm:$0xff]
    %v323 = vld [vmem:[#allocation5 + $0x538] sm:$0xff]
    %v324 = vld [vmem:[#allocation5 + $0x540] sm:$0xff]
    %v325 = vld [vmem:[#allocation5 + $0x548] sm:$0xff]
    %v326 = vld [vmem:[#allocation5 + $0x550] sm:$0xff]
    %v327 = vld [vmem:[#allocation5 + $0x558] sm:$0xff]
    %v328 = vld [vmem:[#allocation5 + $0x560] sm:$0xff]
    %v329 = vld [vmem:[#allocation5 + $0x568] sm:$0xff]
    %v330 = vld [vmem:[#allocation5 + $0x570] sm:$0xff]
    %v331 = vld [vmem:[#allocation5 + $0x578] sm:$0xff]
    %v332 = vld [vmem:[#allocation5 + $0x580] sm:$0xff]
    %v333 = vld [vmem:[#allocation5 + $0x588] sm:$0xff]
    %v334 = vld [vmem:[#allocation5 + $0x590] sm:$0xff]
    %v335 = vld [vmem:[#allocation5 + $0x598] sm:$0xff]
    %v336 = vld [vmem:[#allocation5 + $0x5a0] sm:$0xff]
    %v337 = vld [vmem:[#allocation5 + $0x5a8] sm:$0xff]
    %v338 = vld [vmem:[#allocation5 + $0x5b0] sm:$0xff]
    %v339 = vld [vmem:[#allocation5 + $0x5b8] sm:$0xff]
    %v340 = vld [vmem:[#allocation5 + $0x5c0] sm:$0xff]
    %v341 = vld [vmem:[#allocation5 + $0x5c8] sm:$0xff]
    %v342 = vld [vmem:[#allocation5 + $0x5d0] sm:$0xff]
    %v343 = vld [vmem:[#allocation5 + $0x5d8] sm:$0xff]
    %v344 = vld [vmem:[#allocation5 + $0x5e0] sm:$0xff]
    %v345 = vld [vmem:[#allocation5 + $0x5e8] sm:$0xff]
    %v346 = vld [vmem:[#allocation5 + $0x5f0] sm:$0xff]
    %v347 = vld [vmem:[#allocation5 + $0x5f8] sm:$0xff]
    %v348 = vld [vmem:[#allocation5 + $0x600] sm:$0xff]
    %v349 = vld [vmem:[#allocation5 + $0x608] sm:$0xff]
    %v350 = vld [vmem:[#allocation5 + $0x610] sm:$0xff]
    %v351 = vld [vmem:[#allocation5 + $0x618] sm:$0xff]
    %v352 = vld [vmem:[#allocation5 + $0x620] sm:$0xff]
    %v353 = vld [vmem:[#allocation5 + $0x628] sm:$0xff]
    %v354 = vld [vmem:[#allocation5 + $0x630] sm:$0xff]
    %v355 = vld [vmem:[#allocation5 + $0x638] sm:$0xff]
    %v356 = vld [vmem:[#allocation5 + $0x640] sm:$0xff]
    %v357 = vld [vmem:[#allocation5 + $0x648] sm:$0xff]
    %v358 = vld [vmem:[#allocation5 + $0x650] sm:$0xff]
    %v359 = vld [vmem:[#allocation5 + $0x658] sm:$0xff]
    %v360 = vld [vmem:[#allocation5 + $0x660] sm:$0xff]
    %v361 = vld [vmem:[#allocation5 + $0x668] sm:$0xff]
    %v362 = vld [vmem:[#allocation5 + $0x670] sm:$0xff]
    %v363 = vld [vmem:[#allocation5 + $0x678] sm:$0xff]
    %v364 = vld [vmem:[#allocation5 + $0x680] sm:$0xff]
    %v365 = vld [vmem:[#allocation5 + $0x688] sm:$0xff]
    %v366 = vld [vmem:[#allocation5 + $0x690] sm:$0xff]
    %v367 = vld [vmem:[#allocation5 + $0x698] sm:$0xff]
    %v368 = vld [vmem:[#allocation5 + $0x6a0] sm:$0xff]
    %v369 = vld [vmem:[#allocation5 + $0x6a8] sm:$0xff]
    %v370 = vld [vmem:[#allocation5 + $0x6b0] sm:$0xff]
    %v371 = vld [vmem:[#allocation5 + $0x6b8] sm:$0xff]
    %v372 = vld [vmem:[#allocation5 + $0x6c0] sm:$0xff]
    %v373 = vld [vmem:[#allocation5 + $0x6c8] sm:$0xff]
    %v374 = vld [vmem:[#allocation5 + $0x6d0] sm:$0xff]
    %v375 = vld [vmem:[#allocation5 + $0x6d8] sm:$0xff]
    %v376 = vld [vmem:[#allocation5 + $0x6e0] sm:$0xff]
    %v377 = vld [vmem:[#allocation5 + $0x6e8] sm:$0xff]
    %v378 = vld [vmem:[#allocation5 + $0x6f0] sm:$0xff]
    %v379 = vld [vmem:[#allocation5 + $0x6f8] sm:$0xff]
    %v380 = vld [vmem:[#allocation5 + $0x700] sm:$0xff]
    %v381 = vld [vmem:[#allocation5 + $0x708] sm:$0xff]
    %v382 = vld [vmem:[#allocation5 + $0x710] sm:$0xff]
    %v383 = vld [vmem:[#allocation5 + $0x718] sm:$0xff]
    %v384 = vld [vmem:[#allocation5 + $0x720] sm:$0xff]
    %v385 = vld [vmem:[#allocation5 + $0x728] sm:$0xff]
    %v386 = vld [vmem:[#allocation5 + $0x730] sm:$0xff]
    %v387 = vld [vmem:[#allocation5 + $0x738] sm:$0xff]
    %v388 = vld [vmem:[#allocation5 + $0x740] sm:$0xff]
    %v389 = vld [vmem:[#allocation5 + $0x748] sm:$0xff]
    %v390 = vld [vmem:[#allocation5 + $0x750] sm:$0xff]
    %v391 = vld [vmem:[#allocation5 + $0x758] sm:$0xff]
    %v392 = vld [vmem:[#allocation5 + $0x760] sm:$0xff]
    %v393 = vld [vmem:[#allocation5 + $0x768] sm:$0xff]
    %v394 = vld [vmem:[#allocation5 + $0x770] sm:$0xff]
    %v395 = vld [vmem:[#allocation5 + $0x778] sm:$0xff]
    %v396 = vld [vmem:[#allocation5 + $0x780] sm:$0xff]
    %v397 = vld [vmem:[#allocation5 + $0x788] sm:$0xff]
    %v398 = vld [vmem:[#allocation5 + $0x790] sm:$0xff]
    %v399 = vld [vmem:[#allocation5 + $0x798] sm:$0xff]
    %v400 = vld [vmem:[#allocation5 + $0x7a0] sm:$0xff]
    %v401 = vld [vmem:[#allocation5 + $0x7a8] sm:$0xff]
    %v402 = vld [vmem:[#allocation5 + $0x7b0] sm:$0xff]
    %v403 = vld [vmem:[#allocation5 + $0x7b8] sm:$0xff]
    %v404 = vld [vmem:[#allocation5 + $0x7c0] sm:$0xff]
    %v405 = vld [vmem:[#allocation5 + $0x7c8] sm:$0xff]
    %v406 = vld [vmem:[#allocation5 + $0x7d0] sm:$0xff]
    %v407 = vld [vmem:[#allocation5 + $0x7d8] sm:$0xff]
    %v408 = vld [vmem:[#allocation5 + $0x7e0] sm:$0xff]
    %v409 = vld [vmem:[#allocation5 + $0x7e8] sm:$0xff]
    %v410 = vld [vmem:[#allocation5 + $0x7f0] sm:$0xff]
    %v411 = vld [vmem:[#allocation5 + $0x7f8] sm:$0xff]
    %v412 = vld [vmem:[#allocation5 + $0x800] sm:$0xff]
    %v413 = vld [vmem:[#allocation5 + $0x808] sm:$0xff]
    %v414 = vld [vmem:[#allocation5 + $0x810] sm:$0xff]
    %v415 = vld [vmem:[#allocation5 + $0x818] sm:$0xff]
    %v416 = vld [vmem:[#allocation5 + $0x820] sm:$0xff]
    %v417 = vld [vmem:[#allocation5 + $0x828] sm:$0xff]
    %v418 = vld [vmem:[#allocation5 + $0x830] sm:$0xff]
    %v419 = vld [vmem:[#allocation5 + $0x838] sm:$0xff]
    %v420 = vld [vmem:[#allocation5 + $0x840] sm:$0xff]
    %v421 = vld [vmem:[#allocation5 + $0x848] sm:$0xff]
    %v422 = vld [vmem:[#allocation5 + $0x850] sm:$0xff]
    %v423 = vld [vmem:[#allocation5 + $0x858] sm:$0xff]
    %v424 = vld [vmem:[#allocation5 + $0x860] sm:$0xff]
    %v425 = vld [vmem:[#allocation5 + $0x868] sm:$0xff]
    %v426 = vld [vmem:[#allocation5 + $0x870] sm:$0xff]
    %v427 = vld [vmem:[#allocation5 + $0x878] sm:$0xff]
    %v428 = vld [vmem:[#allocation5 + $0x880] sm:$0xff]
    %v429 = vld [vmem:[#allocation5 + $0x888] sm:$0xff]
    %v430 = vld [vmem:[#allocation5 + $0x890] sm:$0xff]
    %v431 = vld [vmem:[#allocation5 + $0x898] sm:$0xff]
    %v432 = vld [vmem:[#allocation5 + $0x8a0] sm:$0xff]
    %v433 = vld [vmem:[#allocation5 + $0x8a8] sm:$0xff]
    %v434 = vld [vmem:[#allocation5 + $0x8b0] sm:$0xff]
    %v435 = vld [vmem:[#allocation5 + $0x8b8] sm:$0xff]
    %v436 = vld [vmem:[#allocation5 + $0x8c0] sm:$0xff]
    %v437 = vld [vmem:[#allocation5 + $0x8c8] sm:$0xff]
    %v438 = vld [vmem:[#allocation5 + $0x8d0] sm:$0xff]
    %v439 = vld [vmem:[#allocation5 + $0x8d8] sm:$0xff]
    %v440 = vld [vmem:[#allocation5 + $0x8e0] sm:$0xff]
    %v441 = vld [vmem:[#allocation5 + $0x8e8] sm:$0xff]
    %v442 = vld [vmem:[#allocation5 + $0x8f0] sm:$0xff]
    %v443 = vld [vmem:[#allocation5 + $0x8f8] sm:$0xff]
    %v444 = vld [vmem:[#allocation5 + $0x900] sm:$0xff]
    %v445 = vld [vmem:[#allocation5 + $0x908] sm:$0xff]
    %v446 = vld [vmem:[#allocation5 + $0x910] sm:$0xff]
    %v447 = vld [vmem:[#allocation5 + $0x918] sm:$0xff]
    %v448 = vld [vmem:[#allocation5 + $0x920] sm:$0xff]
    %v449 = vld [vmem:[#allocation5 + $0x928] sm:$0xff]
    %v450 = vld [vmem:[#allocation5 + $0x930] sm:$0xff]
    %v451 = vld [vmem:[#allocation5 + $0x938] sm:$0xff]
    %v452 = vld [vmem:[#allocation5 + $0x940] sm:$0xff]
    %v453 = vld [vmem:[#allocation5 + $0x948] sm:$0xff]
    %v454 = vld [vmem:[#allocation5 + $0x950] sm:$0xff]
    %v455 = vld [vmem:[#allocation5 + $0x958] sm:$0xff]
    %v456 = vld [vmem:[#allocation5 + $0x960] sm:$0xff]
    %v457 = vld [vmem:[#allocation5 + $0x968] sm:$0xff]
    %v458 = vld [vmem:[#allocation5 + $0x970] sm:$0xff]
    %v459 = vld [vmem:[#allocation5 + $0x978] sm:$0xff]
    %v460 = vld [vmem:[#allocation5 + $0x980] sm:$0xff]
    %v461 = vld [vmem:[#allocation5 + $0x988] sm:$0xff]
    %v462 = vld [vmem:[#allocation5 + $0x990] sm:$0xff]
    %v463 = vld [vmem:[#allocation5 + $0x998] sm:$0xff]
    %v464 = vld [vmem:[#allocation5 + $0x9a0] sm:$0xff]
    %v465 = vld [vmem:[#allocation5 + $0x9a8] sm:$0xff]
    %v466 = vld [vmem:[#allocation5 + $0x9b0] sm:$0xff]
    %v467 = vld [vmem:[#allocation5 + $0x9b8] sm:$0xff]
    %v468 = vld [vmem:[#allocation5 + $0x9c0] sm:$0xff]
    %v469 = vld [vmem:[#allocation5 + $0x9c8] sm:$0xff]
    %v470 = vld [vmem:[#allocation5 + $0x9d0] sm:$0xff]
    %v471 = vld [vmem:[#allocation5 + $0x9d8] sm:$0xff]
    %v472 = vld [vmem:[#allocation5 + $0x9e0] sm:$0xff]
    %v473 = vld [vmem:[#allocation5 + $0x9e8] sm:$0xff]
    %v474 = vld [vmem:[#allocation5 + $0x9f0] sm:$0xff]
    %v475 = vld [vmem:[#allocation5 + $0x9f8] sm:$0xff]
    %v476 = vld [vmem:[#allocation5 + $0xa00] sm:$0xff]
    %v477 = vld [vmem:[#allocation5 + $0xa08] sm:$0xff]
    %v478 = vld [vmem:[#allocation5 + $0xa10] sm:$0xff]
    %v479 = vld [vmem:[#allocation5 + $0xa18] sm:$0xff]
    %v480 = vld [vmem:[#allocation5 + $0xa20] sm:$0xff]
    %v481 = vld [vmem:[#allocation5 + $0xa28] sm:$0xff]
    %v482 = vld [vmem:[#allocation5 + $0xa30] sm:$0xff]
    %v483 = vld [vmem:[#allocation5 + $0xa38] sm:$0xff]
    %v484 = vld [vmem:[#allocation5 + $0xa40] sm:$0xff]
    %v485 = vld [vmem:[#allocation5 + $0xa48] sm:$0xff]
    %v486 = vld [vmem:[#allocation5 + $0xa50] sm:$0xff]
    %v487 = vld [vmem:[#allocation5 + $0xa58] sm:$0xff]
    %v488 = vld [vmem:[#allocation5 + $0xa60] sm:$0xff]
    %v489 = vld [vmem:[#allocation5 + $0xa68] sm:$0xff]
    %v490 = vld [vmem:[#allocation5 + $0xa70] sm:$0xff]
    %v491 = vld [vmem:[#allocation5 + $0xa78] sm:$0xff]
    %v492 = vld [vmem:[#allocation5 + $0xa80] sm:$0xff]
    %v493 = vld [vmem:[#allocation5 + $0xa88] sm:$0xff]
    %v494 = vld [vmem:[#allocation5 + $0xa90] sm:$0xff]
    %v495 = vld [vmem:[#allocation5 + $0xa98] sm:$0xff]
    %v496 = vld [vmem:[#allocation5 + $0xaa0] sm:$0xff]
    %v497 = vld [vmem:[#allocation5 + $0xaa8] sm:$0xff]
    %v498 = vld [vmem:[#allocation5 + $0xab0] sm:$0xff]
    %v499 = vld [vmem:[#allocation5 + $0xab8] sm:$0xff]
    %v500 = vld [vmem:[#allocation5 + $0xac0] sm:$0xff]
    %v501 = vld [vmem:[#allocation5 + $0xac8] sm:$0xff]
    %v502 = vld [vmem:[#allocation5 + $0xad0] sm:$0xff]
    %v503 = vld [vmem:[#allocation5 + $0xad8] sm:$0xff]
    %v504 = vld [vmem:[#allocation5 + $0xae0] sm:$0xff]
    %v505 = vld [vmem:[#allocation5 + $0xae8] sm:$0xff]
    %v506 = vld [vmem:[#allocation5 + $0xaf0] sm:$0xff]
    %v507 = vld [vmem:[#allocation5 + $0xaf8] sm:$0xff]
    %v508 = vld [vmem:[#allocation5 + $0xb00] sm:$0xff]
    %v509 = vld [vmem:[#allocation5 + $0xb08] sm:$0xff]
    %v510 = vld [vmem:[#allocation5 + $0xb10] sm:$0xff]
    %v511 = vld [vmem:[#allocation5 + $0xb18] sm:$0xff]
    %v512 = vld [vmem:[#allocation5 + $0xb20] sm:$0xff]
    %v513 = vld [vmem:[#allocation5 + $0xb28] sm:$0xff]
    %v514 = vld [vmem:[#allocation5 + $0xb30] sm:$0xff]
    %v515 = vld [vmem:[#allocation5 + $0xb38] sm:$0xff]
    %v516 = vld [vmem:[#allocation5 + $0xb40] sm:$0xff]
    %v517 = vld [vmem:[#allocation5 + $0xb48] sm:$0xff]
    %v518 = vld [vmem:[#allocation5 + $0xb50] sm:$0xff]
    %v519 = vld [vmem:[#allocation5 + $0xb58] sm:$0xff]
    %v520 = vld [vmem:[#allocation5 + $0xb60] sm:$0xff]
    %v521 = vld [vmem:[#allocation5 + $0xb68] sm:$0xff]
    %v522 = vld [vmem:[#allocation5 + $0xb70] sm:$0xff]
    %v523 = vld [vmem:[#allocation5 + $0xb78] sm:$0xff]
    %v524 = vld [vmem:[#allocation5 + $0xb80] sm:$0xff]
    %v525 = vld [vmem:[#allocation5 + $0xb88] sm:$0xff]
    %v526 = vld [vmem:[#allocation5 + $0xb90] sm:$0xff]
    %v527 = vld [vmem:[#allocation5 + $0xb98] sm:$0xff]
    %v528 = vld [vmem:[#allocation5 + $0xba0] sm:$0xff]
    %v529 = vld [vmem:[#allocation5 + $0xba8] sm:$0xff]
    %v530 = vld [vmem:[#allocation5 + $0xbb0] sm:$0xff]
    %v531 = vld [vmem:[#allocation5 + $0xbb8] sm:$0xff]
    %v532 = vld [vmem:[#allocation5 + $0xbc0] sm:$0xff]
    %v533 = vld [vmem:[#allocation5 + $0xbc8] sm:$0xff]
    %v534 = vld [vmem:[#allocation5 + $0xbd0] sm:$0xff]
    %v535 = vld [vmem:[#allocation5 + $0xbd8] sm:$0xff]
    %v536 = vld [vmem:[#allocation5 + $0xbe0] sm:$0xff]
    %v537 = vld [vmem:[#allocation5 + $0xbe8] sm:$0xff]
    %v538 = vld [vmem:[#allocation5 + $0xbf0] sm:$0xff]
    %v539 = vld [vmem:[#allocation5 + $0xbf8] sm:$0xff]
    %v540 = vld [vmem:[#allocation5 + $0xc00] sm:$0xff]
    %v541 = vld [vmem:[#allocation5 + $0xc08] sm:$0xff]
    %v542 = vld [vmem:[#allocation5 + $0xc10] sm:$0xff]
    %v543 = vld [vmem:[#allocation5 + $0xc18] sm:$0xff]
    %v544 = vld [vmem:[#allocation5 + $0xc20] sm:$0xff]
    %v545 = vld [vmem:[#allocation5 + $0xc28] sm:$0xff]
    %v546 = vld [vmem:[#allocation5 + $0xc30] sm:$0xff]
    %v547 = vld [vmem:[#allocation5 + $0xc38] sm:$0xff]
    %v548 = vld [vmem:[#allocation5 + $0xc40] sm:$0xff]
    %v549 = vld [vmem:[#allocation5 + $0xc48] sm:$0xff]
    %v550 = vld [vmem:[#allocation5 + $0xc50] sm:$0xff]
    %v551 = vld [vmem:[#allocation5 + $0xc58] sm:$0xff]
    %v552 = vld [vmem:[#allocation5 + $0xc60] sm:$0xff]
    %v553 = vld [vmem:[#allocation5 + $0xc68] sm:$0xff]
    %v554 = vld [vmem:[#allocation5 + $0xc70] sm:$0xff]
    %v555 = vld [vmem:[#allocation5 + $0xc78] sm:$0xff]
    %v556 = vld [vmem:[#allocation5 + $0xc80] sm:$0xff]
    %v557 = vld [vmem:[#allocation5 + $0xc88] sm:$0xff]
    %v558 = vld [vmem:[#allocation5 + $0xc90] sm:$0xff]
    %v559 = vld [vmem:[#allocation5 + $0xc98] sm:$0xff]
    %v560 = vld [vmem:[#allocation5 + $0xca0] sm:$0xff]
    %v561 = vld [vmem:[#allocation5 + $0xca8] sm:$0xff]
    %v562 = vld [vmem:[#allocation5 + $0xcb0] sm:$0xff]
    %v563 = vld [vmem:[#allocation5 + $0xcb8] sm:$0xff]
    %v564 = vld [vmem:[#allocation5 + $0xcc0] sm:$0xff]
    %v565 = vld [vmem:[#allocation5 + $0xcc8] sm:$0xff]
    %v566 = vld [vmem:[#allocation5 + $0xcd0] sm:$0xff]
    %v567 = vld [vmem:[#allocation5 + $0xcd8] sm:$0xff]
    %v568 = vld [vmem:[#allocation5 + $0xce0] sm:$0xff]
    %v569 = vld [vmem:[#allocation5 + $0xce8] sm:$0xff]
    %v570 = vld [vmem:[#allocation5 + $0xcf0] sm:$0xff]
    %v571 = vld [vmem:[#allocation5 + $0xcf8] sm:$0xff]
    %v572 = vld [vmem:[#allocation5 + $0xd00] sm:$0xff]
    %v573 = vld [vmem:[#allocation5 + $0xd08] sm:$0xff]
    %v574 = vld [vmem:[#allocation5 + $0xd10] sm:$0xff]
    %v575 = vld [vmem:[#allocation5 + $0xd18] sm:$0xff]
    %v576 = vld [vmem:[#allocation5 + $0xd20] sm:$0xff]
    %v577 = vld [vmem:[#allocation5 + $0xd28] sm:$0xff]
    %v578 = vld [vmem:[#allocation5 + $0xd30] sm:$0xff]
    %v579 = vld [vmem:[#allocation5 + $0xd38] sm:$0xff]
    %v580 = vld [vmem:[#allocation5 + $0xd40] sm:$0xff]
    %v581 = vld [vmem:[#allocation5 + $0xd48] sm:$0xff]
    %v582 = vld [vmem:[#allocation5 + $0xd50] sm:$0xff]
    %v583 = vld [vmem:[#allocation5 + $0xd58] sm:$0xff]
    %v584 = vld [vmem:[#allocation5 + $0xd60] sm:$0xff]
    %v585 = vld [vmem:[#allocation5 + $0xd68] sm:$0xff]
    %v586 = vld [vmem:[#allocation5 + $0xd70] sm:$0xff]
    %v587 = vld [vmem:[#allocation5 + $0xd78] sm:$0xff]
    %v588 = vld [vmem:[#allocation5 + $0xd80] sm:$0xff]
    %v589 = vld [vmem:[#allocation5 + $0xd88] sm:$0xff]
    %v590 = vld [vmem:[#allocation5 + $0xd90] sm:$0xff]
    %v591 = vld [vmem:[#allocation5 + $0xd98] sm:$0xff]
    %v592 = vld [vmem:[#allocation5 + $0xda0] sm:$0xff]
    %v593 = vld [vmem:[#allocation5 + $0xda8] sm:$0xff]
    %v594 = vld [vmem:[#allocation5 + $0xdb0] sm:$0xff]
    %v595 = vld [vmem:[#allocation5 + $0xdb8] sm:$0xff]
    %v596 = vld [vmem:[#allocation5 + $0xdc0] sm:$0xff]
    %v597 = vld [vmem:[#allocation5 + $0xdc8] sm:$0xff]
    %v598 = vld [vmem:[#allocation5 + $0xdd0] sm:$0xff]
    %v599 = vld [vmem:[#allocation5 + $0xdd8] sm:$0xff]
    %v600 = vld [vmem:[#allocation5 + $0xde0] sm:$0xff]
    %v601 = vld [vmem:[#allocation5 + $0xde8] sm:$0xff]
    %v602 = vld [vmem:[#allocation5 + $0xdf0] sm:$0xff]
    %v603 = vld [vmem:[#allocation5 + $0xdf8] sm:$0xff]
    %v604 = vld [vmem:[#allocation5 + $0xe00] sm:$0xff]
    %v605 = vld [vmem:[#allocation5 + $0xe08] sm:$0xff]
    %v606 = vld [vmem:[#allocation5 + $0xe10] sm:$0xff]
    %v607 = vld [vmem:[#allocation5 + $0xe18] sm:$0xff]
    %v608 = vld [vmem:[#allocation5 + $0xe20] sm:$0xff]
    %v609 = vld [vmem:[#allocation5 + $0xe28] sm:$0xff]
    %v610 = vld [vmem:[#allocation5 + $0xe30] sm:$0xff]
    %v611 = vld [vmem:[#allocation5 + $0xe38] sm:$0xff]
    %v612 = vld [vmem:[#allocation5 + $0xe40] sm:$0xff]
    %v613 = vld [vmem:[#allocation5 + $0xe48] sm:$0xff]
    %v614 = vld [vmem:[#allocation5 + $0xe50] sm:$0xff]
    %v615 = vld [vmem:[#allocation5 + $0xe58] sm:$0xff]
    %v616 = vld [vmem:[#allocation5 + $0xe60] sm:$0xff]
    %v617 = vld [vmem:[#allocation5 + $0xe68] sm:$0xff]
    %v618 = vld [vmem:[#allocation5 + $0xe70] sm:$0xff]
    %v619 = vld [vmem:[#allocation5 + $0xe78] sm:$0xff]
    %v620 = vld [vmem:[#allocation5 + $0xe80] sm:$0xff]
    %v621 = vld [vmem:[#allocation5 + $0xe88] sm:$0xff]
    %v622 = vld [vmem:[#allocation5 + $0xe90] sm:$0xff]
    %v623 = vld [vmem:[#allocation5 + $0xe98] sm:$0xff]
    %v624 = vld [vmem:[#allocation5 + $0xea0] sm:$0xff]
    %v625 = vld [vmem:[#allocation5 + $0xea8] sm:$0xff]
    %v626 = vld [vmem:[#allocation5 + $0xeb0] sm:$0xff]
    %v627 = vld [vmem:[#allocation5 + $0xeb8] sm:$0xff]
    %v628 = vld [vmem:[#allocation5 + $0xec0] sm:$0xff]
    %v629 = vld [vmem:[#allocation5 + $0xec8] sm:$0xff]
    %v630 = vld [vmem:[#allocation5 + $0xed0] sm:$0xff]
    %v631 = vld [vmem:[#allocation5 + $0xed8] sm:$0xff]
    %v632 = vld [vmem:[#allocation5 + $0xee0] sm:$0xff]
    %v633 = vld [vmem:[#allocation5 + $0xee8] sm:$0xff]
    %v634 = vld [vmem:[#allocation5 + $0xef0] sm:$0xff]
    %v635 = vld [vmem:[#allocation5 + $0xef8] sm:$0xff]
    %v636 = vld [vmem:[#allocation5 + $0xf00] sm:$0xff]
    %v637 = vld [vmem:[#allocation5 + $0xf08] sm:$0xff]
    %v638 = vld [vmem:[#allocation5 + $0xf10] sm:$0xff]
    %v639 = vld [vmem:[#allocation5 + $0xf18] sm:$0xff]
    %v640 = vld [vmem:[#allocation5 + $0xf20] sm:$0xff]
    %v641 = vld [vmem:[#allocation5 + $0xf28] sm:$0xff]
    %v642 = vld [vmem:[#allocation5 + $0xf30] sm:$0xff]
    %v643 = vld [vmem:[#allocation5 + $0xf38] sm:$0xff]
    %v644 = vld [vmem:[#allocation5 + $0xf40] sm:$0xff]
    %v645 = vld [vmem:[#allocation5 + $0xf48] sm:$0xff]
    %v646 = vld [vmem:[#allocation5 + $0xf50] sm:$0xff]
    %v647 = vld [vmem:[#allocation5 + $0xf58] sm:$0xff]
    %v648 = vld [vmem:[#allocation5 + $0xf60] sm:$0xff]
    %v649 = vld [vmem:[#allocation5 + $0xf68] sm:$0xff]
    %v650 = vld [vmem:[#allocation5 + $0xf70] sm:$0xff]
    %v651 = vld [vmem:[#allocation5 + $0xf78] sm:$0xff]
    %v652 = vld [vmem:[#allocation5 + $0xf80] sm:$0xff]
    %v653 = vld [vmem:[#allocation5 + $0xf88] sm:$0xff]
    %v654 = vld [vmem:[#allocation5 + $0xf90] sm:$0xff]
    %v655 = vld [vmem:[#allocation5 + $0xf98] sm:$0xff]
    %v656 = vld [vmem:[#allocation5 + $0xfa0] sm:$0xff]
    %v657 = vld [vmem:[#allocation5 + $0xfa8] sm:$0xff]
    %v658 = vld [vmem:[#allocation5 + $0xfb0] sm:$0xff]
    %v659 = vld [vmem:[#allocation5 + $0xfb8] sm:$0xff]
    %v660 = vld [vmem:[#allocation5 + $0xfc0] sm:$0xff]
    %v661 = vld [vmem:[#allocation5 + $0xfc8] sm:$0xff]
    %v662 = vld [vmem:[#allocation5 + $0xfd0] sm:$0xff]
    %v663 = vld [vmem:[#allocation5 + $0xfd8] sm:$0xff]
    %v664 = vld [vmem:[#allocation5 + $0xfe0] sm:$0xff]
    %v665 = vld [vmem:[#allocation5 + $0xfe8] sm:$0xff]
    %v666 = vld [vmem:[#allocation5 + $0xff0] sm:$0xff]
    %v667 = vld [vmem:[#allocation5 + $0xff8] sm:$0xff]
    %v668 = vld [vmem:[#allocation5 + $0x1000] sm:$0xff]
    %v669 = vld [vmem:[#allocation5 + $0x1008] sm:$0xff]
    %v670 = vld [vmem:[#allocation5 + $0x1010] sm:$0xff]
    %v671 = vld [vmem:[#allocation5 + $0x1018] sm:$0xff]
    %v672 = vld [vmem:[#allocation5 + $0x1020] sm:$0xff]
    %v673 = vld [vmem:[#allocation5 + $0x1028] sm:$0xff]
    %v674 = vld [vmem:[#allocation5 + $0x1030] sm:$0xff]
    %v675 = vld [vmem:[#allocation5 + $0x1038] sm:$0xff]
    %v676 = vld [vmem:[#allocation5 + $0x1040] sm:$0xff]
    %v677 = vld [vmem:[#allocation5 + $0x1048] sm:$0xff]
    %v678 = vld [vmem:[#allocation5 + $0x1050] sm:$0xff]
    %v679 = vld [vmem:[#allocation5 + $0x1058] sm:$0xff]
    %v680 = vld [vmem:[#allocation5 + $0x1060] sm:$0xff]
    %v681 = vld [vmem:[#allocation5 + $0x1068] sm:$0xff]
    %v682 = vld [vmem:[#allocation5 + $0x1070] sm:$0xff]
    %v683 = vld [vmem:[#allocation5 + $0x1078] sm:$0xff]
    %v684 = vld [vmem:[#allocation5 + $0x1080] sm:$0xff]
    %v685 = vld [vmem:[#allocation5 + $0x1088] sm:$0xff]
    %v686 = vld [vmem:[#allocation5 + $0x1090] sm:$0xff]
    %v687 = vld [vmem:[#allocation5 + $0x1098] sm:$0xff]
    %v688 = vld [vmem:[#allocation5 + $0x10a0] sm:$0xff]
    %v689 = vld [vmem:[#allocation5 + $0x10a8] sm:$0xff]
    %v690 = vld [vmem:[#allocation5 + $0x10b0] sm:$0xff]
    %v691 = vld [vmem:[#allocation5 + $0x10b8] sm:$0xff]
    %v692 = vld [vmem:[#allocation5 + $0x10c0] sm:$0xff]
    %v693 = vld [vmem:[#allocation5 + $0x10c8] sm:$0xff]
    %v694 = vld [vmem:[#allocation5 + $0x10d0] sm:$0xff]
    %v695 = vld [vmem:[#allocation5 + $0x10d8] sm:$0xff]
    %v696 = vld [vmem:[#allocation5 + $0x10e0] sm:$0xff]
    %v697 = vld [vmem:[#allocation5 + $0x10e8] sm:$0xff]
    %v698 = vld [vmem:[#allocation5 + $0x10f0] sm:$0xff]
    %v699 = vld [vmem:[#allocation5 + $0x10f8] sm:$0xff]
    %v700 = vld [vmem:[#allocation5 + $0x1100] sm:$0xff]
    %v701 = vld [vmem:[#allocation5 + $0x1108] sm:$0xff]
    %v702 = vld [vmem:[#allocation5 + $0x1110] sm:$0xff]
    %v703 = vld [vmem:[#allocation5 + $0x1118] sm:$0xff]
    %v704 = vld [vmem:[#allocation5 + $0x1120] sm:$0xff]
    %v705 = vld [vmem:[#allocation5 + $0x1128] sm:$0xff]
    %v706 = vld [vmem:[#allocation5 + $0x1130] sm:$0xff]
    %v707 = vld [vmem:[#allocation5 + $0x1138] sm:$0xff]
    %v708 = vld [vmem:[#allocation5 + $0x1140] sm:$0xff]
    %v709 = vld [vmem:[#allocation5 + $0x1148] sm:$0xff]
    %v710 = vld [vmem:[#allocation5 + $0x1150] sm:$0xff]
    %v711 = vld [vmem:[#allocation5 + $0x1158] sm:$0xff]
    %v712 = vld [vmem:[#allocation5 + $0x1160] sm:$0xff]
    %v713 = vld [vmem:[#allocation5 + $0x1168] sm:$0xff]
    %v714 = vld [vmem:[#allocation5 + $0x1170] sm:$0xff]
    %v715 = vld [vmem:[#allocation5 + $0x1178] sm:$0xff]
    %v716 = vld [vmem:[#allocation5 + $0x1180] sm:$0xff]
    %v717 = vld [vmem:[#allocation5 + $0x1188] sm:$0xff]
    %v718 = vld [vmem:[#allocation5 + $0x1190] sm:$0xff]
    %v719 = vld [vmem:[#allocation5 + $0x1198] sm:$0xff]
    %v720 = vld [vmem:[#allocation5 + $0x11a0] sm:$0xff]
    %v721 = vld [vmem:[#allocation5 + $0x11a8] sm:$0xff]
    %v722 = vld [vmem:[#allocation5 + $0x11b0] sm:$0xff]
    %v723 = vld [vmem:[#allocation5 + $0x11b8] sm:$0xff]
    %v724 = vld [vmem:[#allocation5 + $0x11c0] sm:$0xff]
    %v725 = vld [vmem:[#allocation5 + $0x11c8] sm:$0xff]
    %v726 = vld [vmem:[#allocation5 + $0x11d0] sm:$0xff]
    %v727 = vld [vmem:[#allocation5 + $0x11d8] sm:$0xff]
    %v728 = vld [vmem:[#allocation5 + $0x11e0] sm:$0xff]
    %v729 = vld [vmem:[#allocation5 + $0x11e8] sm:$0xff]
    %v730 = vld [vmem:[#allocation5 + $0x11f0] sm:$0xff]
    %v731 = vld [vmem:[#allocation5 + $0x11f8] sm:$0xff]
    %v732 = vld [vmem:[#allocation5 + $0x1200] sm:$0xff]
    %v733 = vld [vmem:[#allocation5 + $0x1208] sm:$0xff]
    %v734 = vld [vmem:[#allocation5 + $0x1210] sm:$0xff]
    %v735 = vld [vmem:[#allocation5 + $0x1218] sm:$0xff]
    %v736 = vld [vmem:[#allocation5 + $0x1220] sm:$0xff]
    %v737 = vld [vmem:[#allocation5 + $0x1228] sm:$0xff]
    %v738 = vld [vmem:[#allocation5 + $0x1230] sm:$0xff]
    %v739 = vld [vmem:[#allocation5 + $0x1238] sm:$0xff]
    %v740 = vld [vmem:[#allocation5 + $0x1240] sm:$0xff]
    %v741 = vld [vmem:[#allocation5 + $0x1248] sm:$0xff]
    %v742 = vld [vmem:[#allocation5 + $0x1250] sm:$0xff]
    %v743 = vld [vmem:[#allocation5 + $0x1258] sm:$0xff]
    %v744 = vld [vmem:[#allocation5 + $0x1260] sm:$0xff]
    %v745 = vld [vmem:[#allocation5 + $0x1268] sm:$0xff]
    %v746 = vld [vmem:[#allocation5 + $0x1270] sm:$0xff]
    %v747 = vld [vmem:[#allocation5 + $0x1278] sm:$0xff]
    %v748 = vld [vmem:[#allocation5 + $0x1280] sm:$0xff]
    %v749 = vld [vmem:[#allocation5 + $0x1288] sm:$0xff]
    %v750 = vld [vmem:[#allocation5 + $0x1290] sm:$0xff]
    %v751 = vld [vmem:[#allocation5 + $0x1298] sm:$0xff]
    %v752 = vld [vmem:[#allocation5 + $0x12a0] sm:$0xff]
    %v753 = vld [vmem:[#allocation5 + $0x12a8] sm:$0xff]
    %v754 = vld [vmem:[#allocation5 + $0x12b0] sm:$0xff]
    %v755 = vld [vmem:[#allocation5 + $0x12b8] sm:$0xff]
    %v756 = vld [vmem:[#allocation5 + $0x12c0] sm:$0xff]
    %v757 = vld [vmem:[#allocation5 + $0x12c8] sm:$0xff]
    %v758 = vld [vmem:[#allocation5 + $0x12d0] sm:$0xff]
    %v759 = vld [vmem:[#allocation5 + $0x12d8] sm:$0xff]
    %v760 = vld [vmem:[#allocation5 + $0x12e0] sm:$0xff]
    %v761 = vld [vmem:[#allocation5 + $0x12e8] sm:$0xff]
    %v762 = vld [vmem:[#allocation5 + $0x12f0] sm:$0xff]
    %v763 = vld [vmem:[#allocation5 + $0x12f8] sm:$0xff]
    %v764 = vld [vmem:[#allocation5 + $0x1300] sm:$0xff]
    %v765 = vld [vmem:[#allocation5 + $0x1308] sm:$0xff]
    %v766 = vld [vmem:[#allocation5 + $0x1310] sm:$0xff]
    %v767 = vld [vmem:[#allocation5 + $0x1318] sm:$0xff]
    %v768 = vld [vmem:[#allocation5 + $0x1320] sm:$0xff]
    %v769 = vld [vmem:[#allocation5 + $0x1328] sm:$0xff]
    %v770 = vld [vmem:[#allocation5 + $0x1330] sm:$0xff]
    %v771 = vld [vmem:[#allocation5 + $0x1338] sm:$0xff]
    %v772 = vld [vmem:[#allocation5 + $0x1340] sm:$0xff]
    %v773 = vld [vmem:[#allocation5 + $0x1348] sm:$0xff]
    %v774 = vld [vmem:[#allocation5 + $0x1350] sm:$0xff]
    %v775 = vld [vmem:[#allocation5 + $0x1358] sm:$0xff]
    %v776 = vld [vmem:[#allocation5 + $0x1360] sm:$0xff]
    %v777 = vld [vmem:[#allocation5 + $0x1368] sm:$0xff]
    %v778 = vld [vmem:[#allocation5 + $0x1370] sm:$0xff]
    %v779 = vld [vmem:[#allocation5 + $0x1378] sm:$0xff]
    %v780 = vld [vmem:[#allocation5 + $0x1380] sm:$0xff]
    %v781 = vld [vmem:[#allocation5 + $0x1388] sm:$0xff]
    %v782 = vld [vmem:[#allocation5 + $0x1390] sm:$0xff]
    %v783 = vld [vmem:[#allocation5 + $0x1398] sm:$0xff]
    %v784 = vld [vmem:[#allocation5 + $0x13a0] sm:$0xff]
    %v785 = vld [vmem:[#allocation5 + $0x13a8] sm:$0xff]
    %v786 = vld [vmem:[#allocation5 + $0x13b0] sm:$0xff]
    %v787 = vld [vmem:[#allocation5 + $0x13b8] sm:$0xff]
    %v788 = vld [vmem:[#allocation5 + $0x13c0] sm:$0xff]
    %v789 = vld [vmem:[#allocation5 + $0x13c8] sm:$0xff]
    %v790 = vld [vmem:[#allocation5 + $0x13d0] sm:$0xff]
    %v791 = vld [vmem:[#allocation5 + $0x13d8] sm:$0xff]
    %v792 = vld [vmem:[#allocation5 + $0x13e0] sm:$0xff]
    %v793 = vld [vmem:[#allocation5 + $0x13e8] sm:$0xff]
    %v794 = vld [vmem:[#allocation5 + $0x13f0] sm:$0xff]
    %v795 = vld [vmem:[#allocation5 + $0x13f8] sm:$0xff]
    %v796 = vld [vmem:[#allocation5 + $0x1400] sm:$0xff]
    %v797 = vld [vmem:[#allocation5 + $0x1408] sm:$0xff]
    %v798 = vld [vmem:[#allocation5 + $0x1410] sm:$0xff]
    %v799 = vld [vmem:[#allocation5 + $0x1418] sm:$0xff]
    %v800 = vld [vmem:[#allocation5 + $0x1420] sm:$0xff]
    %v801 = vld [vmem:[#allocation5 + $0x1428] sm:$0xff]
    %v802 = vld [vmem:[#allocation5 + $0x1430] sm:$0xff]
    %v803 = vld [vmem:[#allocation5 + $0x1438] sm:$0xff]
    %v804 = vld [vmem:[#allocation5 + $0x1440] sm:$0xff]
    %v805 = vld [vmem:[#allocation5 + $0x1448] sm:$0xff]
    %v806 = vld [vmem:[#allocation5 + $0x1450] sm:$0xff]
    %v807 = vld [vmem:[#allocation5 + $0x1458] sm:$0xff]
    %v808 = vld [vmem:[#allocation5 + $0x1460] sm:$0xff]
    %v809 = vld [vmem:[#allocation5 + $0x1468] sm:$0xff]
    %v810 = vld [vmem:[#allocation5 + $0x1470] sm:$0xff]
    %v811 = vld [vmem:[#allocation5 + $0x1478] sm:$0xff]
    %v812 = vld [vmem:[#allocation5 + $0x1480] sm:$0xff]
    %v813 = vld [vmem:[#allocation5 + $0x1488] sm:$0xff]
    %v814 = vld [vmem:[#allocation5 + $0x1490] sm:$0xff]
    %v815 = vld [vmem:[#allocation5 + $0x1498] sm:$0xff]
    %v816 = vld [vmem:[#allocation5 + $0x14a0] sm:$0xff]
    %v817 = vld [vmem:[#allocation5 + $0x14a8] sm:$0xff]
    %v818 = vld [vmem:[#allocation5 + $0x14b0] sm:$0xff]
    %v819 = vld [vmem:[#allocation5 + $0x14b8] sm:$0xff]
    %v820 = vld [vmem:[#allocation5 + $0x14c0] sm:$0xff]
    %v821 = vld [vmem:[#allocation5 + $0x14c8] sm:$0xff]
    %v822 = vld [vmem:[#allocation5 + $0x14d0] sm:$0xff]
    %v823 = vld [vmem:[#allocation5 + $0x14d8] sm:$0xff]
    %v824 = vld [vmem:[#allocation5 + $0x14e0] sm:$0xff]
    %v825 = vld [vmem:[#allocation5 + $0x14e8] sm:$0xff]
    %v826 = vld [vmem:[#allocation5 + $0x14f0] sm:$0xff]
    %v827 = vld [vmem:[#allocation5 + $0x14f8] sm:$0xff]
    %v828 = vld [vmem:[#allocation5 + $0x1500] sm:$0xff]
    %v829 = vld [vmem:[#allocation5 + $0x1508] sm:$0xff]
    %v830 = vld [vmem:[#allocation5 + $0x1510] sm:$0xff]
    %v831 = vld [vmem:[#allocation5 + $0x1518] sm:$0xff]
    %v832 = vld [vmem:[#allocation5 + $0x1520] sm:$0xff]
    %v833 = vld [vmem:[#allocation5 + $0x1528] sm:$0xff]
    %v834 = vld [vmem:[#allocation5 + $0x1530] sm:$0xff]
    %v835 = vld [vmem:[#allocation5 + $0x1538] sm:$0xff]
    %v836 = vld [vmem:[#allocation5 + $0x1540] sm:$0xff]
    %v837 = vld [vmem:[#allocation5 + $0x1548] sm:$0xff]
    %v838 = vld [vmem:[#allocation5 + $0x1550] sm:$0xff]
    %v839 = vld [vmem:[#allocation5 + $0x1558] sm:$0xff]
    %v840 = vld [vmem:[#allocation5 + $0x1560] sm:$0xff]
    %v841 = vld [vmem:[#allocation5 + $0x1568] sm:$0xff]
    %v842 = vld [vmem:[#allocation5 + $0x1570] sm:$0xff]
    %v843 = vld [vmem:[#allocation5 + $0x1578] sm:$0xff]
    %v844 = vld [vmem:[#allocation5 + $0x1580] sm:$0xff]
    %v845 = vld [vmem:[#allocation5 + $0x1588] sm:$0xff]
    %v846 = vld [vmem:[#allocation5 + $0x1590] sm:$0xff]
    %v847 = vld [vmem:[#allocation5 + $0x1598] sm:$0xff]
    %v848 = vld [vmem:[#allocation5 + $0x15a0] sm:$0xff]
    %v849 = vld [vmem:[#allocation5 + $0x15a8] sm:$0xff]
    %v850 = vld [vmem:[#allocation5 + $0x15b0] sm:$0xff]
    %v851 = vld [vmem:[#allocation5 + $0x15b8] sm:$0xff]
    %v852 = vld [vmem:[#allocation5 + $0x15c0] sm:$0xff]
    %v853 = vld [vmem:[#allocation5 + $0x15c8] sm:$0xff]
    %v854 = vld [vmem:[#allocation5 + $0x15d0] sm:$0xff]
    %v855 = vld [vmem:[#allocation5 + $0x15d8] sm:$0xff]
    %v856 = vld [vmem:[#allocation5 + $0x15e0] sm:$0xff]
    %v857 = vld [vmem:[#allocation5 + $0x15e8] sm:$0xff]
    %v858 = vld [vmem:[#allocation5 + $0x15f0] sm:$0xff]
    %v859 = vld [vmem:[#allocation5 + $0x15f8] sm:$0xff]
    %v860 = vld [vmem:[#allocation5 + $0x1600] sm:$0xff]
    %v861 = vld [vmem:[#allocation5 + $0x1608] sm:$0xff]
    %v862 = vld [vmem:[#allocation5 + $0x1610] sm:$0xff]
    %v863 = vld [vmem:[#allocation5 + $0x1618] sm:$0xff]
    %v864 = vld [vmem:[#allocation5 + $0x1620] sm:$0xff]
    %v865 = vld [vmem:[#allocation5 + $0x1628] sm:$0xff]
    %v866 = vld [vmem:[#allocation5 + $0x1630] sm:$0xff]
    %v867 = vld [vmem:[#allocation5 + $0x1638] sm:$0xff]
    %v868 = vld [vmem:[#allocation5 + $0x1640] sm:$0xff]
    %v869 = vld [vmem:[#allocation5 + $0x1648] sm:$0xff]
    %v870 = vld [vmem:[#allocation5 + $0x1650] sm:$0xff]
    %v871 = vld [vmem:[#allocation5 + $0x1658] sm:$0xff]
    %v872 = vld [vmem:[#allocation5 + $0x1660] sm:$0xff]
    %v873 = vld [vmem:[#allocation5 + $0x1668] sm:$0xff]
    %v874 = vld [vmem:[#allocation5 + $0x1670] sm:$0xff]
    %v875 = vld [vmem:[#allocation5 + $0x1678] sm:$0xff]
    %v876 = vld [vmem:[#allocation5 + $0x1680] sm:$0xff]
    %v877 = vld [vmem:[#allocation5 + $0x1688] sm:$0xff]
    %v878 = vld [vmem:[#allocation5 + $0x1690] sm:$0xff]
    %v879 = vld [vmem:[#allocation5 + $0x1698] sm:$0xff]
    %v880 = vld [vmem:[#allocation5 + $0x16a0] sm:$0xff]
    %v881 = vld [vmem:[#allocation5 + $0x16a8] sm:$0xff]
    %v882 = vld [vmem:[#allocation5 + $0x16b0] sm:$0xff]
    %v883 = vld [vmem:[#allocation5 + $0x16b8] sm:$0xff]
    %v884 = vld [vmem:[#allocation5 + $0x16c0] sm:$0xff]
    %v885 = vld [vmem:[#allocation5 + $0x16c8] sm:$0xff]
    %v886 = vld [vmem:[#allocation5 + $0x16d0] sm:$0xff]
    %v887 = vld [vmem:[#allocation5 + $0x16d8] sm:$0xff]
    %v888 = vld [vmem:[#allocation5 + $0x16e0] sm:$0xff]
    %v889 = vld [vmem:[#allocation5 + $0x16e8] sm:$0xff]
    %v890 = vld [vmem:[#allocation5 + $0x16f0] sm:$0xff]
    %v891 = vld [vmem:[#allocation5 + $0x16f8] sm:$0xff]
    %v892 = vld [vmem:[#allocation5 + $0x1700] sm:$0xff]
    %v893 = vld [vmem:[#allocation5 + $0x1708] sm:$0xff]
    %v894 = vld [vmem:[#allocation5 + $0x1710] sm:$0xff]
    %v895 = vld [vmem:[#allocation5 + $0x1718] sm:$0xff]
    %v896 = vld [vmem:[#allocation5 + $0x1720] sm:$0xff]
    %v897 = vld [vmem:[#allocation5 + $0x1728] sm:$0xff]
    %v898 = vld [vmem:[#allocation5 + $0x1730] sm:$0xff]
    %v899 = vld [vmem:[#allocation5 + $0x1738] sm:$0xff]
    %v900 = vld [vmem:[#allocation5 + $0x1740] sm:$0xff]
    %v901 = vld [vmem:[#allocation5 + $0x1748] sm:$0xff]
    %v902 = vld [vmem:[#allocation5 + $0x1750] sm:$0xff]
    %v903 = vld [vmem:[#allocation5 + $0x1758] sm:$0xff]
    %v904 = vld [vmem:[#allocation5 + $0x1760] sm:$0xff]
    %v905 = vld [vmem:[#allocation5 + $0x1768] sm:$0xff]
    %v906 = vld [vmem:[#allocation5 + $0x1770] sm:$0xff]
    %v907 = vld [vmem:[#allocation5 + $0x1778] sm:$0xff]
    %v908 = vld [vmem:[#allocation5 + $0x1780] sm:$0xff]
    %v909 = vld [vmem:[#allocation5 + $0x1788] sm:$0xff]
    %v910 = vld [vmem:[#allocation5 + $0x1790] sm:$0xff]
    %v911 = vld [vmem:[#allocation5 + $0x1798] sm:$0xff]
    %v912 = vld [vmem:[#allocation5 + $0x17a0] sm:$0xff]
    %v913 = vld [vmem:[#allocation5 + $0x17a8] sm:$0xff]
    %v914 = vld [vmem:[#allocation5 + $0x17b0] sm:$0xff]
    %v915 = vld [vmem:[#allocation5 + $0x17b8] sm:$0xff]
    %v916 = vld [vmem:[#allocation5 + $0x17c0] sm:$0xff]
    %v917 = vld [vmem:[#allocation5 + $0x17c8] sm:$0xff]
    %v918 = vld [vmem:[#allocation5 + $0x17d0] sm:$0xff]
    %v919 = vld [vmem:[#allocation5 + $0x17d8] sm:$0xff]
    %v920 = vld [vmem:[#allocation5 + $0x17e0] sm:$0xff]
    %v921 = vld [vmem:[#allocation5 + $0x17e8] sm:$0xff]
    %v922 = vld [vmem:[#allocation5 + $0x17f0] sm:$0xff]
    %v923 = vld [vmem:[#allocation5 + $0x17f8] sm:$0xff]
    %v924 = vld [vmem:[#allocation5 + $0x1800] sm:$0xff]
    %v925 = vld [vmem:[#allocation5 + $0x1808] sm:$0xff]
    %v926 = vld [vmem:[#allocation5 + $0x1810] sm:$0xff]
    %v927 = vld [vmem:[#allocation5 + $0x1818] sm:$0xff]
    %v928 = vld [vmem:[#allocation5 + $0x1820] sm:$0xff]
    %v929 = vld [vmem:[#allocation5 + $0x1828] sm:$0xff]
    %v930 = vld [vmem:[#allocation5 + $0x1830] sm:$0xff]
    %v931 = vld [vmem:[#allocation5 + $0x1838] sm:$0xff]
    %v932 = vld [vmem:[#allocation5 + $0x1840] sm:$0xff]
    %v933 = vld [vmem:[#allocation5 + $0x1848] sm:$0xff]
    %v934 = vld [vmem:[#allocation5 + $0x1850] sm:$0xff]
    %v935 = vld [vmem:[#allocation5 + $0x1858] sm:$0xff]
    %v936 = vld [vmem:[#allocation5 + $0x1860] sm:$0xff]
    %v937 = vld [vmem:[#allocation5 + $0x1868] sm:$0xff]
    %v938 = vld [vmem:[#allocation5 + $0x1870] sm:$0xff]
    %v939 = vld [vmem:[#allocation5 + $0x1878] sm:$0xff]
    %v940 = vld [vmem:[#allocation5 + $0x1880] sm:$0xff]
    %v941 = vld [vmem:[#allocation5 + $0x1888] sm:$0xff]
    %v942 = vld [vmem:[#allocation5 + $0x1890] sm:$0xff]
    %v943 = vld [vmem:[#allocation5 + $0x1898] sm:$0xff]
    %v944 = vld [vmem:[#allocation5 + $0x18a0] sm:$0xff]
    %v945 = vld [vmem:[#allocation5 + $0x18a8] sm:$0xff]
    %v946 = vld [vmem:[#allocation5 + $0x18b0] sm:$0xff]
    %v947 = vld [vmem:[#allocation5 + $0x18b8] sm:$0xff]
    %v948 = vld [vmem:[#allocation5 + $0x18c0] sm:$0xff]
    %v949 = vld [vmem:[#allocation5 + $0x18c8] sm:$0xff]
    %v950 = vld [vmem:[#allocation5 + $0x18d0] sm:$0xff]
    %v951 = vld [vmem:[#allocation5 + $0x18d8] sm:$0xff]
    %v952 = vld [vmem:[#allocation5 + $0x18e0] sm:$0xff]
    %v953 = vld [vmem:[#allocation5 + $0x18e8] sm:$0xff]
    %v954 = vld [vmem:[#allocation5 + $0x18f0] sm:$0xff]
    %v955 = vld [vmem:[#allocation5 + $0x18f8] sm:$0xff]
    %v956 = vld [vmem:[#allocation5 + $0x1900] sm:$0xff]
    %v957 = vld [vmem:[#allocation5 + $0x1908] sm:$0xff]
    %v958 = vld [vmem:[#allocation5 + $0x1910] sm:$0xff]
    %v959 = vld [vmem:[#allocation5 + $0x1918] sm:$0xff]
    %v960 = vld [vmem:[#allocation5 + $0x1920] sm:$0xff]
    %v961 = vld [vmem:[#allocation5 + $0x1928] sm:$0xff]
    %v962 = vld [vmem:[#allocation5 + $0x1930] sm:$0xff]
    %v963 = vld [vmem:[#allocation5 + $0x1938] sm:$0xff]
    %v964 = vld [vmem:[#allocation5 + $0x1940] sm:$0xff]
    %v965 = vld [vmem:[#allocation5 + $0x1948] sm:$0xff]
    %v966 = vld [vmem:[#allocation5 + $0x1950] sm:$0xff]
    %v967 = vld [vmem:[#allocation5 + $0x1958] sm:$0xff]
    %v968 = vld [vmem:[#allocation5 + $0x1960] sm:$0xff]
    %v969 = vld [vmem:[#allocation5 + $0x1968] sm:$0xff]
    %v970 = vld [vmem:[#allocation5 + $0x1970] sm:$0xff]
    %v971 = vld [vmem:[#allocation5 + $0x1978] sm:$0xff]
    %v972 = vld [vmem:[#allocation5 + $0x1980] sm:$0xff]
    %v973 = vld [vmem:[#allocation5 + $0x1988] sm:$0xff]
    %v974 = vld [vmem:[#allocation5 + $0x1990] sm:$0xff]
    %v975 = vld [vmem:[#allocation5 + $0x1998] sm:$0xff]
    %v976 = vld [vmem:[#allocation5 + $0x19a0] sm:$0xff]
    %v977 = vld [vmem:[#allocation5 + $0x19a8] sm:$0xff]
    %v978 = vld [vmem:[#allocation5 + $0x19b0] sm:$0xff]
    %v979 = vld [vmem:[#allocation5 + $0x19b8] sm:$0xff]
    %v980 = vld [vmem:[#allocation5 + $0x19c0] sm:$0xff]
    %v981 = vld [vmem:[#allocation5 + $0x19c8] sm:$0xff]
    %v982 = vld [vmem:[#allocation5 + $0x19d0] sm:$0xff]
    %v983 = vld [vmem:[#allocation5 + $0x19d8] sm:$0xff]
    %v984 = vld [vmem:[#allocation5 + $0x19e0] sm:$0xff]
    %v985 = vld [vmem:[#allocation5 + $0x19e8] sm:$0xff]
    %v986 = vld [vmem:[#allocation5 + $0x19f0] sm:$0xff]
    %v987 = vld [vmem:[#allocation5 + $0x19f8] sm:$0xff]
    %v988 = vld [vmem:[#allocation5 + $0x1a00] sm:$0xff]
    %v989 = vld [vmem:[#allocation5 + $0x1a08] sm:$0xff]
    %v990 = vld [vmem:[#allocation5 + $0x1a10] sm:$0xff]
    %v991 = vld [vmem:[#allocation5 + $0x1a18] sm:$0xff]
    %v992 = vld [vmem:[#allocation5 + $0x1a20] sm:$0xff]
    %v993 = vld [vmem:[#allocation5 + $0x1a28] sm:$0xff]
    %v994 = vld [vmem:[#allocation5 + $0x1a30] sm:$0xff]
    %v995 = vld [vmem:[#allocation5 + $0x1a38] sm:$0xff]
    %v996 = vld [vmem:[#allocation5 + $0x1a40] sm:$0xff]
    %v997 = vld [vmem:[#allocation5 + $0x1a48] sm:$0xff]
    %v998 = vld [vmem:[#allocation5 + $0x1a50] sm:$0xff]
    %v999 = vld [vmem:[#allocation5 + $0x1a58] sm:$0xff]
    %v1000 = vld [vmem:[#allocation5 + $0x1a60] sm:$0xff]
    %v1001 = vld [vmem:[#allocation5 + $0x1a68] sm:$0xff]
    %v1002 = vld [vmem:[#allocation5 + $0x1a70] sm:$0xff]
    %v1003 = vld [vmem:[#allocation5 + $0x1a78] sm:$0xff]
    %v1004 = vld [vmem:[#allocation5 + $0x1a80] sm:$0xff]
    %v1005 = vld [vmem:[#allocation5 + $0x1a88] sm:$0xff]
    %v1006 = vld [vmem:[#allocation5 + $0x1a90] sm:$0xff]
    %v1007 = vld [vmem:[#allocation5 + $0x1a98] sm:$0xff]
    %v1008 = vld [vmem:[#allocation5 + $0x1aa0] sm:$0xff]
    %v1009 = vld [vmem:[#allocation5 + $0x1aa8] sm:$0xff]
    %v1010 = vld [vmem:[#allocation5 + $0x1ab0] sm:$0xff]
    %v1011 = vld [vmem:[#allocation5 + $0x1ab8] sm:$0xff]
    %v1012 = vld [vmem:[#allocation5 + $0x1ac0] sm:$0xff]
    %v1013 = vld [vmem:[#allocation5 + $0x1ac8] sm:$0xff]
    %v1014 = vld [vmem:[#allocation5 + $0x1ad0] sm:$0xff]
    %v1015 = vld [vmem:[#allocation5 + $0x1ad8] sm:$0xff]
    %v1016 = vld [vmem:[#allocation5 + $0x1ae0] sm:$0xff]
    %v1017 = vld [vmem:[#allocation5 + $0x1ae8] sm:$0xff]
    %v1018 = vld [vmem:[#allocation5 + $0x1af0] sm:$0xff]
    %v1019 = vld [vmem:[#allocation5 + $0x1af8] sm:$0xff]
    %v1020 = vld [vmem:[#allocation5 + $0x1b00] sm:$0xff]
    %v1021 = vld [vmem:[#allocation5 + $0x1b08] sm:$0xff]
    %v1022 = vld [vmem:[#allocation5 + $0x1b10] sm:$0xff]
    %v1023 = vld [vmem:[#allocation5 + $0x1b18] sm:$0xff]
    %v1024 = vld [vmem:[#allocation5 + $0x1b20] sm:$0xff]
    %v1025 = vld [vmem:[#allocation5 + $0x1b28] sm:$0xff]
    %v1026 = vld [vmem:[#allocation5 + $0x1b30] sm:$0xff]
    %v1027 = vld [vmem:[#allocation5 + $0x1b38] sm:$0xff]
    %v1028 = vld [vmem:[#allocation5 + $0x1b40] sm:$0xff]
    %v1029 = vld [vmem:[#allocation5 + $0x1b48] sm:$0xff]
    %v1030 = vld [vmem:[#allocation5 + $0x1b50] sm:$0xff]
    %v1031 = vld [vmem:[#allocation5 + $0x1b58] sm:$0xff]
    %v1032 = vld [vmem:[#allocation5 + $0x1b60] sm:$0xff]
    %v1033 = vld [vmem:[#allocation5 + $0x1b68] sm:$0xff]
    %v1034 = vld [vmem:[#allocation5 + $0x1b70] sm:$0xff]
    %v1035 = vld [vmem:[#allocation5 + $0x1b78] sm:$0xff]
    %v1036 = vld [vmem:[#allocation5 + $0x1b80] sm:$0xff]
    %v1037 = vld [vmem:[#allocation5 + $0x1b88] sm:$0xff]
    %v1038 = vld [vmem:[#allocation5 + $0x1b90] sm:$0xff]
    %v1039 = vld [vmem:[#allocation5 + $0x1b98] sm:$0xff]
    %v1040 = vld [vmem:[#allocation5 + $0x1ba0] sm:$0xff]
    %v1041 = vld [vmem:[#allocation5 + $0x1ba8] sm:$0xff]
    %v1042 = vld [vmem:[#allocation5 + $0x1bb0] sm:$0xff]
    %v1043 = vld [vmem:[#allocation5 + $0x1bb8] sm:$0xff]
    %v1044 = vld [vmem:[#allocation5 + $0x1bc0] sm:$0xff]
    %v1045 = vld [vmem:[#allocation5 + $0x1bc8] sm:$0xff]
    %v1046 = vld [vmem:[#allocation5 + $0x1bd0] sm:$0xff]
    %v1047 = vld [vmem:[#allocation5 + $0x1bd8] sm:$0xff]
    %v1048 = vld [vmem:[#allocation5 + $0x1be0] sm:$0xff]
    %v1049 = vld [vmem:[#allocation5 + $0x1be8] sm:$0xff]
    %v1050 = vld [vmem:[#allocation5 + $0x1bf0] sm:$0xff]
    %v1051 = vld [vmem:[#allocation5 + $0x1bf8] sm:$0xff]
    %v1052 = vld [vmem:[#allocation5 + $0x1c00] sm:$0xff]
    %v1053 = vld [vmem:[#allocation5 + $0x1c08] sm:$0xff]
    %v1054 = vld [vmem:[#allocation5 + $0x1c10] sm:$0xff]
    %v1055 = vld [vmem:[#allocation5 + $0x1c18] sm:$0xff]
    %v1056 = vld [vmem:[#allocation5 + $0x1c20] sm:$0xff]
    %v1057 = vld [vmem:[#allocation5 + $0x1c28] sm:$0xff]
    %v1058 = vld [vmem:[#allocation5 + $0x1c30] sm:$0xff]
    %v1059 = vld [vmem:[#allocation5 + $0x1c38] sm:$0xff]
    %v1060 = vld [vmem:[#allocation5 + $0x1c40] sm:$0xff]
    %v1061 = vld [vmem:[#allocation5 + $0x1c48] sm:$0xff]
    %v1062 = vld [vmem:[#allocation5 + $0x1c50] sm:$0xff]
    %v1063 = vld [vmem:[#allocation5 + $0x1c58] sm:$0xff]
    %v1064 = vld [vmem:[#allocation5 + $0x1c60] sm:$0xff]
    %v1065 = vld [vmem:[#allocation5 + $0x1c68] sm:$0xff]
    %v1066 = vld [vmem:[#allocation5 + $0x1c70] sm:$0xff]
    %v1067 = vld [vmem:[#allocation5 + $0x1c78] sm:$0xff]
    %v1068 = vld [vmem:[#allocation5 + $0x1c80] sm:$0xff]
    %v1069 = vld [vmem:[#allocation5 + $0x1c88] sm:$0xff]
    %v1070 = vld [vmem:[#allocation5 + $0x1c90] sm:$0xff]
    %v1071 = vld [vmem:[#allocation5 + $0x1c98] sm:$0xff]
    %v1072 = vld [vmem:[#allocation5 + $0x1ca0] sm:$0xff]
    %v1073 = vld [vmem:[#allocation5 + $0x1ca8] sm:$0xff]
    %v1074 = vld [vmem:[#allocation5 + $0x1cb0] sm:$0xff]
    %v1075 = vld [vmem:[#allocation5 + $0x1cb8] sm:$0xff]
    %v1076 = vld [vmem:[#allocation5 + $0x1cc0] sm:$0xff]
    %v1077 = vld [vmem:[#allocation5 + $0x1cc8] sm:$0xff]
    %v1078 = vld [vmem:[#allocation5 + $0x1cd0] sm:$0xff]
    %v1079 = vld [vmem:[#allocation5 + $0x1cd8] sm:$0xff]
    %v1080 = vld [vmem:[#allocation5 + $0x1ce0] sm:$0xff]
    %v1081 = vld [vmem:[#allocation5 + $0x1ce8] sm:$0xff]
    %v1082 = vld [vmem:[#allocation5 + $0x1cf0] sm:$0xff]
    %v1083 = vld [vmem:[#allocation5 + $0x1cf8] sm:$0xff]
    %v1084 = vld [vmem:[#allocation5 + $0x1d00] sm:$0xff]
    %v1085 = vld [vmem:[#allocation5 + $0x1d08] sm:$0xff]
    %v1086 = vld [vmem:[#allocation5 + $0x1d10] sm:$0xff]
    %v1087 = vld [vmem:[#allocation5 + $0x1d18] sm:$0xff]
    %v1088 = vld [vmem:[#allocation5 + $0x1d20] sm:$0xff]
    %v1089 = vld [vmem:[#allocation5 + $0x1d28] sm:$0xff]
    %v1090 = vld [vmem:[#allocation5 + $0x1d30] sm:$0xff]
    %v1091 = vld [vmem:[#allocation5 + $0x1d38] sm:$0xff]
    %v1092 = vld [vmem:[#allocation5 + $0x1d40] sm:$0xff]
    %v1093 = vld [vmem:[#allocation5 + $0x1d48] sm:$0xff]
    %v1094 = vld [vmem:[#allocation5 + $0x1d50] sm:$0xff]
    %v1095 = vld [vmem:[#allocation5 + $0x1d58] sm:$0xff]
    %v1096 = vld [vmem:[#allocation5 + $0x1d60] sm:$0xff]
    %v1097 = vld [vmem:[#allocation5 + $0x1d68] sm:$0xff]
    %v1098 = vld [vmem:[#allocation5 + $0x1d70] sm:$0xff]
    %v1099 = vld [vmem:[#allocation5 + $0x1d78] sm:$0xff]
    %v1100 = vld [vmem:[#allocation5 + $0x1d80] sm:$0xff]
    %v1101 = vld [vmem:[#allocation5 + $0x1d88] sm:$0xff]
    %v1102 = vld [vmem:[#allocation5 + $0x1d90] sm:$0xff]
    %v1103 = vld [vmem:[#allocation5 + $0x1d98] sm:$0xff]
    %v1104 = vld [vmem:[#allocation5 + $0x1da0] sm:$0xff]
    %v1105 = vld [vmem:[#allocation5 + $0x1da8] sm:$0xff]
    %v1106 = vld [vmem:[#allocation5 + $0x1db0] sm:$0xff]
    %v1107 = vld [vmem:[#allocation5 + $0x1db8] sm:$0xff]
    %v1108 = vld [vmem:[#allocation5 + $0x1dc0] sm:$0xff]
    %v1109 = vld [vmem:[#allocation5 + $0x1dc8] sm:$0xff]
    %v1110 = vld [vmem:[#allocation5 + $0x1dd0] sm:$0xff]
    %v1111 = vld [vmem:[#allocation5 + $0x1dd8] sm:$0xff]
    %v1112 = vld [vmem:[#allocation5 + $0x1de0] sm:$0xff]
    %v1113 = vld [vmem:[#allocation5 + $0x1de8] sm:$0xff]
    %v1114 = vld [vmem:[#allocation5 + $0x1df0] sm:$0xff]
    %v1115 = vld [vmem:[#allocation5 + $0x1df8] sm:$0xff]
    %v1116 = vld [vmem:[#allocation5 + $0x1e00] sm:$0xff]
    %v1117 = vld [vmem:[#allocation5 + $0x1e08] sm:$0xff]
    %v1118 = vld [vmem:[#allocation5 + $0x1e10] sm:$0xff]
    %v1119 = vld [vmem:[#allocation5 + $0x1e18] sm:$0xff]
    %v1120 = vld [vmem:[#allocation5 + $0x1e20] sm:$0xff]
    %v1121 = vld [vmem:[#allocation5 + $0x1e28] sm:$0xff]
    %v1122 = vld [vmem:[#allocation5 + $0x1e30] sm:$0xff]
    %v1123 = vld [vmem:[#allocation5 + $0x1e38] sm:$0xff]
    %v1124 = vld [vmem:[#allocation5 + $0x1e40] sm:$0xff]
    %v1125 = vld [vmem:[#allocation5 + $0x1e48] sm:$0xff]
    %v1126 = vld [vmem:[#allocation5 + $0x1e50] sm:$0xff]
    %v1127 = vld [vmem:[#allocation5 + $0x1e58] sm:$0xff]
    %v1128 = vld [vmem:[#allocation5 + $0x1e60] sm:$0xff]
    %v1129 = vld [vmem:[#allocation5 + $0x1e68] sm:$0xff]
    %v1130 = vld [vmem:[#allocation5 + $0x1e70] sm:$0xff]
    %v1131 = vld [vmem:[#allocation5 + $0x1e78] sm:$0xff]
    %v1132 = vld [vmem:[#allocation5 + $0x1e80] sm:$0xff]
    %v1133 = vld [vmem:[#allocation5 + $0x1e88] sm:$0xff]
    %v1134 = vld [vmem:[#allocation5 + $0x1e90] sm:$0xff]
    %v1135 = vld [vmem:[#allocation5 + $0x1e98] sm:$0xff]
    %v1136 = vld [vmem:[#allocation5 + $0x1ea0] sm:$0xff]
    %v1137 = vld [vmem:[#allocation5 + $0x1ea8] sm:$0xff]
    %v1138 = vld [vmem:[#allocation5 + $0x1eb0] sm:$0xff]
    %v1139 = vld [vmem:[#allocation5 + $0x1eb8] sm:$0xff]
    %v1140 = vld [vmem:[#allocation5 + $0x1ec0] sm:$0xff]
    %v1141 = vld [vmem:[#allocation5 + $0x1ec8] sm:$0xff]
    %v1142 = vld [vmem:[#allocation5 + $0x1ed0] sm:$0xff]
    %v1143 = vld [vmem:[#allocation5 + $0x1ed8] sm:$0xff]
    %v1144 = vld [vmem:[#allocation5 + $0x1ee0] sm:$0xff]
    %v1145 = vld [vmem:[#allocation5 + $0x1ee8] sm:$0xff]
    %v1146 = vld [vmem:[#allocation5 + $0x1ef0] sm:$0xff]
    %v1147 = vld [vmem:[#allocation5 + $0x1ef8] sm:$0xff]
    %v1148 = vld [vmem:[#allocation5 + $0x1f00] sm:$0xff]
    %v1149 = vld [vmem:[#allocation5 + $0x1f08] sm:$0xff]
    %v1150 = vld [vmem:[#allocation5 + $0x1f10] sm:$0xff]
    %v1151 = vld [vmem:[#allocation5 + $0x1f18] sm:$0xff]
    %v1152 = vld [vmem:[#allocation5 + $0x1f20] sm:$0xff]
    %v1153 = vld [vmem:[#allocation5 + $0x1f28] sm:$0xff]
    %v1154 = vld [vmem:[#allocation5 + $0x1f30] sm:$0xff]
    %v1155 = vld [vmem:[#allocation5 + $0x1f38] sm:$0xff]
    %v1156 = vld [vmem:[#allocation5 + $0x1f40] sm:$0xff]
    %v1157 = vld [vmem:[#allocation5 + $0x1f48] sm:$0xff]
    %v1158 = vld [vmem:[#allocation5 + $0x1f50] sm:$0xff]
    %v1159 = vld [vmem:[#allocation5 + $0x1f58] sm:$0xff]
    %v1160 = vld [vmem:[#allocation5 + $0x1f60] sm:$0xff]
    %v1161 = vld [vmem:[#allocation5 + $0x1f68] sm:$0xff]
    %v1162 = vld [vmem:[#allocation5 + $0x1f70] sm:$0xff]
    %v1163 = vld [vmem:[#allocation5 + $0x1f78] sm:$0xff]
    %v1164 = vld [vmem:[#allocation5 + $0x1f80] sm:$0xff]
    %v1165 = vld [vmem:[#allocation5 + $0x1f88] sm:$0xff]
    %v1166 = vld [vmem:[#allocation5 + $0x1f90] sm:$0xff]
    %v1167 = vld [vmem:[#allocation5 + $0x1f98] sm:$0xff]
    %v1168 = vld [vmem:[#allocation5 + $0x1fa0] sm:$0xff]
    %v1169 = vld [vmem:[#allocation5 + $0x1fa8] sm:$0xff]
    %v1170 = vld [vmem:[#allocation5 + $0x1fb0] sm:$0xff]
    %v1171 = vld [vmem:[#allocation5 + $0x1fb8] sm:$0xff]
    %v1172 = vld [vmem:[#allocation5 + $0x1fc0] sm:$0xff]
    %v1173 = vld [vmem:[#allocation5 + $0x1fc8] sm:$0xff]
    %v1174 = vld [vmem:[#allocation5 + $0x1fd0] sm:$0xff]
    %v1175 = vld [vmem:[#allocation5 + $0x1fd8] sm:$0xff]
    %v1176 = vld [vmem:[#allocation5 + $0x1fe0] sm:$0xff]
    %v1177 = vld [vmem:[#allocation5 + $0x1fe8] sm:$0xff]
    %v1178 = vld [vmem:[#allocation5 + $0x1ff0] sm:$0xff]
    %v1179 = vld [vmem:[#allocation5 + $0x1ff8] sm:$0xff]
    %v1180 = vld [vmem:[#allocation5 + $0x2000] sm:$0xff]
    %v1181 = vld [vmem:[#allocation5 + $0x2008] sm:$0xff]
    %v1182 = vld [vmem:[#allocation5 + $0x2010] sm:$0xff]
    %v1183 = vld [vmem:[#allocation5 + $0x2018] sm:$0xff]
    %v1184 = vld [vmem:[#allocation5 + $0x2020] sm:$0xff]
    %v1185 = vld [vmem:[#allocation5 + $0x2028] sm:$0xff]
    %v1186 = vld [vmem:[#allocation5 + $0x2030] sm:$0xff]
    %v1187 = vld [vmem:[#allocation5 + $0x2038] sm:$0xff]
    %v1188 = vld [vmem:[#allocation5 + $0x2040] sm:$0xff]
    %v1189 = vld [vmem:[#allocation5 + $0x2048] sm:$0xff]
    %v1190 = vld [vmem:[#allocation5 + $0x2050] sm:$0xff]
    %v1191 = vld [vmem:[#allocation5 + $0x2058] sm:$0xff]
    %v1192 = vld [vmem:[#allocation5 + $0x2060] sm:$0xff]
    %v1193 = vld [vmem:[#allocation5 + $0x2068] sm:$0xff]
    %v1194 = vld [vmem:[#allocation5 + $0x2070] sm:$0xff]
    %v1195 = vld [vmem:[#allocation5 + $0x2078] sm:$0xff]
    %v1196 = vld [vmem:[#allocation5 + $0x2080] sm:$0xff]
    %v1197 = vld [vmem:[#allocation5 + $0x2088] sm:$0xff]
    %v1198 = vld [vmem:[#allocation5 + $0x2090] sm:$0xff]
    %v1199 = vld [vmem:[#allocation5 + $0x2098] sm:$0xff]
    %v1200 = vld [vmem:[#allocation5 + $0x20a0] sm:$0xff]
    %v1201 = vld [vmem:[#allocation5 + $0x20a8] sm:$0xff]
    %v1202 = vld [vmem:[#allocation5 + $0x20b0] sm:$0xff]
    %v1203 = vld [vmem:[#allocation5 + $0x20b8] sm:$0xff]
    %v1204 = vld [vmem:[#allocation5 + $0x20c0] sm:$0xff]
    %v1205 = vld [vmem:[#allocation5 + $0x20c8] sm:$0xff]
    %v1206 = vld [vmem:[#allocation5 + $0x20d0] sm:$0xff]
    %v1207 = vld [vmem:[#allocation5 + $0x20d8] sm:$0xff]
    %v1208 = vld [vmem:[#allocation5 + $0x20e0] sm:$0xff]
    %v1209 = vld [vmem:[#allocation5 + $0x20e8] sm:$0xff]
    %v1210 = vld [vmem:[#allocation5 + $0x20f0] sm:$0xff]
    %v1211 = vld [vmem:[#allocation5 + $0x20f8] sm:$0xff]
    %v1212 = vld [vmem:[#allocation5 + $0x2100] sm:$0xff]
    %v1213 = vld [vmem:[#allocation5 + $0x2108] sm:$0xff]
    %v1214 = vld [vmem:[#allocation5 + $0x2110] sm:$0xff]
    %v1215 = vld [vmem:[#allocation5 + $0x2118] sm:$0xff]
    %v1216 = vld [vmem:[#allocation5 + $0x2120] sm:$0xff]
    %v1217 = vld [vmem:[#allocation5 + $0x2128] sm:$0xff]
    %v1218 = vld [vmem:[#allocation5 + $0x2130] sm:$0xff]
    %v1219 = vld [vmem:[#allocation5 + $0x2138] sm:$0xff]
    %v1220 = vld [vmem:[#allocation5 + $0x2140] sm:$0xff]
    %v1221 = vld [vmem:[#allocation5 + $0x2148] sm:$0xff]
    %v1222 = vld [vmem:[#allocation5 + $0x2150] sm:$0xff]
    %v1223 = vld [vmem:[#allocation5 + $0x2158] sm:$0xff]
    %v1224 = vld [vmem:[#allocation5 + $0x2160] sm:$0xff]
    %v1225 = vld [vmem:[#allocation5 + $0x2168] sm:$0xff]
    %v1226 = vld [vmem:[#allocation5 + $0x2170] sm:$0xff]
    %v1227 = vld [vmem:[#allocation5 + $0x2178] sm:$0xff]
    %v1228 = vld [vmem:[#allocation5 + $0x2180] sm:$0xff]
    %v1229 = vld [vmem:[#allocation5 + $0x2188] sm:$0xff]
    %v1230 = vld [vmem:[#allocation5 + $0x2190] sm:$0xff]
    %v1231 = vld [vmem:[#allocation5 + $0x2198] sm:$0xff]
    %v1232 = vld [vmem:[#allocation5 + $0x21a0] sm:$0xff]
    %v1233 = vld [vmem:[#allocation5 + $0x21a8] sm:$0xff]
    %v1234 = vld [vmem:[#allocation5 + $0x21b0] sm:$0xff]
    %v1235 = vld [vmem:[#allocation5 + $0x21b8] sm:$0xff]
    %v1236 = vld [vmem:[#allocation5 + $0x21c0] sm:$0xff]
    %v1237 = vld [vmem:[#allocation5 + $0x21c8] sm:$0xff]
    %v1238 = vld [vmem:[#allocation5 + $0x21d0] sm:$0xff]
    %v1239 = vld [vmem:[#allocation5 + $0x21d8] sm:$0xff]
    %v1240 = vld [vmem:[#allocation5 + $0x21e0] sm:$0xff]
    %v1241 = vld [vmem:[#allocation5 + $0x21e8] sm:$0xff]
    %v1242 = vld [vmem:[#allocation5 + $0x21f0] sm:$0xff]
    %v1243 = vld [vmem:[#allocation5 + $0x21f8] sm:$0xff]
    %v1244 = vld [vmem:[#allocation5 + $0x2200] sm:$0xff]
    %v1245 = vld [vmem:[#allocation5 + $0x2208] sm:$0xff]
    %v1246 = vld [vmem:[#allocation5 + $0x2210] sm:$0xff]
    %v1247 = vld [vmem:[#allocation5 + $0x2218] sm:$0xff]
    %v1248 = vld [vmem:[#allocation5 + $0x2220] sm:$0xff]
    %v1249 = vld [vmem:[#allocation5 + $0x2228] sm:$0xff]
    %v1250 = vld [vmem:[#allocation5 + $0x2230] sm:$0xff]
    %v1251 = vld [vmem:[#allocation5 + $0x2238] sm:$0xff]
    %v1252 = vld [vmem:[#allocation5 + $0x2240] sm:$0xff]
    %v1253 = vld [vmem:[#allocation5 + $0x2248] sm:$0xff]
    %v1254 = vld [vmem:[#allocation5 + $0x2250] sm:$0xff]
    %v1255 = vld [vmem:[#allocation5 + $0x2258] sm:$0xff]
    %v1256 = vld [vmem:[#allocation5 + $0x2260] sm:$0xff]
    %v1257 = vld [vmem:[#allocation5 + $0x2268] sm:$0xff]
    %v1258 = vld [vmem:[#allocation5 + $0x2270] sm:$0xff]
    %v1259 = vld [vmem:[#allocation5 + $0x2278] sm:$0xff]
    %v1260 = vld [vmem:[#allocation5 + $0x2280] sm:$0xff]
    %v1261 = vld [vmem:[#allocation5 + $0x2288] sm:$0xff]
    %v1262 = vld [vmem:[#allocation5 + $0x2290] sm:$0xff]
    %v1263 = vld [vmem:[#allocation5 + $0x2298] sm:$0xff]
    %v1264 = vld [vmem:[#allocation5 + $0x22a0] sm:$0xff]
    %v1265 = vld [vmem:[#allocation5 + $0x22a8] sm:$0xff]
    %v1266 = vld [vmem:[#allocation5 + $0x22b0] sm:$0xff]
    %v1267 = vld [vmem:[#allocation5 + $0x22b8] sm:$0xff]
    %v1268 = vld [vmem:[#allocation5 + $0x22c0] sm:$0xff]
    %v1269 = vld [vmem:[#allocation5 + $0x22c8] sm:$0xff]
    %v1270 = vld [vmem:[#allocation5 + $0x22d0] sm:$0xff]
    %v1271 = vld [vmem:[#allocation5 + $0x22d8] sm:$0xff]
    %v1272 = vld [vmem:[#allocation5 + $0x22e0] sm:$0xff]
    %v1273 = vld [vmem:[#allocation5 + $0x22e8] sm:$0xff]
    %v1274 = vld [vmem:[#allocation5 + $0x22f0] sm:$0xff]
    %v1275 = vld [vmem:[#allocation5 + $0x22f8] sm:$0xff]
    %v1276 = vld [vmem:[#allocation5 + $0x2300] sm:$0xff]
    %v1277 = vld [vmem:[#allocation5 + $0x2308] sm:$0xff]
    %v1278 = vld [vmem:[#allocation5 + $0x2310] sm:$0xff]
    %v1279 = vld [vmem:[#allocation5 + $0x2318] sm:$0xff]
    %v1280 = vld [vmem:[#allocation5 + $0x2320] sm:$0xff]
    %v1281 = vld [vmem:[#allocation5 + $0x2328] sm:$0xff]
    %v1282 = vld [vmem:[#allocation5 + $0x2330] sm:$0xff]
    %v1283 = vld [vmem:[#allocation5 + $0x2338] sm:$0xff]
    %v1284 = vld [vmem:[#allocation5 + $0x2340] sm:$0xff]
    %v1285 = vld [vmem:[#allocation5 + $0x2348] sm:$0xff]
    %v1286 = vld [vmem:[#allocation5 + $0x2350] sm:$0xff]
    %v1287 = vld [vmem:[#allocation5 + $0x2358] sm:$0xff]
    %v1288 = vld [vmem:[#allocation5 + $0x2360] sm:$0xff]
    %v1289 = vld [vmem:[#allocation5 + $0x2368] sm:$0xff]
    %v1290 = vld [vmem:[#allocation5 + $0x2370] sm:$0xff]
    %v1291 = vld [vmem:[#allocation5 + $0x2378] sm:$0xff]
    %v1292 = vld [vmem:[#allocation5 + $0x2380] sm:$0xff]
    %v1293 = vld [vmem:[#allocation5 + $0x2388] sm:$0xff]
    %v1294 = vld [vmem:[#allocation5 + $0x2390] sm:$0xff]
    %v1295 = vld [vmem:[#allocation5 + $0x2398] sm:$0xff]
    %v1296 = vld [vmem:[#allocation5 + $0x23a0] sm:$0xff]
    %v1297 = vld [vmem:[#allocation5 + $0x23a8] sm:$0xff]
    %v1298 = vld [vmem:[#allocation5 + $0x23b0] sm:$0xff]
    %v1299 = vld [vmem:[#allocation5 + $0x23b8] sm:$0xff]
    %v1300 = vld [vmem:[#allocation5 + $0x23c0] sm:$0xff]
    %v1301 = vld [vmem:[#allocation5 + $0x23c8] sm:$0xff]
    %v1302 = vld [vmem:[#allocation5 + $0x23d0] sm:$0xff]
    %v1303 = vld [vmem:[#allocation5 + $0x23d8] sm:$0xff]
    %v1304 = vld [vmem:[#allocation5 + $0x23e0] sm:$0xff]
    %v1305 = vld [vmem:[#allocation5 + $0x23e8] sm:$0xff]
    %v1306 = vld [vmem:[#allocation5 + $0x23f0] sm:$0xff]
    %v1307 = vld [vmem:[#allocation5 + $0x23f8] sm:$0xff]
    %v1308 = vld [vmem:[#allocation5 + $0x2400] sm:$0xff]
    %v1309 = vld [vmem:[#allocation5 + $0x2408] sm:$0xff]
    %v1310 = vld [vmem:[#allocation5 + $0x2410] sm:$0xff]
    %v1311 = vld [vmem:[#allocation5 + $0x2418] sm:$0xff]
    %v1312 = vld [vmem:[#allocation5 + $0x2420] sm:$0xff]
    %v1313 = vld [vmem:[#allocation5 + $0x2428] sm:$0xff]
    %v1314 = vld [vmem:[#allocation5 + $0x2430] sm:$0xff]
    %v1315 = vld [vmem:[#allocation5 + $0x2438] sm:$0xff]
    %v1316 = vld [vmem:[#allocation5 + $0x2440] sm:$0xff]
    %v1317 = vld [vmem:[#allocation5 + $0x2448] sm:$0xff]
    %v1318 = vld [vmem:[#allocation5 + $0x2450] sm:$0xff]
    %v1319 = vld [vmem:[#allocation5 + $0x2458] sm:$0xff]
    %v1320 = vld [vmem:[#allocation5 + $0x2460] sm:$0xff]
    %v1321 = vld [vmem:[#allocation5 + $0x2468] sm:$0xff]
    %v1322 = vld [vmem:[#allocation5 + $0x2470] sm:$0xff]
    %v1323 = vld [vmem:[#allocation5 + $0x2478] sm:$0xff]
    %v1324 = vld [vmem:[#allocation5 + $0x2480] sm:$0xff]
    %v1325 = vld [vmem:[#allocation5 + $0x2488] sm:$0xff]
    %v1326 = vld [vmem:[#allocation5 + $0x2490] sm:$0xff]
    %v1327 = vld [vmem:[#allocation5 + $0x2498] sm:$0xff]
    %v1328 = vld [vmem:[#allocation5 + $0x24a0] sm:$0xff]
    %v1329 = vld [vmem:[#allocation5 + $0x24a8] sm:$0xff]
    %v1330 = vld [vmem:[#allocation5 + $0x24b0] sm:$0xff]
    %v1331 = vld [vmem:[#allocation5 + $0x24b8] sm:$0xff]
    %v1332 = vld [vmem:[#allocation5 + $0x24c0] sm:$0xff]
    %v1333 = vld [vmem:[#allocation5 + $0x24c8] sm:$0xff]
    %v1334 = vld [vmem:[#allocation5 + $0x24d0] sm:$0xff]
    %v1335 = vld [vmem:[#allocation5 + $0x24d8] sm:$0xff]
    %v1336 = vld [vmem:[#allocation5 + $0x24e0] sm:$0xff]
    %v1337 = vld [vmem:[#allocation5 + $0x24e8] sm:$0xff]
    %v1338 = vld [vmem:[#allocation5 + $0x24f0] sm:$0xff]
    %v1339 = vld [vmem:[#allocation5 + $0x24f8] sm:$0xff]
    %v1340 = vld [vmem:[#allocation5 + $0x2500] sm:$0xff]
    %v1341 = vld [vmem:[#allocation5 + $0x2508] sm:$0xff]
    %v1342 = vld [vmem:[#allocation5 + $0x2510] sm:$0xff]
    %v1343 = vld [vmem:[#allocation5 + $0x2518] sm:$0xff]
    %v1344 = vld [vmem:[#allocation5 + $0x2520] sm:$0xff]
    %v1345 = vld [vmem:[#allocation5 + $0x2528] sm:$0xff]
    %v1346 = vld [vmem:[#allocation5 + $0x2530] sm:$0xff]
    %v1347 = vld [vmem:[#allocation5 + $0x2538] sm:$0xff]
    %v1348 = vld [vmem:[#allocation5 + $0x2540] sm:$0xff]
    %v1349 = vld [vmem:[#allocation5 + $0x2548] sm:$0xff]
    %v1350 = vld [vmem:[#allocation5 + $0x2550] sm:$0xff]
    %v1351 = vld [vmem:[#allocation5 + $0x2558] sm:$0xff]
    %v1352 = vld [vmem:[#allocation5 + $0x2560] sm:$0xff]
    %v1353 = vld [vmem:[#allocation5 + $0x2568] sm:$0xff]
    %v1354 = vld [vmem:[#allocation5 + $0x2570] sm:$0xff]
    %v1355 = vld [vmem:[#allocation5 + $0x2578] sm:$0xff]
    %v1356 = vld [vmem:[#allocation5 + $0x2580] sm:$0xff]
    %v1357 = vld [vmem:[#allocation5 + $0x2588] sm:$0xff]
    %v1358 = vld [vmem:[#allocation5 + $0x2590] sm:$0xff]
    %v1359 = vld [vmem:[#allocation5 + $0x2598] sm:$0xff]
    %v1360 = vld [vmem:[#allocation5 + $0x25a0] sm:$0xff]
    %v1361 = vld [vmem:[#allocation5 + $0x25a8] sm:$0xff]
    %v1362 = vld [vmem:[#allocation5 + $0x25b0] sm:$0xff]
    %v1363 = vld [vmem:[#allocation5 + $0x25b8] sm:$0xff]
    %v1364 = vld [vmem:[#allocation5 + $0x25c0] sm:$0xff]
    %v1365 = vld [vmem:[#allocation5 + $0x25c8] sm:$0xff]
    %v1366 = vld [vmem:[#allocation5 + $0x25d0] sm:$0xff]
    %v1367 = vld [vmem:[#allocation5 + $0x25d8] sm:$0xff]
    %v1368 = vld [vmem:[#allocation5 + $0x25e0] sm:$0xff]
    %v1369 = vld [vmem:[#allocation5 + $0x25e8] sm:$0xff]
    %v1370 = vld [vmem:[#allocation5 + $0x25f0] sm:$0xff]
    %v1371 = vld [vmem:[#allocation5 + $0x25f8] sm:$0xff]
    %v1372 = vld [vmem:[#allocation5 + $0x2600] sm:$0xff]
    %v1373 = vld [vmem:[#allocation5 + $0x2608] sm:$0xff]
    %v1374 = vld [vmem:[#allocation5 + $0x2610] sm:$0xff]
    %v1375 = vld [vmem:[#allocation5 + $0x2618] sm:$0xff]
    %v1376 = vld [vmem:[#allocation5 + $0x2620] sm:$0xff]
    %v1377 = vld [vmem:[#allocation5 + $0x2628] sm:$0xff]
    %v1378 = vld [vmem:[#allocation5 + $0x2630] sm:$0xff]
    %v1379 = vld [vmem:[#allocation5 + $0x2638] sm:$0xff]
    %v1380 = vld [vmem:[#allocation5 + $0x2640] sm:$0xff]
    %v1381 = vld [vmem:[#allocation5 + $0x2648] sm:$0xff]
    %v1382 = vld [vmem:[#allocation5 + $0x2650] sm:$0xff]
    %v1383 = vld [vmem:[#allocation5 + $0x2658] sm:$0xff]
    %v1384 = vld [vmem:[#allocation5 + $0x2660] sm:$0xff]
    %v1385 = vld [vmem:[#allocation5 + $0x2668] sm:$0xff]
    %v1386 = vld [vmem:[#allocation5 + $0x2670] sm:$0xff]
    %v1387 = vld [vmem:[#allocation5 + $0x2678] sm:$0xff]
    %v1388 = vld [vmem:[#allocation5 + $0x2680] sm:$0xff]
    %v1389 = vld [vmem:[#allocation5 + $0x2688] sm:$0xff]
    %v1390 = vld [vmem:[#allocation5 + $0x2690] sm:$0xff]
    %v1391 = vld [vmem:[#allocation5 + $0x2698] sm:$0xff]
    %v1392 = vld [vmem:[#allocation5 + $0x26a0] sm:$0xff]
    %v1393 = vld [vmem:[#allocation5 + $0x26a8] sm:$0xff]
    %v1394 = vld [vmem:[#allocation5 + $0x26b0] sm:$0xff]
    %v1395 = vld [vmem:[#allocation5 + $0x26b8] sm:$0xff]
    %v1396 = vld [vmem:[#allocation5 + $0x26c0] sm:$0xff]
    %v1397 = vld [vmem:[#allocation5 + $0x26c8] sm:$0xff]
    %v1398 = vld [vmem:[#allocation5 + $0x26d0] sm:$0xff]
    %v1399 = vld [vmem:[#allocation5 + $0x26d8] sm:$0xff]
    %v1400 = vld [vmem:[#allocation5 + $0x26e0] sm:$0xff]
    %v1401 = vld [vmem:[#allocation5 + $0x26e8] sm:$0xff]
    %v1402 = vld [vmem:[#allocation5 + $0x26f0] sm:$0xff]
    %v1403 = vld [vmem:[#allocation5 + $0x26f8] sm:$0xff]
    %v1404 = vld [vmem:[#allocation5 + $0x2700] sm:$0xff]
    %v1405 = vld [vmem:[#allocation5 + $0x2708] sm:$0xff]
    %v1406 = vld [vmem:[#allocation5 + $0x2710] sm:$0xff]
    %v1407 = vld [vmem:[#allocation5 + $0x2718] sm:$0xff]
    %v1408 = vld [vmem:[#allocation5 + $0x2720] sm:$0xff]
    %v1409 = vld [vmem:[#allocation5 + $0x2728] sm:$0xff]
    %v1410 = vld [vmem:[#allocation5 + $0x2730] sm:$0xff]
    %v1411 = vld [vmem:[#allocation5 + $0x2738] sm:$0xff]
    %v1412 = vld [vmem:[#allocation5 + $0x2740] sm:$0xff]
    %v1413 = vld [vmem:[#allocation5 + $0x2748] sm:$0xff]
    %v1414 = vld [vmem:[#allocation5 + $0x2750] sm:$0xff]
    %v1415 = vld [vmem:[#allocation5 + $0x2758] sm:$0xff]
    %v1416 = vld [vmem:[#allocation5 + $0x2760] sm:$0xff]
    %v1417 = vld [vmem:[#allocation5 + $0x2768] sm:$0xff]
    %v1418 = vld [vmem:[#allocation5 + $0x2770] sm:$0xff]
    %v1419 = vld [vmem:[#allocation5 + $0x2778] sm:$0xff]
    %v1420 = vld [vmem:[#allocation5 + $0x2780] sm:$0xff]
    %v1421 = vld [vmem:[#allocation5 + $0x2788] sm:$0xff]
    %v1422 = vld [vmem:[#allocation5 + $0x2790] sm:$0xff]
    %v1423 = vld [vmem:[#allocation5 + $0x2798] sm:$0xff]
    %v1424 = vld [vmem:[#allocation5 + $0x27a0] sm:$0xff]
    %v1425 = vld [vmem:[#allocation5 + $0x27a8] sm:$0xff]
    %v1426 = vld [vmem:[#allocation5 + $0x27b0] sm:$0xff]
    %v1427 = vld [vmem:[#allocation5 + $0x27b8] sm:$0xff]
    %v1428 = vld [vmem:[#allocation5 + $0x27c0] sm:$0xff]
    %v1429 = vld [vmem:[#allocation5 + $0x27c8] sm:$0xff]
    %v1430 = vld [vmem:[#allocation5 + $0x27d0] sm:$0xff]
    %v1431 = vld [vmem:[#allocation5 + $0x27d8] sm:$0xff]
    %v1432 = vld [vmem:[#allocation5 + $0x27e0] sm:$0xff]
    %v1433 = vld [vmem:[#allocation5 + $0x27e8] sm:$0xff]
    %v1434 = vld [vmem:[#allocation5 + $0x27f0] sm:$0xff]
    %v1435 = vld [vmem:[#allocation5 + $0x27f8] sm:$0xff]
    %v1436 = vld [vmem:[#allocation5 + $0x2800] sm:$0xff]
    %v1437 = vld [vmem:[#allocation5 + $0x2808] sm:$0xff]
    %v1438 = vld [vmem:[#allocation5 + $0x2810] sm:$0xff]
    %v1439 = vld [vmem:[#allocation5 + $0x2818] sm:$0xff]
    %v1440 = vld [vmem:[#allocation5 + $0x2820] sm:$0xff]
    %v1441 = vld [vmem:[#allocation5 + $0x2828] sm:$0xff]
    %v1442 = vld [vmem:[#allocation5 + $0x2830] sm:$0xff]
    %v1443 = vld [vmem:[#allocation5 + $0x2838] sm:$0xff]
    %v1444 = vld [vmem:[#allocation5 + $0x2840] sm:$0xff]
    %v1445 = vld [vmem:[#allocation5 + $0x2848] sm:$0xff]
    %v1446 = vld [vmem:[#allocation5 + $0x2850] sm:$0xff]
    %v1447 = vld [vmem:[#allocation5 + $0x2858] sm:$0xff]
    %v1448 = vld [vmem:[#allocation5 + $0x2860] sm:$0xff]
    %v1449 = vld [vmem:[#allocation5 + $0x2868] sm:$0xff]
    %v1450 = vld [vmem:[#allocation5 + $0x2870] sm:$0xff]
    %v1451 = vld [vmem:[#allocation5 + $0x2878] sm:$0xff]
    %v1452 = vld [vmem:[#allocation5 + $0x2880] sm:$0xff]
    %v1453 = vld [vmem:[#allocation5 + $0x2888] sm:$0xff]
    %v1454 = vld [vmem:[#allocation5 + $0x2890] sm:$0xff]
    %v1455 = vld [vmem:[#allocation5 + $0x2898] sm:$0xff]
    %v1456 = vld [vmem:[#allocation5 + $0x28a0] sm:$0xff]
    %v1457 = vld [vmem:[#allocation5 + $0x28a8] sm:$0xff]
    %v1458 = vld [vmem:[#allocation5 + $0x28b0] sm:$0xff]
    %v1459 = vld [vmem:[#allocation5 + $0x28b8] sm:$0xff]
    %v1460 = vld [vmem:[#allocation5 + $0x28c0] sm:$0xff]
    %v1461 = vld [vmem:[#allocation5 + $0x28c8] sm:$0xff]
    %v1462 = vld [vmem:[#allocation5 + $0x28d0] sm:$0xff]
    %v1463 = vld [vmem:[#allocation5 + $0x28d8] sm:$0xff]
    %v1464 = vld [vmem:[#allocation5 + $0x28e0] sm:$0xff]
    %v1465 = vld [vmem:[#allocation5 + $0x28e8] sm:$0xff]
    %v1466 = vld [vmem:[#allocation5 + $0x28f0] sm:$0xff]
    %v1467 = vld [vmem:[#allocation5 + $0x28f8] sm:$0xff]
    %v1468 = vld [vmem:[#allocation5 + $0x2900] sm:$0xff]
    %v1469 = vld [vmem:[#allocation5 + $0x2908] sm:$0xff]
    %v1470 = vld [vmem:[#allocation5 + $0x2910] sm:$0xff]
    %v1471 = vld [vmem:[#allocation5 + $0x2918] sm:$0xff]
    %v1472 = vld [vmem:[#allocation5 + $0x2920] sm:$0xff]
    %v1473 = vld [vmem:[#allocation5 + $0x2928] sm:$0xff]
    %v1474 = vld [vmem:[#allocation5 + $0x2930] sm:$0xff]
    %v1475 = vld [vmem:[#allocation5 + $0x2938] sm:$0xff]
    %v1476 = vld [vmem:[#allocation5 + $0x2940] sm:$0xff]
    %v1477 = vld [vmem:[#allocation5 + $0x2948] sm:$0xff]
    %v1478 = vld [vmem:[#allocation5 + $0x2950] sm:$0xff]
    %v1479 = vld [vmem:[#allocation5 + $0x2958] sm:$0xff]
    %v1480 = vld [vmem:[#allocation5 + $0x2960] sm:$0xff]
    %v1481 = vld [vmem:[#allocation5 + $0x2968] sm:$0xff]
    %v1482 = vld [vmem:[#allocation5 + $0x2970] sm:$0xff]
    %v1483 = vld [vmem:[#allocation5 + $0x2978] sm:$0xff]
    %v1484 = vld [vmem:[#allocation5 + $0x2980] sm:$0xff]
    %v1485 = vld [vmem:[#allocation5 + $0x2988] sm:$0xff]
    %v1486 = vld [vmem:[#allocation5 + $0x2990] sm:$0xff]
    %v1487 = vld [vmem:[#allocation5 + $0x2998] sm:$0xff]
    %v1488 = vld [vmem:[#allocation5 + $0x29a0] sm:$0xff]
    %v1489 = vld [vmem:[#allocation5 + $0x29a8] sm:$0xff]
    %v1490 = vld [vmem:[#allocation5 + $0x29b0] sm:$0xff]
    %v1491 = vld [vmem:[#allocation5 + $0x29b8] sm:$0xff]
    %v1492 = vld [vmem:[#allocation5 + $0x29c0] sm:$0xff]
    %v1493 = vld [vmem:[#allocation5 + $0x29c8] sm:$0xff]
    %v1494 = vld [vmem:[#allocation5 + $0x29d0] sm:$0xff]
    %v1495 = vld [vmem:[#allocation5 + $0x29d8] sm:$0xff]
    %v1496 = vld [vmem:[#allocation5 + $0x29e0] sm:$0xff]
    %v1497 = vld [vmem:[#allocation5 + $0x29e8] sm:$0xff]
    %v1498 = vld [vmem:[#allocation5 + $0x29f0] sm:$0xff]
    %v1499 = vld [vmem:[#allocation5 + $0x29f8] sm:$0xff]
    %v1500 = vld [vmem:[#allocation5 + $0x2a00] sm:$0xff]
    %v1501 = vld [vmem:[#allocation5 + $0x2a08] sm:$0xff]
    %v1502 = vld [vmem:[#allocation5 + $0x2a10] sm:$0xff]
    %v1503 = vld [vmem:[#allocation5 + $0x2a18] sm:$0xff]
    %v1504 = vld [vmem:[#allocation5 + $0x2a20] sm:$0xff]
    %v1505 = vld [vmem:[#allocation5 + $0x2a28] sm:$0xff]
    %v1506 = vld [vmem:[#allocation5 + $0x2a30] sm:$0xff]
    %v1507 = vld [vmem:[#allocation5 + $0x2a38] sm:$0xff]
    %v1508 = vld [vmem:[#allocation5 + $0x2a40] sm:$0xff]
    %v1509 = vld [vmem:[#allocation5 + $0x2a48] sm:$0xff]
    %v1510 = vld [vmem:[#allocation5 + $0x2a50] sm:$0xff]
    %v1511 = vld [vmem:[#allocation5 + $0x2a58] sm:$0xff]
    %v1512 = vld [vmem:[#allocation5 + $0x2a60] sm:$0xff]
    %v1513 = vld [vmem:[#allocation5 + $0x2a68] sm:$0xff]
    %v1514 = vld [vmem:[#allocation5 + $0x2a70] sm:$0xff]
    %v1515 = vld [vmem:[#allocation5 + $0x2a78] sm:$0xff]
    %v1516 = vld [vmem:[#allocation5 + $0x2a80] sm:$0xff]
    %v1517 = vld [vmem:[#allocation5 + $0x2a88] sm:$0xff]
    %v1518 = vld [vmem:[#allocation5 + $0x2a90] sm:$0xff]
    %v1519 = vld [vmem:[#allocation5 + $0x2a98] sm:$0xff]
    %v1520 = vld [vmem:[#allocation5 + $0x2aa0] sm:$0xff]
    %v1521 = vld [vmem:[#allocation5 + $0x2aa8] sm:$0xff]
    %v1522 = vld [vmem:[#allocation5 + $0x2ab0] sm:$0xff]
    %v1523 = vld [vmem:[#allocation5 + $0x2ab8] sm:$0xff]
    %v1524 = vld [vmem:[#allocation5 + $0x2ac0] sm:$0xff]
    %v1525 = vld [vmem:[#allocation5 + $0x2ac8] sm:$0xff]
    %v1526 = vld [vmem:[#allocation5 + $0x2ad0] sm:$0xff]
    %v1527 = vld [vmem:[#allocation5 + $0x2ad8] sm:$0xff]
    %v1528 = vld [vmem:[#allocation5 + $0x2ae0] sm:$0xff]
    %v1529 = vld [vmem:[#allocation5 + $0x2ae8] sm:$0xff]
    %v1530 = vld [vmem:[#allocation5 + $0x2af0] sm:$0xff]
    %v1531 = vld [vmem:[#allocation5 + $0x2af8] sm:$0xff]
    %v1532 = vld [vmem:[#allocation5 + $0x2b00] sm:$0xff]
    %v1533 = vld [vmem:[#allocation5 + $0x2b08] sm:$0xff]
    %v1534 = vld [vmem:[#allocation5 + $0x2b10] sm:$0xff]
    %v1535 = vld [vmem:[#allocation5 + $0x2b18] sm:$0xff]
    %v1536 = vld [vmem:[#allocation5 + $0x2b20] sm:$0xff]
    %v1537 = vld [vmem:[#allocation5 + $0x2b28] sm:$0xff]
    %v1538 = vld [vmem:[#allocation5 + $0x2b30] sm:$0xff]
    %v1539 = vld [vmem:[#allocation5 + $0x2b38] sm:$0xff]
    %v1540 = vld [vmem:[#allocation5 + $0x2b40] sm:$0xff]
    %v1541 = vld [vmem:[#allocation5 + $0x2b48] sm:$0xff]
    %v1542 = vld [vmem:[#allocation5 + $0x2b50] sm:$0xff]
    %v1543 = vld [vmem:[#allocation5 + $0x2b58] sm:$0xff]
    %v1544 = vld [vmem:[#allocation5 + $0x2b60] sm:$0xff]
    %v1545 = vld [vmem:[#allocation5 + $0x2b68] sm:$0xff]
    %v1546 = vld [vmem:[#allocation5 + $0x2b70] sm:$0xff]
    %v1547 = vld [vmem:[#allocation5 + $0x2b78] sm:$0xff]
    %v1548 = vld [vmem:[#allocation5 + $0x2b80] sm:$0xff]
    %v1549 = vld [vmem:[#allocation5 + $0x2b88] sm:$0xff]
    %v1550 = vld [vmem:[#allocation5 + $0x2b90] sm:$0xff]
    %v1551 = vld [vmem:[#allocation5 + $0x2b98] sm:$0xff]
    %v1552 = vld [vmem:[#allocation5 + $0x2ba0] sm:$0xff]
    %v1553 = vld [vmem:[#allocation5 + $0x2ba8] sm:$0xff]
    %v1554 = vld [vmem:[#allocation5 + $0x2bb0] sm:$0xff]
    %v1555 = vld [vmem:[#allocation5 + $0x2bb8] sm:$0xff]
    %v1556 = vld [vmem:[#allocation5 + $0x2bc0] sm:$0xff]
    %v1557 = vld [vmem:[#allocation5 + $0x2bc8] sm:$0xff]
    %v1558 = vld [vmem:[#allocation5 + $0x2bd0] sm:$0xff]
    %v1559 = vld [vmem:[#allocation5 + $0x2bd8] sm:$0xff]
    %v1560 = vld [vmem:[#allocation5 + $0x2be0] sm:$0xff]
    %v1561 = vld [vmem:[#allocation5 + $0x2be8] sm:$0xff]
    %v1562 = vld [vmem:[#allocation5 + $0x2bf0] sm:$0xff]
    %v1563 = vld [vmem:[#allocation5 + $0x2bf8] sm:$0xff]
    %v1564 = vld [vmem:[#allocation7] sm:$0xff]
    %v1566 = vlaneseq
    %v1567 = vshrl.u32 %v1566, 7
    %v1568 = vsub.s32 0, %v1567
    %v1569 = vrot.slane %v1564, %v1568
    %v1570 = vlaneseq
    %v1571 = vshrl.u32 %v1570, 7
    %v1572 = vsub.s32 1, %v1571
    %v1573 = vrot.slane %v1564, %v1572
    %v1574 = vlaneseq
    %v1575 = vshrl.u32 %v1574, 7
    %v1576 = vsub.s32 2, %v1575
    %v1577 = vrot.slane %v1564, %v1576
    %v1578 = vlaneseq
    %v1579 = vshrl.u32 %v1578, 7
    %v1580 = vsub.s32 3, %v1579
    %v1581 = vrot.slane %v1564, %v1580
    %v1582 = vlaneseq
    %v1583 = vshrl.u32 %v1582, 7
    %v1584 = vsub.s32 4, %v1583
    %v1585 = vrot.slane %v1564, %v1584
    %v1586 = vlaneseq
    %v1587 = vshrl.u32 %v1586, 7
    %v1588 = vsub.s32 5, %v1587
    %v1589 = vrot.slane %v1564, %v1588
    %v1590 = vlaneseq
    %v1591 = vshrl.u32 %v1590, 7
    %v1592 = vsub.s32 6, %v1591
    %v1593 = vrot.slane %v1564, %v1592
    %v1594 = vlaneseq
    %v1595 = vshrl.u32 %v1594, 7
    %v1596 = vsub.s32 7, %v1595
    %v1597 = vrot.slane %v1564, %v1596
    %1606 = vmatprep.subr.mxu0 %v277
    %1607 = vmatpush1.msra.mxu0 %v276
    %1608 = vmatprep.subr.mxu0 %v269
    %1609 = vmatpush1.msra.mxu0 %v268
    %1610 = vmatprep.subr.mxu0 %v261
    %1611 = vmatpush1.msra.mxu0 %v260
    %1612 = vmatprep.subr.mxu0 %v253
    %1613 = vmatpush1.msra.mxu0 %v252
    %1614 = vmatprep.subr.mxu0 %v245
    %1615 = vmatpush1.msra.mxu0 %v244
    %1616 = vmatprep.subr.mxu0 %v237
    %1617 = vmatpush1.msra.mxu0 %v236
    %1618 = vmatprep.subr.mxu0 %v229
    %1619 = vmatpush1.msra.mxu0 %v228
    %1620 = vmatprep.subr.mxu0 %v221
    %1621 = vmatpush1.msra.mxu0 %v220
    %1622 = vmatprep.subr.mxu0 %v213
    %1623 = vmatpush1.msra.mxu0 %v212
    %1624 = vmatprep.subr.mxu0 %v205
    %1625 = vmatpush1.msra.mxu0 %v204
    %1626 = vmatprep.subr.mxu0 %v197
    %1627 = vmatpush1.msra.mxu0 %v196
    %1628 = vmatprep.subr.mxu0 %v189
    %1629 = vmatpush1.msra.mxu0 %v188
    %1630 = vmatprep.subr.mxu0 %v181
    %1631 = vmatpush1.msra.mxu0 %v180
    %1632 = vmatprep.subr.mxu0 %v173
    %1633 = vmatpush1.msra.mxu0 %v172
    %1634 = vmatprep.subr.mxu0 %v165
    %1635 = vmatpush1.msra.mxu0 %v164
    %1636 = vmatprep.subr.mxu0 %v157
    %1637 = vmatpush1.msra.mxu0 %v156
    %1638 = vmatprep.subr.mxu0 %v405
    %1639 = vmatpush2.msra.mxu0 %v404
    %1640 = vmatprep.subr.mxu0 %v397
    %1641 = vmatpush2.msra.mxu0 %v396
    %1642 = vmatprep.subr.mxu0 %v389
    %1643 = vmatpush2.msra.mxu0 %v388
    %1644 = vmatprep.subr.mxu0 %v381
    %1645 = vmatpush2.msra.mxu0 %v380
    %1646 = vmatprep.subr.mxu0 %v373
    %1647 = vmatpush2.msra.mxu0 %v372
    %1648 = vmatprep.subr.mxu0 %v365
    %1649 = vmatpush2.msra.mxu0 %v364
    %1650 = vmatprep.subr.mxu0 %v357
    %1651 = vmatpush2.msra.mxu0 %v356
    %1652 = vmatprep.subr.mxu0 %v349
    %1653 = vmatpush2.msra.mxu0 %v348
    %1654 = vmatprep.subr.mxu0 %v341
    %1655 = vmatpush2.msra.mxu0 %v340
    %1656 = vmatprep.subr.mxu0 %v333
    %1657 = vmatpush2.msra.mxu0 %v332
    %1658 = vmatprep.subr.mxu0 %v325
    %1659 = vmatpush2.msra.mxu0 %v324
    %1660 = vmatprep.subr.mxu0 %v317
    %1661 = vmatpush2.msra.mxu0 %v316
    %1662 = vmatprep.subr.mxu0 %v309
    %1663 = vmatpush2.msra.mxu0 %v308
    %1664 = vmatprep.subr.mxu0 %v301
    %1665 = vmatpush2.msra.mxu0 %v300
    %1666 = vmatprep.subr.mxu0 %v293
    %1667 = vmatpush2.msra.mxu0 %v292
    %1668 = vmatprep.subr.mxu0 %v285
    %1669 = vmatpush2.msra.mxu0 %v284
    %1670 = vmatprep.mubr.f32.mxu0 %v146
    %1671 = vmatmul.mubr.f32.gmra.mxu0 %v145
    %v1672 = vpop.f32.mrf.mxu0
    %v1673 = vadd.f32 %v1569, %v1672
    %v1674 = vpop.f32.mrf.mxu0
    %v1675 = vadd.f32 %v1573, %v1674
    %1676 = vdwg.mxu0
    %1677 = vmatprep.subr.mxu0 %v533
    %1678 = vmatpush1.msra.mxu0 %v532
    %1679 = vmatprep.subr.mxu0 %v525
    %1680 = vmatpush1.msra.mxu0 %v524
    %1681 = vmatprep.subr.mxu0 %v517
    %1682 = vmatpush1.msra.mxu0 %v516
    %1683 = vmatprep.subr.mxu0 %v509
    %1684 = vmatpush1.msra.mxu0 %v508
    %1685 = vmatprep.subr.mxu0 %v501
    %1686 = vmatpush1.msra.mxu0 %v500
    %1687 = vmatprep.subr.mxu0 %v493
    %1688 = vmatpush1.msra.mxu0 %v492
    %1689 = vmatprep.subr.mxu0 %v485
    %1690 = vmatpush1.msra.mxu0 %v484
    %1691 = vmatprep.subr.mxu0 %v477
    %1692 = vmatpush1.msra.mxu0 %v476
    %1693 = vmatprep.subr.mxu0 %v469
    %1694 = vmatpush1.msra.mxu0 %v468
    %1695 = vmatprep.subr.mxu0 %v461
    %1696 = vmatpush1.msra.mxu0 %v460
    %1697 = vmatprep.subr.mxu0 %v453
    %1698 = vmatpush1.msra.mxu0 %v452
    %1699 = vmatprep.subr.mxu0 %v445
    %1700 = vmatpush1.msra.mxu0 %v444
    %1701 = vmatprep.subr.mxu0 %v437
    %1702 = vmatpush1.msra.mxu0 %v436
    %1703 = vmatprep.subr.mxu0 %v429
    %1704 = vmatpush1.msra.mxu0 %v428
    %1705 = vmatprep.subr.mxu0 %v421
    %1706 = vmatpush1.msra.mxu0 %v420
    %1707 = vmatprep.subr.mxu0 %v413
    %1708 = vmatpush1.msra.mxu0 %v412
    %1709 = vmatprep.subr.mxu0 %v661
    %1710 = vmatpush2.msra.mxu0 %v660
    %1711 = vmatprep.subr.mxu0 %v653
    %1712 = vmatpush2.msra.mxu0 %v652
    %1713 = vmatprep.subr.mxu0 %v645
    %1714 = vmatpush2.msra.mxu0 %v644
    %1715 = vmatprep.subr.mxu0 %v637
    %1716 = vmatpush2.msra.mxu0 %v636
    %1717 = vmatprep.subr.mxu0 %v629
    %1718 = vmatpush2.msra.mxu0 %v628
    %1719 = vmatprep.subr.mxu0 %v621
    %1720 = vmatpush2.msra.mxu0 %v620
    %1721 = vmatprep.subr.mxu0 %v613
    %1722 = vmatpush2.msra.mxu0 %v612
    %1723 = vmatprep.subr.mxu0 %v605
    %1724 = vmatpush2.msra.mxu0 %v604
    %1725 = vmatprep.subr.mxu0 %v597
    %1726 = vmatpush2.msra.mxu0 %v596
    %1727 = vmatprep.subr.mxu0 %v589
    %1728 = vmatpush2.msra.mxu0 %v588
    %1729 = vmatprep.subr.mxu0 %v581
    %1730 = vmatpush2.msra.mxu0 %v580
    %1731 = vmatprep.subr.mxu0 %v573
    %1732 = vmatpush2.msra.mxu0 %v572
    %1733 = vmatprep.subr.mxu0 %v565
    %1734 = vmatpush2.msra.mxu0 %v564
    %1735 = vmatprep.subr.mxu0 %v557
    %1736 = vmatpush2.msra.mxu0 %v556
    %1737 = vmatprep.subr.mxu0 %v549
    %1738 = vmatpush2.msra.mxu0 %v548
    %1739 = vmatprep.subr.mxu0 %v541
    %1740 = vmatpush2.msra.mxu0 %v540
    %1741 = vmatprep.mubr.f32.mxu0 %v148
    %1742 = vmatmul.mubr.f32.gmra.mxu0 %v147
    %v1743 = vpop.f32.mrf.mxu0
    %v1744 = vadd.f32 %v1673, %v1743
    %v1745 = vpop.f32.mrf.mxu0
    %v1746 = vadd.f32 %v1675, %v1745
    %1747 = vdwg.mxu0
    %1748 = vmatprep.subr.mxu0 %v789
    %1749 = vmatpush1.msra.mxu0 %v788
    %1750 = vmatprep.subr.mxu0 %v781
    %1751 = vmatpush1.msra.mxu0 %v780
    %1752 = vmatprep.subr.mxu0 %v773
    %1753 = vmatpush1.msra.mxu0 %v772
    %1754 = vmatprep.subr.mxu0 %v765
    %1755 = vmatpush1.msra.mxu0 %v764
    %1756 = vmatprep.subr.mxu0 %v757
    %1757 = vmatpush1.msra.mxu0 %v756
    %1758 = vmatprep.subr.mxu0 %v749
    %1759 = vmatpush1.msra.mxu0 %v748
    %1760 = vmatprep.subr.mxu0 %v741
    %1761 = vmatpush1.msra.mxu0 %v740
    %1762 = vmatprep.subr.mxu0 %v733
    %1763 = vmatpush1.msra.mxu0 %v732
    %1764 = vmatprep.subr.mxu0 %v725
    %1765 = vmatpush1.msra.mxu0 %v724
    %1766 = vmatprep.subr.mxu0 %v717
    %1767 = vmatpush1.msra.mxu0 %v716
    %1768 = vmatprep.subr.mxu0 %v709
    %1769 = vmatpush1.msra.mxu0 %v708
    %1770 = vmatprep.subr.mxu0 %v701
    %1771 = vmatpush1.msra.mxu0 %v700
    %1772 = vmatprep.subr.mxu0 %v693
    %1773 = vmatpush1.msra.mxu0 %v692
    %1774 = vmatprep.subr.mxu0 %v685
    %1775 = vmatpush1.msra.mxu0 %v684
    %1776 = vmatprep.subr.mxu0 %v677
    %1777 = vmatpush1.msra.mxu0 %v676
    %1778 = vmatprep.subr.mxu0 %v669
    %1779 = vmatpush1.msra.mxu0 %v668
    %1780 = vmatprep.subr.mxu0 %v917
    %1781 = vmatpush2.msra.mxu0 %v916
    %1782 = vmatprep.subr.mxu0 %v909
    %1783 = vmatpush2.msra.mxu0 %v908
    %1784 = vmatprep.subr.mxu0 %v901
    %1785 = vmatpush2.msra.mxu0 %v900
    %1786 = vmatprep.subr.mxu0 %v893
    %1787 = vmatpush2.msra.mxu0 %v892
    %1788 = vmatprep.subr.mxu0 %v885
    %1789 = vmatpush2.msra.mxu0 %v884
    %1790 = vmatprep.subr.mxu0 %v877
    %1791 = vmatpush2.msra.mxu0 %v876
    %1792 = vmatprep.subr.mxu0 %v869
    %1793 = vmatpush2.msra.mxu0 %v868
    %1794 = vmatprep.subr.mxu0 %v861
    %1795 = vmatpush2.msra.mxu0 %v860
    %1796 = vmatprep.subr.mxu0 %v853
    %1797 = vmatpush2.msra.mxu0 %v852
    %1798 = vmatprep.subr.mxu0 %v845
    %1799 = vmatpush2.msra.mxu0 %v844
    %1800 = vmatprep.subr.mxu0 %v837
    %1801 = vmatpush2.msra.mxu0 %v836
    %1802 = vmatprep.subr.mxu0 %v829
    %1803 = vmatpush2.msra.mxu0 %v828
    %1804 = vmatprep.subr.mxu0 %v821
    %1805 = vmatpush2.msra.mxu0 %v820
    %1806 = vmatprep.subr.mxu0 %v813
    %1807 = vmatpush2.msra.mxu0 %v812
    %1808 = vmatprep.subr.mxu0 %v805
    %1809 = vmatpush2.msra.mxu0 %v804
    %1810 = vmatprep.subr.mxu0 %v797
    %1811 = vmatpush2.msra.mxu0 %v796
    %1812 = vmatprep.mubr.f32.mxu0 %v150
    %1813 = vmatmul.mubr.f32.gmra.mxu0 %v149
    %v1814 = vpop.f32.mrf.mxu0
    %v1815 = vadd.f32 %v1744, %v1814
    %v1816 = vpop.f32.mrf.mxu0
    %v1817 = vadd.f32 %v1746, %v1816
    %1818 = vdwg.mxu0
    %1819 = vmatprep.subr.mxu0 %v1045
    %1820 = vmatpush1.msra.mxu0 %v1044
    %1821 = vmatprep.subr.mxu0 %v1037
    %1822 = vmatpush1.msra.mxu0 %v1036
    %1823 = vmatprep.subr.mxu0 %v1029
    %1824 = vmatpush1.msra.mxu0 %v1028
    %1825 = vmatprep.subr.mxu0 %v1021
    %1826 = vmatpush1.msra.mxu0 %v1020
    %1827 = vmatprep.subr.mxu0 %v1013
    %1828 = vmatpush1.msra.mxu0 %v1012
    %1829 = vmatprep.subr.mxu0 %v1005
    %1830 = vmatpush1.msra.mxu0 %v1004
    %1831 = vmatprep.subr.mxu0 %v997
    %1832 = vmatpush1.msra.mxu0 %v996
    %1833 = vmatprep.subr.mxu0 %v989
    %1834 = vmatpush1.msra.mxu0 %v988
    %1835 = vmatprep.subr.mxu0 %v981
    %1836 = vmatpush1.msra.mxu0 %v980
    %1837 = vmatprep.subr.mxu0 %v973
    %1838 = vmatpush1.msra.mxu0 %v972
    %1839 = vmatprep.subr.mxu0 %v965
    %1840 = vmatpush1.msra.mxu0 %v964
    %1841 = vmatprep.subr.mxu0 %v957
    %1842 = vmatpush1.msra.mxu0 %v956
    %1843 = vmatprep.subr.mxu0 %v949
    %1844 = vmatpush1.msra.mxu0 %v948
    %1845 = vmatprep.subr.mxu0 %v941
    %1846 = vmatpush1.msra.mxu0 %v940
    %1847 = vmatprep.subr.mxu0 %v933
    %1848 = vmatpush1.msra.mxu0 %v932
    %1849 = vmatprep.subr.mxu0 %v925
    %1850 = vmatpush1.msra.mxu0 %v924
    %1851 = vmatprep.subr.mxu0 %v1173
    %1852 = vmatpush2.msra.mxu0 %v1172
    %1853 = vmatprep.subr.mxu0 %v1165
    %1854 = vmatpush2.msra.mxu0 %v1164
    %1855 = vmatprep.subr.mxu0 %v1157
    %1856 = vmatpush2.msra.mxu0 %v1156
    %1857 = vmatprep.subr.mxu0 %v1149
    %1858 = vmatpush2.msra.mxu0 %v1148
    %1859 = vmatprep.subr.mxu0 %v1141
    %1860 = vmatpush2.msra.mxu0 %v1140
    %1861 = vmatprep.subr.mxu0 %v1133
    %1862 = vmatpush2.msra.mxu0 %v1132
    %1863 = vmatprep.subr.mxu0 %v1125
    %1864 = vmatpush2.msra.mxu0 %v1124
    %1865 = vmatprep.subr.mxu0 %v1117
    %1866 = vmatpush2.msra.mxu0 %v1116
    %1867 = vmatprep.subr.mxu0 %v1109
    %1868 = vmatpush2.msra.mxu0 %v1108
    %1869 = vmatprep.subr.mxu0 %v1101
    %1870 = vmatpush2.msra.mxu0 %v1100
    %1871 = vmatprep.subr.mxu0 %v1093
    %1872 = vmatpush2.msra.mxu0 %v1092
    %1873 = vmatprep.subr.mxu0 %v1085
    %1874 = vmatpush2.msra.mxu0 %v1084
    %1875 = vmatprep.subr.mxu0 %v1077
    %1876 = vmatpush2.msra.mxu0 %v1076
    %1877 = vmatprep.subr.mxu0 %v1069
    %1878 = vmatpush2.msra.mxu0 %v1068
    %1879 = vmatprep.subr.mxu0 %v1061
    %1880 = vmatpush2.msra.mxu0 %v1060
    %1881 = vmatprep.subr.mxu0 %v1053
    %1882 = vmatpush2.msra.mxu0 %v1052
    %1883 = vmatprep.mubr.f32.mxu0 %v152
    %1884 = vmatmul.mubr.f32.gmra.mxu0 %v151
    %v1885 = vpop.f32.mrf.mxu0
    %v1886 = vadd.f32 %v1815, %v1885
    %v1887 = vpop.f32.mrf.mxu0
    %v1888 = vadd.f32 %v1817, %v1887
    %1889 = vdwg.mxu0
    %1890 = vmatprep.subr.mxu0 %v1301
    %1891 = vmatpush1.msra.mxu0 %v1300
    %1892 = vmatprep.subr.mxu0 %v1293
    %1893 = vmatpush1.msra.mxu0 %v1292
    %1894 = vmatprep.subr.mxu0 %v1285
    %1895 = vmatpush1.msra.mxu0 %v1284
    %1896 = vmatprep.subr.mxu0 %v1277
    %1897 = vmatpush1.msra.mxu0 %v1276
    %1898 = vmatprep.subr.mxu0 %v1269
    %1899 = vmatpush1.msra.mxu0 %v1268
    %1900 = vmatprep.subr.mxu0 %v1261
    %1901 = vmatpush1.msra.mxu0 %v1260
    %1902 = vmatprep.subr.mxu0 %v1253
    %1903 = vmatpush1.msra.mxu0 %v1252
    %1904 = vmatprep.subr.mxu0 %v1245
    %1905 = vmatpush1.msra.mxu0 %v1244
    %1906 = vmatprep.subr.mxu0 %v1237
    %1907 = vmatpush1.msra.mxu0 %v1236
    %1908 = vmatprep.subr.mxu0 %v1229
    %1909 = vmatpush1.msra.mxu0 %v1228
    %1910 = vmatprep.subr.mxu0 %v1221
    %1911 = vmatpush1.msra.mxu0 %v1220
    %1912 = vmatprep.subr.mxu0 %v1213
    %1913 = vmatpush1.msra.mxu0 %v1212
    %1914 = vmatprep.subr.mxu0 %v1205
    %1915 = vmatpush1.msra.mxu0 %v1204
    %1916 = vmatprep.subr.mxu0 %v1197
    %1917 = vmatpush1.msra.mxu0 %v1196
    %1918 = vmatprep.subr.mxu0 %v1189
    %1919 = vmatpush1.msra.mxu0 %v1188
    %1920 = vmatprep.subr.mxu0 %v1181
    %1921 = vmatpush1.msra.mxu0 %v1180
    %1922 = vmatprep.subr.mxu0 %v1429
    %1923 = vmatpush2.msra.mxu0 %v1428
    %1924 = vmatprep.subr.mxu0 %v1421
    %1925 = vmatpush2.msra.mxu0 %v1420
    %1926 = vmatprep.subr.mxu0 %v1413
    %1927 = vmatpush2.msra.mxu0 %v1412
    %1928 = vmatprep.subr.mxu0 %v1405
    %1929 = vmatpush2.msra.mxu0 %v1404
    %1930 = vmatprep.subr.mxu0 %v1397
    %1931 = vmatpush2.msra.mxu0 %v1396
    %1932 = vmatprep.subr.mxu0 %v1389
    %1933 = vmatpush2.msra.mxu0 %v1388
    %1934 = vmatprep.subr.mxu0 %v1381
    %1935 = vmatpush2.msra.mxu0 %v1380
    %1936 = vmatprep.subr.mxu0 %v1373
    %1937 = vmatpush2.msra.mxu0 %v1372
    %1938 = vmatprep.subr.mxu0 %v1365
    %1939 = vmatpush2.msra.mxu0 %v1364
    %1940 = vmatprep.subr.mxu0 %v1357
    %1941 = vmatpush2.msra.mxu0 %v1356
    %1942 = vmatprep.subr.mxu0 %v1349
    %1943 = vmatpush2.msra.mxu0 %v1348
    %1944 = vmatprep.subr.mxu0 %v1341
    %1945 = vmatpush2.msra.mxu0 %v1340
    %1946 = vmatprep.subr.mxu0 %v1333
    %1947 = vmatpush2.msra.mxu0 %v1332
    %1948 = vmatprep.subr.mxu0 %v1325
    %1949 = vmatpush2.msra.mxu0 %v1324
    %1950 = vmatprep.subr.mxu0 %v1317
    %1951 = vmatpush2.msra.mxu0 %v1316
    %1952 = vmatprep.subr.mxu0 %v1309
    %1953 = vmatpush2.msra.mxu0 %v1308
    %1954 = vmatprep.mubr.f32.mxu0 %v154
    %1955 = vmatmul.mubr.f32.gmra.mxu0 %v153
    %v1956 = vpop.f32.mrf.mxu0
    %v1957 = vadd.f32 %v1886, %v1956
    %v1958 = vpop.f32.mrf.mxu0
    %v1959 = vadd.f32 %v1888, %v1958
    %1960 = vdwg.mxu0
    %1961 = vmatprep.subr.mxu0 %v1557
    %1962 = vmatpush1.msra.mxu0 %v1556
    %1963 = vmatprep.subr.mxu0 %v1549
    %1964 = vmatpush1.msra.mxu0 %v1548
    %1965 = vmatprep.subr.mxu0 %v1541
    %1966 = vmatpush1.msra.mxu0 %v1540
    %1967 = vmatprep.subr.mxu0 %v1533
    %1968 = vmatpush1.msra.mxu0 %v1532
    %1969 = vmatprep.subr.mxu0 %v1525
    %1970 = vmatpush1.msra.mxu0 %v1524
    %1971 = vmatprep.subr.mxu0 %v1517
    %1972 = vmatpush1.msra.mxu0 %v1516
    %1973 = vmatprep.subr.mxu0 %v1509
    %1974 = vmatpush1.msra.mxu0 %v1508
    %1975 = vmatprep.subr.mxu0 %v1501
    %1976 = vmatpush1.msra.mxu0 %v1500
    %1977 = vmatprep.subr.mxu0 %v1493
    %1978 = vmatpush1.msra.mxu0 %v1492
    %1979 = vmatprep.subr.mxu0 %v1485
    %1980 = vmatpush1.msra.mxu0 %v1484
    %1981 = vmatprep.subr.mxu0 %v1477
    %1982 = vmatpush1.msra.mxu0 %v1476
    %1983 = vmatprep.subr.mxu0 %v1469
    %1984 = vmatpush1.msra.mxu0 %v1468
    %1985 = vmatprep.subr.mxu0 %v1461
    %1986 = vmatpush1.msra.mxu0 %v1460
    %1987 = vmatprep.subr.mxu0 %v1453
    %1988 = vmatpush1.msra.mxu0 %v1452
    %1989 = vmatprep.subr.mxu0 %v1445
    %1990 = vmatpush1.msra.mxu0 %v1444
    %1991 = vmatprep.subr.mxu0 %v1437
    %1992 = vmatpush1.msra.mxu0 %v1436
    %1993 = vmatprep.subr.mxu0 0.0
    %1994 = vmatpush2.msra.mxu0 0.0
    %1995 = vmatprep.subr.mxu0 0.0
    %1996 = vmatpush2.msra.mxu0 0.0
    %1997 = vmatprep.subr.mxu0 0.0
    %1998 = vmatpush2.msra.mxu0 0.0
    %1999 = vmatprep.subr.mxu0 0.0
    %2000 = vmatpush2.msra.mxu0 0.0
    %2001 = vmatprep.subr.mxu0 0.0
    %2002 = vmatpush2.msra.mxu0 0.0
    %2003 = vmatprep.subr.mxu0 0.0
    %2004 = vmatpush2.msra.mxu0 0.0
    %2005 = vmatprep.subr.mxu0 0.0
    %2006 = vmatpush2.msra.mxu0 0.0
    %2007 = vmatprep.subr.mxu0 0.0
    %2008 = vmatpush2.msra.mxu0 0.0
    %2009 = vmatprep.subr.mxu0 0.0
    %2010 = vmatpush2.msra.mxu0 0.0
    %2011 = vmatprep.subr.mxu0 0.0
    %2012 = vmatpush2.msra.mxu0 0.0
    %2013 = vmatprep.subr.mxu0 0.0
    %2014 = vmatpush2.msra.mxu0 0.0
    %2015 = vmatprep.subr.mxu0 0.0
    %2016 = vmatpush2.msra.mxu0 0.0
    %2017 = vmatprep.subr.mxu0 0.0
    %2018 = vmatpush2.msra.mxu0 0.0
    %2019 = vmatprep.subr.mxu0 0.0
    %2020 = vmatpush2.msra.mxu0 0.0
    %2021 = vmatprep.subr.mxu0 0.0
    %2022 = vmatpush2.msra.mxu0 0.0
    %2023 = vmatprep.subr.mxu0 0.0
    %2024 = vmatpush2.msra.mxu0 0.0
    %2025 = vmatprep.mubr.f32.mxu0 0.0
    %2026 = vmatmul.mubr.f32.gmra.mxu0 %v155
    %v2027 = vpop.f32.mrf.mxu0
    %v2028 = vadd.f32 %v1957, %v2027
    %v2029 = vpop.f32.mrf.mxu0
    %v2030 = vadd.f32 %v1959, %v2029
    %2031 = vdwg.mxu0
    %2032 = vmatprep.subr.mxu0 %v279
    %2033 = vmatpush1.msra.mxu0 %v278
    %2034 = vmatprep.subr.mxu0 %v271
    %2035 = vmatpush1.msra.mxu0 %v270
    %2036 = vmatprep.subr.mxu0 %v263
    %2037 = vmatpush1.msra.mxu0 %v262
    %2038 = vmatprep.subr.mxu0 %v255
    %2039 = vmatpush1.msra.mxu0 %v254
    %2040 = vmatprep.subr.mxu0 %v247
    %2041 = vmatpush1.msra.mxu0 %v246
    %2042 = vmatprep.subr.mxu0 %v239
    %2043 = vmatpush1.msra.mxu0 %v238
    %2044 = vmatprep.subr.mxu0 %v231
    %2045 = vmatpush1.msra.mxu0 %v230
    %2046 = vmatprep.subr.mxu0 %v223
    %2047 = vmatpush1.msra.mxu0 %v222
    %2048 = vmatprep.subr.mxu0 %v215
    %2049 = vmatpush1.msra.mxu0 %v214
    %2050 = vmatprep.subr.mxu0 %v207
    %2051 = vmatpush1.msra.mxu0 %v206
    %2052 = vmatprep.subr.mxu0 %v199
    %2053 = vmatpush1.msra.mxu0 %v198
    %2054 = vmatprep.subr.mxu0 %v191
    %2055 = vmatpush1.msra.mxu0 %v190
    %2056 = vmatprep.subr.mxu0 %v183
    %2057 = vmatpush1.msra.mxu0 %v182
    %2058 = vmatprep.subr.mxu0 %v175
    %2059 = vmatpush1.msra.mxu0 %v174
    %2060 = vmatprep.subr.mxu0 %v167
    %2061 = vmatpush1.msra.mxu0 %v166
    %2062 = vmatprep.subr.mxu0 %v159
    %2063 = vmatpush1.msra.mxu0 %v158
    %2064 = vmatprep.subr.mxu0 %v407
    %2065 = vmatpush2.msra.mxu0 %v406
    %2066 = vmatprep.subr.mxu0 %v399
    %2067 = vmatpush2.msra.mxu0 %v398
    %2068 = vmatprep.subr.mxu0 %v391
    %2069 = vmatpush2.msra.mxu0 %v390
    %2070 = vmatprep.subr.mxu0 %v383
    %2071 = vmatpush2.msra.mxu0 %v382
    %2072 = vmatprep.subr.mxu0 %v375
    %2073 = vmatpush2.msra.mxu0 %v374
    %2074 = vmatprep.subr.mxu0 %v367
    %2075 = vmatpush2.msra.mxu0 %v366
    %2076 = vmatprep.subr.mxu0 %v359
    %2077 = vmatpush2.msra.mxu0 %v358
    %2078 = vmatprep.subr.mxu0 %v351
    %2079 = vmatpush2.msra.mxu0 %v350
    %2080 = vmatprep.subr.mxu0 %v343
    %2081 = vmatpush2.msra.mxu0 %v342
    %2082 = vmatprep.subr.mxu0 %v335
    %2083 = vmatpush2.msra.mxu0 %v334
    %2084 = vmatprep.subr.mxu0 %v327
    %2085 = vmatpush2.msra.mxu0 %v326
    %2086 = vmatprep.subr.mxu0 %v319
    %2087 = vmatpush2.msra.mxu0 %v318
    %2088 = vmatprep.subr.mxu0 %v311
    %2089 = vmatpush2.msra.mxu0 %v310
    %2090 = vmatprep.subr.mxu0 %v303
    %2091 = vmatpush2.msra.mxu0 %v302
    %2092 = vmatprep.subr.mxu0 %v295
    %2093 = vmatpush2.msra.mxu0 %v294
    %2094 = vmatprep.subr.mxu0 %v287
    %2095 = vmatpush2.msra.mxu0 %v286
    %2096 = vmatprep.mubr.f32.mxu0 %v146
    %2097 = vmatmul.mubr.f32.gmra.mxu0 %v145
    %v2098 = vpop.f32.mrf.mxu0
    %v2099 = vadd.f32 %v1577, %v2098
    %v2100 = vpop.f32.mrf.mxu0
    %v2101 = vadd.f32 %v1581, %v2100
    %2102 = vdwg.mxu0
    %2103 = vmatprep.subr.mxu0 %v535
    %2104 = vmatpush1.msra.mxu0 %v534
    %2105 = vmatprep.subr.mxu0 %v527
    %2106 = vmatpush1.msra.mxu0 %v526
    %2107 = vmatprep.subr.mxu0 %v519
    %2108 = vmatpush1.msra.mxu0 %v518
    %2109 = vmatprep.subr.mxu0 %v511
    %2110 = vmatpush1.msra.mxu0 %v510
    %2111 = vmatprep.subr.mxu0 %v503
    %2112 = vmatpush1.msra.mxu0 %v502
    %2113 = vmatprep.subr.mxu0 %v495
    %2114 = vmatpush1.msra.mxu0 %v494
    %2115 = vmatprep.subr.mxu0 %v487
    %2116 = vmatpush1.msra.mxu0 %v486
    %2117 = vmatprep.subr.mxu0 %v479
    %2118 = vmatpush1.msra.mxu0 %v478
    %2119 = vmatprep.subr.mxu0 %v471
    %2120 = vmatpush1.msra.mxu0 %v470
    %2121 = vmatprep.subr.mxu0 %v463
    %2122 = vmatpush1.msra.mxu0 %v462
    %2123 = vmatprep.subr.mxu0 %v455
    %2124 = vmatpush1.msra.mxu0 %v454
    %2125 = vmatprep.subr.mxu0 %v447
    %2126 = vmatpush1.msra.mxu0 %v446
    %2127 = vmatprep.subr.mxu0 %v439
    %2128 = vmatpush1.msra.mxu0 %v438
    %2129 = vmatprep.subr.mxu0 %v431
    %2130 = vmatpush1.msra.mxu0 %v430
    %2131 = vmatprep.subr.mxu0 %v423
    %2132 = vmatpush1.msra.mxu0 %v422
    %2133 = vmatprep.subr.mxu0 %v415
    %2134 = vmatpush1.msra.mxu0 %v414
    %2135 = vmatprep.subr.mxu0 %v663
    %2136 = vmatpush2.msra.mxu0 %v662
    %2137 = vmatprep.subr.mxu0 %v655
    %2138 = vmatpush2.msra.mxu0 %v654
    %2139 = vmatprep.subr.mxu0 %v647
    %2140 = vmatpush2.msra.mxu0 %v646
    %2141 = vmatprep.subr.mxu0 %v639
    %2142 = vmatpush2.msra.mxu0 %v638
    %2143 = vmatprep.subr.mxu0 %v631
    %2144 = vmatpush2.msra.mxu0 %v630
    %2145 = vmatprep.subr.mxu0 %v623
    %2146 = vmatpush2.msra.mxu0 %v622
    %2147 = vmatprep.subr.mxu0 %v615
    %2148 = vmatpush2.msra.mxu0 %v614
    %2149 = vmatprep.subr.mxu0 %v607
    %2150 = vmatpush2.msra.mxu0 %v606
    %2151 = vmatprep.subr.mxu0 %v599
    %2152 = vmatpush2.msra.mxu0 %v598
    %2153 = vmatprep.subr.mxu0 %v591
    %2154 = vmatpush2.msra.mxu0 %v590
    %2155 = vmatprep.subr.mxu0 %v583
    %2156 = vmatpush2.msra.mxu0 %v582
    %2157 = vmatprep.subr.mxu0 %v575
    %2158 = vmatpush2.msra.mxu0 %v574
    %2159 = vmatprep.subr.mxu0 %v567
    %2160 = vmatpush2.msra.mxu0 %v566
    %2161 = vmatprep.subr.mxu0 %v559
    %2162 = vmatpush2.msra.mxu0 %v558
    %2163 = vmatprep.subr.mxu0 %v551
    %2164 = vmatpush2.msra.mxu0 %v550
    %2165 = vmatprep.subr.mxu0 %v543
    %2166 = vmatpush2.msra.mxu0 %v542
    %2167 = vmatprep.mubr.f32.mxu0 %v148
    %2168 = vmatmul.mubr.f32.gmra.mxu0 %v147
    %v2169 = vpop.f32.mrf.mxu0
    %v2170 = vadd.f32 %v2099, %v2169
    %v2171 = vpop.f32.mrf.mxu0
    %v2172 = vadd.f32 %v2101, %v2171
    %2173 = vdwg.mxu0
    %2174 = vmatprep.subr.mxu0 %v791
    %2175 = vmatpush1.msra.mxu0 %v790
    %2176 = vmatprep.subr.mxu0 %v783
    %2177 = vmatpush1.msra.mxu0 %v782
    %2178 = vmatprep.subr.mxu0 %v775
    %2179 = vmatpush1.msra.mxu0 %v774
    %2180 = vmatprep.subr.mxu0 %v767
    %2181 = vmatpush1.msra.mxu0 %v766
    %2182 = vmatprep.subr.mxu0 %v759
    %2183 = vmatpush1.msra.mxu0 %v758
    %2184 = vmatprep.subr.mxu0 %v751
    %2185 = vmatpush1.msra.mxu0 %v750
    %2186 = vmatprep.subr.mxu0 %v743
    %2187 = vmatpush1.msra.mxu0 %v742
    %2188 = vmatprep.subr.mxu0 %v735
    %2189 = vmatpush1.msra.mxu0 %v734
    %2190 = vmatprep.subr.mxu0 %v727
    %2191 = vmatpush1.msra.mxu0 %v726
    %2192 = vmatprep.subr.mxu0 %v719
    %2193 = vmatpush1.msra.mxu0 %v718
    %2194 = vmatprep.subr.mxu0 %v711
    %2195 = vmatpush1.msra.mxu0 %v710
    %2196 = vmatprep.subr.mxu0 %v703
    %2197 = vmatpush1.msra.mxu0 %v702
    %2198 = vmatprep.subr.mxu0 %v695
    %2199 = vmatpush1.msra.mxu0 %v694
    %2200 = vmatprep.subr.mxu0 %v687
    %2201 = vmatpush1.msra.mxu0 %v686
    %2202 = vmatprep.subr.mxu0 %v679
    %2203 = vmatpush1.msra.mxu0 %v678
    %2204 = vmatprep.subr.mxu0 %v671
    %2205 = vmatpush1.msra.mxu0 %v670
    %2206 = vmatprep.subr.mxu0 %v919
    %2207 = vmatpush2.msra.mxu0 %v918
    %2208 = vmatprep.subr.mxu0 %v911
    %2209 = vmatpush2.msra.mxu0 %v910
    %2210 = vmatprep.subr.mxu0 %v903
    %2211 = vmatpush2.msra.mxu0 %v902
    %2212 = vmatprep.subr.mxu0 %v895
    %2213 = vmatpush2.msra.mxu0 %v894
    %2214 = vmatprep.subr.mxu0 %v887
    %2215 = vmatpush2.msra.mxu0 %v886
    %2216 = vmatprep.subr.mxu0 %v879
    %2217 = vmatpush2.msra.mxu0 %v878
    %2218 = vmatprep.subr.mxu0 %v871
    %2219 = vmatpush2.msra.mxu0 %v870
    %2220 = vmatprep.subr.mxu0 %v863
    %2221 = vmatpush2.msra.mxu0 %v862
    %2222 = vmatprep.subr.mxu0 %v855
    %2223 = vmatpush2.msra.mxu0 %v854
    %2224 = vmatprep.subr.mxu0 %v847
    %2225 = vmatpush2.msra.mxu0 %v846
    %2226 = vmatprep.subr.mxu0 %v839
    %2227 = vmatpush2.msra.mxu0 %v838
    %2228 = vmatprep.subr.mxu0 %v831
    %2229 = vmatpush2.msra.mxu0 %v830
    %2230 = vmatprep.subr.mxu0 %v823
    %2231 = vmatpush2.msra.mxu0 %v822
    %2232 = vmatprep.subr.mxu0 %v815
    %2233 = vmatpush2.msra.mxu0 %v814
    %2234 = vmatprep.subr.mxu0 %v807
    %2235 = vmatpush2.msra.mxu0 %v806
    %2236 = vmatprep.subr.mxu0 %v799
    %2237 = vmatpush2.msra.mxu0 %v798
    %2238 = vmatprep.mubr.f32.mxu0 %v150
    %2239 = vmatmul.mubr.f32.gmra.mxu0 %v149
    %v2240 = vpop.f32.mrf.mxu0
    %v2241 = vadd.f32 %v2170, %v2240
    %v2242 = vpop.f32.mrf.mxu0
    %v2243 = vadd.f32 %v2172, %v2242
    %2244 = vdwg.mxu0
    %2245 = vmatprep.subr.mxu0 %v1047
    %2246 = vmatpush1.msra.mxu0 %v1046
    %2247 = vmatprep.subr.mxu0 %v1039
    %2248 = vmatpush1.msra.mxu0 %v1038
    %2249 = vmatprep.subr.mxu0 %v1031
    %2250 = vmatpush1.msra.mxu0 %v1030
    %2251 = vmatprep.subr.mxu0 %v1023
    %2252 = vmatpush1.msra.mxu0 %v1022
    %2253 = vmatprep.subr.mxu0 %v1015
    %2254 = vmatpush1.msra.mxu0 %v1014
    %2255 = vmatprep.subr.mxu0 %v1007
    %2256 = vmatpush1.msra.mxu0 %v1006
    %2257 = vmatprep.subr.mxu0 %v999
    %2258 = vmatpush1.msra.mxu0 %v998
    %2259 = vmatprep.subr.mxu0 %v991
    %2260 = vmatpush1.msra.mxu0 %v990
    %2261 = vmatprep.subr.mxu0 %v983
    %2262 = vmatpush1.msra.mxu0 %v982
    %2263 = vmatprep.subr.mxu0 %v975
    %2264 = vmatpush1.msra.mxu0 %v974
    %2265 = vmatprep.subr.mxu0 %v967
    %2266 = vmatpush1.msra.mxu0 %v966
    %2267 = vmatprep.subr.mxu0 %v959
    %2268 = vmatpush1.msra.mxu0 %v958
    %2269 = vmatprep.subr.mxu0 %v951
    %2270 = vmatpush1.msra.mxu0 %v950
    %2271 = vmatprep.subr.mxu0 %v943
    %2272 = vmatpush1.msra.mxu0 %v942
    %2273 = vmatprep.subr.mxu0 %v935
    %2274 = vmatpush1.msra.mxu0 %v934
    %2275 = vmatprep.subr.mxu0 %v927
    %2276 = vmatpush1.msra.mxu0 %v926
    %2277 = vmatprep.subr.mxu0 %v1175
    %2278 = vmatpush2.msra.mxu0 %v1174
    %2279 = vmatprep.subr.mxu0 %v1167
    %2280 = vmatpush2.msra.mxu0 %v1166
    %2281 = vmatprep.subr.mxu0 %v1159
    %2282 = vmatpush2.msra.mxu0 %v1158
    %2283 = vmatprep.subr.mxu0 %v1151
    %2284 = vmatpush2.msra.mxu0 %v1150
    %2285 = vmatprep.subr.mxu0 %v1143
    %2286 = vmatpush2.msra.mxu0 %v1142
    %2287 = vmatprep.subr.mxu0 %v1135
    %2288 = vmatpush2.msra.mxu0 %v1134
    %2289 = vmatprep.subr.mxu0 %v1127
    %2290 = vmatpush2.msra.mxu0 %v1126
    %2291 = vmatprep.subr.mxu0 %v1119
    %2292 = vmatpush2.msra.mxu0 %v1118
    %2293 = vmatprep.subr.mxu0 %v1111
    %2294 = vmatpush2.msra.mxu0 %v1110
    %2295 = vmatprep.subr.mxu0 %v1103
    %2296 = vmatpush2.msra.mxu0 %v1102
    %2297 = vmatprep.subr.mxu0 %v1095
    %2298 = vmatpush2.msra.mxu0 %v1094
    %2299 = vmatprep.subr.mxu0 %v1087
    %2300 = vmatpush2.msra.mxu0 %v1086
    %2301 = vmatprep.subr.mxu0 %v1079
    %2302 = vmatpush2.msra.mxu0 %v1078
    %2303 = vmatprep.subr.mxu0 %v1071
    %2304 = vmatpush2.msra.mxu0 %v1070
    %2305 = vmatprep.subr.mxu0 %v1063
    %2306 = vmatpush2.msra.mxu0 %v1062
    %2307 = vmatprep.subr.mxu0 %v1055
    %2308 = vmatpush2.msra.mxu0 %v1054
    %2309 = vmatprep.mubr.f32.mxu0 %v152
    %2310 = vmatmul.mubr.f32.gmra.mxu0 %v151
    %v2311 = vpop.f32.mrf.mxu0
    %v2312 = vadd.f32 %v2241, %v2311
    %v2313 = vpop.f32.mrf.mxu0
    %v2314 = vadd.f32 %v2243, %v2313
    %2315 = vdwg.mxu0
    %2316 = vmatprep.subr.mxu0 %v1303
    %2317 = vmatpush1.msra.mxu0 %v1302
    %2318 = vmatprep.subr.mxu0 %v1295
    %2319 = vmatpush1.msra.mxu0 %v1294
    %2320 = vmatprep.subr.mxu0 %v1287
    %2321 = vmatpush1.msra.mxu0 %v1286
    %2322 = vmatprep.subr.mxu0 %v1279
    %2323 = vmatpush1.msra.mxu0 %v1278
    %2324 = vmatprep.subr.mxu0 %v1271
    %2325 = vmatpush1.msra.mxu0 %v1270
    %2326 = vmatprep.subr.mxu0 %v1263
    %2327 = vmatpush1.msra.mxu0 %v1262
    %2328 = vmatprep.subr.mxu0 %v1255
    %2329 = vmatpush1.msra.mxu0 %v1254
    %2330 = vmatprep.subr.mxu0 %v1247
    %2331 = vmatpush1.msra.mxu0 %v1246
    %2332 = vmatprep.subr.mxu0 %v1239
    %2333 = vmatpush1.msra.mxu0 %v1238
    %2334 = vmatprep.subr.mxu0 %v1231
    %2335 = vmatpush1.msra.mxu0 %v1230
    %2336 = vmatprep.subr.mxu0 %v1223
    %2337 = vmatpush1.msra.mxu0 %v1222
    %2338 = vmatprep.subr.mxu0 %v1215
    %2339 = vmatpush1.msra.mxu0 %v1214
    %2340 = vmatprep.subr.mxu0 %v1207
    %2341 = vmatpush1.msra.mxu0 %v1206
    %2342 = vmatprep.subr.mxu0 %v1199
    %2343 = vmatpush1.msra.mxu0 %v1198
    %2344 = vmatprep.subr.mxu0 %v1191
    %2345 = vmatpush1.msra.mxu0 %v1190
    %2346 = vmatprep.subr.mxu0 %v1183
    %2347 = vmatpush1.msra.mxu0 %v1182
    %2348 = vmatprep.subr.mxu0 %v1431
    %2349 = vmatpush2.msra.mxu0 %v1430
    %2350 = vmatprep.subr.mxu0 %v1423
    %2351 = vmatpush2.msra.mxu0 %v1422
    %2352 = vmatprep.subr.mxu0 %v1415
    %2353 = vmatpush2.msra.mxu0 %v1414
    %2354 = vmatprep.subr.mxu0 %v1407
    %2355 = vmatpush2.msra.mxu0 %v1406
    %2356 = vmatprep.subr.mxu0 %v1399
    %2357 = vmatpush2.msra.mxu0 %v1398
    %2358 = vmatprep.subr.mxu0 %v1391
    %2359 = vmatpush2.msra.mxu0 %v1390
    %2360 = vmatprep.subr.mxu0 %v1383
    %2361 = vmatpush2.msra.mxu0 %v1382
    %2362 = vmatprep.subr.mxu0 %v1375
    %2363 = vmatpush2.msra.mxu0 %v1374
    %2364 = vmatprep.subr.mxu0 %v1367
    %2365 = vmatpush2.msra.mxu0 %v1366
    %2366 = vmatprep.subr.mxu0 %v1359
    %2367 = vmatpush2.msra.mxu0 %v1358
    %2368 = vmatprep.subr.mxu0 %v1351
    %2369 = vmatpush2.msra.mxu0 %v1350
    %2370 = vmatprep.subr.mxu0 %v1343
    %2371 = vmatpush2.msra.mxu0 %v1342
    %2372 = vmatprep.subr.mxu0 %v1335
    %2373 = vmatpush2.msra.mxu0 %v1334
    %2374 = vmatprep.subr.mxu0 %v1327
    %2375 = vmatpush2.msra.mxu0 %v1326
    %2376 = vmatprep.subr.mxu0 %v1319
    %2377 = vmatpush2.msra.mxu0 %v1318
    %2378 = vmatprep.subr.mxu0 %v1311
    %2379 = vmatpush2.msra.mxu0 %v1310
    %2380 = vmatprep.mubr.f32.mxu0 %v154
    %2381 = vmatmul.mubr.f32.gmra.mxu0 %v153
    %v2382 = vpop.f32.mrf.mxu0
    %v2383 = vadd.f32 %v2312, %v2382
    %v2384 = vpop.f32.mrf.mxu0
    %v2385 = vadd.f32 %v2314, %v2384
    %2386 = vdwg.mxu0
    %2387 = vmatprep.subr.mxu0 %v1559
    %2388 = vmatpush1.msra.mxu0 %v1558
    %2389 = vmatprep.subr.mxu0 %v1551
    %2390 = vmatpush1.msra.mxu0 %v1550
    %2391 = vmatprep.subr.mxu0 %v1543
    %2392 = vmatpush1.msra.mxu0 %v1542
    %2393 = vmatprep.subr.mxu0 %v1535
    %2394 = vmatpush1.msra.mxu0 %v1534
    %2395 = vmatprep.subr.mxu0 %v1527
    %2396 = vmatpush1.msra.mxu0 %v1526
    %2397 = vmatprep.subr.mxu0 %v1519
    %2398 = vmatpush1.msra.mxu0 %v1518
    %2399 = vmatprep.subr.mxu0 %v1511
    %2400 = vmatpush1.msra.mxu0 %v1510
    %2401 = vmatprep.subr.mxu0 %v1503
    %2402 = vmatpush1.msra.mxu0 %v1502
    %2403 = vmatprep.subr.mxu0 %v1495
    %2404 = vmatpush1.msra.mxu0 %v1494
    %2405 = vmatprep.subr.mxu0 %v1487
    %2406 = vmatpush1.msra.mxu0 %v1486
    %2407 = vmatprep.subr.mxu0 %v1479
    %2408 = vmatpush1.msra.mxu0 %v1478
    %2409 = vmatprep.subr.mxu0 %v1471
    %2410 = vmatpush1.msra.mxu0 %v1470
    %2411 = vmatprep.subr.mxu0 %v1463
    %2412 = vmatpush1.msra.mxu0 %v1462
    %2413 = vmatprep.subr.mxu0 %v1455
    %2414 = vmatpush1.msra.mxu0 %v1454
    %2415 = vmatprep.subr.mxu0 %v1447
    %2416 = vmatpush1.msra.mxu0 %v1446
    %2417 = vmatprep.subr.mxu0 %v1439
    %2418 = vmatpush1.msra.mxu0 %v1438
    %2419 = vmatprep.subr.mxu0 0.0
    %2420 = vmatpush2.msra.mxu0 0.0
    %2421 = vmatprep.subr.mxu0 0.0
    %2422 = vmatpush2.msra.mxu0 0.0
    %2423 = vmatprep.subr.mxu0 0.0
    %2424 = vmatpush2.msra.mxu0 0.0
    %2425 = vmatprep.subr.mxu0 0.0
    %2426 = vmatpush2.msra.mxu0 0.0
    %2427 = vmatprep.subr.mxu0 0.0
    %2428 = vmatpush2.msra.mxu0 0.0
    %2429 = vmatprep.subr.mxu0 0.0
    %2430 = vmatpush2.msra.mxu0 0.0
    %2431 = vmatprep.subr.mxu0 0.0
    %2432 = vmatpush2.msra.mxu0 0.0
    %2433 = vmatprep.subr.mxu0 0.0
    %2434 = vmatpush2.msra.mxu0 0.0
    %2435 = vmatprep.subr.mxu0 0.0
    %2436 = vmatpush2.msra.mxu0 0.0
    %2437 = vmatprep.subr.mxu0 0.0
    %2438 = vmatpush2.msra.mxu0 0.0
    %2439 = vmatprep.subr.mxu0 0.0
    %2440 = vmatpush2.msra.mxu0 0.0
    %2441 = vmatprep.subr.mxu0 0.0
    %2442 = vmatpush2.msra.mxu0 0.0
    %2443 = vmatprep.subr.mxu0 0.0
    %2444 = vmatpush2.msra.mxu0 0.0
    %2445 = vmatprep.subr.mxu0 0.0
    %2446 = vmatpush2.msra.mxu0 0.0
    %2447 = vmatprep.subr.mxu0 0.0
    %2448 = vmatpush2.msra.mxu0 0.0
    %2449 = vmatprep.subr.mxu0 0.0
    %2450 = vmatpush2.msra.mxu0 0.0
    %2451 = vmatprep.mubr.f32.mxu0 0.0
    %2452 = vmatmul.mubr.f32.gmra.mxu0 %v155
    %v2453 = vpop.f32.mrf.mxu0
    %v2454 = vadd.f32 %v2383, %v2453
    %v2455 = vpop.f32.mrf.mxu0
    %v2456 = vadd.f32 %v2385, %v2455
    %2457 = vdwg.mxu0
    %2458 = vmatprep.subr.mxu0 %v281
    %2459 = vmatpush1.msra.mxu0 %v280
    %2460 = vmatprep.subr.mxu0 %v273
    %2461 = vmatpush1.msra.mxu0 %v272
    %2462 = vmatprep.subr.mxu0 %v265
    %2463 = vmatpush1.msra.mxu0 %v264
    %2464 = vmatprep.subr.mxu0 %v257
    %2465 = vmatpush1.msra.mxu0 %v256
    %2466 = vmatprep.subr.mxu0 %v249
    %2467 = vmatpush1.msra.mxu0 %v248
    %2468 = vmatprep.subr.mxu0 %v241
    %2469 = vmatpush1.msra.mxu0 %v240
    %2470 = vmatprep.subr.mxu0 %v233
    %2471 = vmatpush1.msra.mxu0 %v232
    %2472 = vmatprep.subr.mxu0 %v225
    %2473 = vmatpush1.msra.mxu0 %v224
    %2474 = vmatprep.subr.mxu0 %v217
    %2475 = vmatpush1.msra.mxu0 %v216
    %2476 = vmatprep.subr.mxu0 %v209
    %2477 = vmatpush1.msra.mxu0 %v208
    %2478 = vmatprep.subr.mxu0 %v201
    %2479 = vmatpush1.msra.mxu0 %v200
    %2480 = vmatprep.subr.mxu0 %v193
    %2481 = vmatpush1.msra.mxu0 %v192
    %2482 = vmatprep.subr.mxu0 %v185
    %2483 = vmatpush1.msra.mxu0 %v184
    %2484 = vmatprep.subr.mxu0 %v177
    %2485 = vmatpush1.msra.mxu0 %v176
    %2486 = vmatprep.subr.mxu0 %v169
    %2487 = vmatpush1.msra.mxu0 %v168
    %2488 = vmatprep.subr.mxu0 %v161
    %2489 = vmatpush1.msra.mxu0 %v160
    %2490 = vmatprep.subr.mxu0 %v409
    %2491 = vmatpush2.msra.mxu0 %v408
    %2492 = vmatprep.subr.mxu0 %v401
    %2493 = vmatpush2.msra.mxu0 %v400
    %2494 = vmatprep.subr.mxu0 %v393
    %2495 = vmatpush2.msra.mxu0 %v392
    %2496 = vmatprep.subr.mxu0 %v385
    %2497 = vmatpush2.msra.mxu0 %v384
    %2498 = vmatprep.subr.mxu0 %v377
    %2499 = vmatpush2.msra.mxu0 %v376
    %2500 = vmatprep.subr.mxu0 %v369
    %2501 = vmatpush2.msra.mxu0 %v368
    %2502 = vmatprep.subr.mxu0 %v361
    %2503 = vmatpush2.msra.mxu0 %v360
    %2504 = vmatprep.subr.mxu0 %v353
    %2505 = vmatpush2.msra.mxu0 %v352
    %2506 = vmatprep.subr.mxu0 %v345
    %2507 = vmatpush2.msra.mxu0 %v344
    %2508 = vmatprep.subr.mxu0 %v337
    %2509 = vmatpush2.msra.mxu0 %v336
    %2510 = vmatprep.subr.mxu0 %v329
    %2511 = vmatpush2.msra.mxu0 %v328
    %2512 = vmatprep.subr.mxu0 %v321
    %2513 = vmatpush2.msra.mxu0 %v320
    %2514 = vmatprep.subr.mxu0 %v313
    %2515 = vmatpush2.msra.mxu0 %v312
    %2516 = vmatprep.subr.mxu0 %v305
    %2517 = vmatpush2.msra.mxu0 %v304
    %2518 = vmatprep.subr.mxu0 %v297
    %2519 = vmatpush2.msra.mxu0 %v296
    %2520 = vmatprep.subr.mxu0 %v289
    %2521 = vmatpush2.msra.mxu0 %v288
    %2522 = vmatprep.mubr.f32.mxu0 %v146
    %2523 = vmatmul.mubr.f32.gmra.mxu0 %v145
    %v2524 = vpop.f32.mrf.mxu0
    %v2525 = vadd.f32 %v1585, %v2524
    %v2526 = vpop.f32.mrf.mxu0
    %v2527 = vadd.f32 %v1589, %v2526
    %2528 = vdwg.mxu0
    %2529 = vmatprep.subr.mxu0 %v537
    %2530 = vmatpush1.msra.mxu0 %v536
    %2531 = vmatprep.subr.mxu0 %v529
    %2532 = vmatpush1.msra.mxu0 %v528
    %2533 = vmatprep.subr.mxu0 %v521
    %2534 = vmatpush1.msra.mxu0 %v520
    %2535 = vmatprep.subr.mxu0 %v513
    %2536 = vmatpush1.msra.mxu0 %v512
    %2537 = vmatprep.subr.mxu0 %v505
    %2538 = vmatpush1.msra.mxu0 %v504
    %2539 = vmatprep.subr.mxu0 %v497
    %2540 = vmatpush1.msra.mxu0 %v496
    %2541 = vmatprep.subr.mxu0 %v489
    %2542 = vmatpush1.msra.mxu0 %v488
    %2543 = vmatprep.subr.mxu0 %v481
    %2544 = vmatpush1.msra.mxu0 %v480
    %2545 = vmatprep.subr.mxu0 %v473
    %2546 = vmatpush1.msra.mxu0 %v472
    %2547 = vmatprep.subr.mxu0 %v465
    %2548 = vmatpush1.msra.mxu0 %v464
    %2549 = vmatprep.subr.mxu0 %v457
    %2550 = vmatpush1.msra.mxu0 %v456
    %2551 = vmatprep.subr.mxu0 %v449
    %2552 = vmatpush1.msra.mxu0 %v448
    %2553 = vmatprep.subr.mxu0 %v441
    %2554 = vmatpush1.msra.mxu0 %v440
    %2555 = vmatprep.subr.mxu0 %v433
    %2556 = vmatpush1.msra.mxu0 %v432
    %2557 = vmatprep.subr.mxu0 %v425
    %2558 = vmatpush1.msra.mxu0 %v424
    %2559 = vmatprep.subr.mxu0 %v417
    %2560 = vmatpush1.msra.mxu0 %v416
    %2561 = vmatprep.subr.mxu0 %v665
    %2562 = vmatpush2.msra.mxu0 %v664
    %2563 = vmatprep.subr.mxu0 %v657
    %2564 = vmatpush2.msra.mxu0 %v656
    %2565 = vmatprep.subr.mxu0 %v649
    %2566 = vmatpush2.msra.mxu0 %v648
    %2567 = vmatprep.subr.mxu0 %v641
    %2568 = vmatpush2.msra.mxu0 %v640
    %2569 = vmatprep.subr.mxu0 %v633
    %2570 = vmatpush2.msra.mxu0 %v632
    %2571 = vmatprep.subr.mxu0 %v625
    %2572 = vmatpush2.msra.mxu0 %v624
    %2573 = vmatprep.subr.mxu0 %v617
    %2574 = vmatpush2.msra.mxu0 %v616
    %2575 = vmatprep.subr.mxu0 %v609
    %2576 = vmatpush2.msra.mxu0 %v608
    %2577 = vmatprep.subr.mxu0 %v601
    %2578 = vmatpush2.msra.mxu0 %v600
    %2579 = vmatprep.subr.mxu0 %v593
    %2580 = vmatpush2.msra.mxu0 %v592
    %2581 = vmatprep.subr.mxu0 %v585
    %2582 = vmatpush2.msra.mxu0 %v584
    %2583 = vmatprep.subr.mxu0 %v577
    %2584 = vmatpush2.msra.mxu0 %v576
    %2585 = vmatprep.subr.mxu0 %v569
    %2586 = vmatpush2.msra.mxu0 %v568
    %2587 = vmatprep.subr.mxu0 %v561
    %2588 = vmatpush2.msra.mxu0 %v560
    %2589 = vmatprep.subr.mxu0 %v553
    %2590 = vmatpush2.msra.mxu0 %v552
    %2591 = vmatprep.subr.mxu0 %v545
    %2592 = vmatpush2.msra.mxu0 %v544
    %2593 = vmatprep.mubr.f32.mxu0 %v148
    %2594 = vmatmul.mubr.f32.gmra.mxu0 %v147
    %v2595 = vpop.f32.mrf.mxu0
    %v2596 = vadd.f32 %v2525, %v2595
    %v2597 = vpop.f32.mrf.mxu0
    %v2598 = vadd.f32 %v2527, %v2597
    %2599 = vdwg.mxu0
    %2600 = vmatprep.subr.mxu0 %v793
    %2601 = vmatpush1.msra.mxu0 %v792
    %2602 = vmatprep.subr.mxu0 %v785
    %2603 = vmatpush1.msra.mxu0 %v784
    %2604 = vmatprep.subr.mxu0 %v777
    %2605 = vmatpush1.msra.mxu0 %v776
    %2606 = vmatprep.subr.mxu0 %v769
    %2607 = vmatpush1.msra.mxu0 %v768
    %2608 = vmatprep.subr.mxu0 %v761
    %2609 = vmatpush1.msra.mxu0 %v760
    %2610 = vmatprep.subr.mxu0 %v753
    %2611 = vmatpush1.msra.mxu0 %v752
    %2612 = vmatprep.subr.mxu0 %v745
    %2613 = vmatpush1.msra.mxu0 %v744
    %2614 = vmatprep.subr.mxu0 %v737
    %2615 = vmatpush1.msra.mxu0 %v736
    %2616 = vmatprep.subr.mxu0 %v729
    %2617 = vmatpush1.msra.mxu0 %v728
    %2618 = vmatprep.subr.mxu0 %v721
    %2619 = vmatpush1.msra.mxu0 %v720
    %2620 = vmatprep.subr.mxu0 %v713
    %2621 = vmatpush1.msra.mxu0 %v712
    %2622 = vmatprep.subr.mxu0 %v705
    %2623 = vmatpush1.msra.mxu0 %v704
    %2624 = vmatprep.subr.mxu0 %v697
    %2625 = vmatpush1.msra.mxu0 %v696
    %2626 = vmatprep.subr.mxu0 %v689
    %2627 = vmatpush1.msra.mxu0 %v688
    %2628 = vmatprep.subr.mxu0 %v681
    %2629 = vmatpush1.msra.mxu0 %v680
    %2630 = vmatprep.subr.mxu0 %v673
    %2631 = vmatpush1.msra.mxu0 %v672
    %2632 = vmatprep.subr.mxu0 %v921
    %2633 = vmatpush2.msra.mxu0 %v920
    %2634 = vmatprep.subr.mxu0 %v913
    %2635 = vmatpush2.msra.mxu0 %v912
    %2636 = vmatprep.subr.mxu0 %v905
    %2637 = vmatpush2.msra.mxu0 %v904
    %2638 = vmatprep.subr.mxu0 %v897
    %2639 = vmatpush2.msra.mxu0 %v896
    %2640 = vmatprep.subr.mxu0 %v889
    %2641 = vmatpush2.msra.mxu0 %v888
    %2642 = vmatprep.subr.mxu0 %v881
    %2643 = vmatpush2.msra.mxu0 %v880
    %2644 = vmatprep.subr.mxu0 %v873
    %2645 = vmatpush2.msra.mxu0 %v872
    %2646 = vmatprep.subr.mxu0 %v865
    %2647 = vmatpush2.msra.mxu0 %v864
    %2648 = vmatprep.subr.mxu0 %v857
    %2649 = vmatpush2.msra.mxu0 %v856
    %2650 = vmatprep.subr.mxu0 %v849
    %2651 = vmatpush2.msra.mxu0 %v848
    %2652 = vmatprep.subr.mxu0 %v841
    %2653 = vmatpush2.msra.mxu0 %v840
    %2654 = vmatprep.subr.mxu0 %v833
    %2655 = vmatpush2.msra.mxu0 %v832
    %2656 = vmatprep.subr.mxu0 %v825
    %2657 = vmatpush2.msra.mxu0 %v824
    %2658 = vmatprep.subr.mxu0 %v817
    %2659 = vmatpush2.msra.mxu0 %v816
    %2660 = vmatprep.subr.mxu0 %v809
    %2661 = vmatpush2.msra.mxu0 %v808
    %2662 = vmatprep.subr.mxu0 %v801
    %2663 = vmatpush2.msra.mxu0 %v800
    %2664 = vmatprep.mubr.f32.mxu0 %v150
    %2665 = vmatmul.mubr.f32.gmra.mxu0 %v149
    %v2666 = vpop.f32.mrf.mxu0
    %v2667 = vadd.f32 %v2596, %v2666
    %v2668 = vpop.f32.mrf.mxu0
    %v2669 = vadd.f32 %v2598, %v2668
    %2670 = vdwg.mxu0
    %2671 = vmatprep.subr.mxu0 %v1049
    %2672 = vmatpush1.msra.mxu0 %v1048
    %2673 = vmatprep.subr.mxu0 %v1041
    %2674 = vmatpush1.msra.mxu0 %v1040
    %2675 = vmatprep.subr.mxu0 %v1033
    %2676 = vmatpush1.msra.mxu0 %v1032
    %2677 = vmatprep.subr.mxu0 %v1025
    %2678 = vmatpush1.msra.mxu0 %v1024
    %2679 = vmatprep.subr.mxu0 %v1017
    %2680 = vmatpush1.msra.mxu0 %v1016
    %2681 = vmatprep.subr.mxu0 %v1009
    %2682 = vmatpush1.msra.mxu0 %v1008
    %2683 = vmatprep.subr.mxu0 %v1001
    %2684 = vmatpush1.msra.mxu0 %v1000
    %2685 = vmatprep.subr.mxu0 %v993
    %2686 = vmatpush1.msra.mxu0 %v992
    %2687 = vmatprep.subr.mxu0 %v985
    %2688 = vmatpush1.msra.mxu0 %v984
    %2689 = vmatprep.subr.mxu0 %v977
    %2690 = vmatpush1.msra.mxu0 %v976
    %2691 = vmatprep.subr.mxu0 %v969
    %2692 = vmatpush1.msra.mxu0 %v968
    %2693 = vmatprep.subr.mxu0 %v961
    %2694 = vmatpush1.msra.mxu0 %v960
    %2695 = vmatprep.subr.mxu0 %v953
    %2696 = vmatpush1.msra.mxu0 %v952
    %2697 = vmatprep.subr.mxu0 %v945
    %2698 = vmatpush1.msra.mxu0 %v944
    %2699 = vmatprep.subr.mxu0 %v937
    %2700 = vmatpush1.msra.mxu0 %v936
    %2701 = vmatprep.subr.mxu0 %v929
    %2702 = vmatpush1.msra.mxu0 %v928
    %2703 = vmatprep.subr.mxu0 %v1177
    %2704 = vmatpush2.msra.mxu0 %v1176
    %2705 = vmatprep.subr.mxu0 %v1169
    %2706 = vmatpush2.msra.mxu0 %v1168
    %2707 = vmatprep.subr.mxu0 %v1161
    %2708 = vmatpush2.msra.mxu0 %v1160
    %2709 = vmatprep.subr.mxu0 %v1153
    %2710 = vmatpush2.msra.mxu0 %v1152
    %2711 = vmatprep.subr.mxu0 %v1145
    %2712 = vmatpush2.msra.mxu0 %v1144
    %2713 = vmatprep.subr.mxu0 %v1137
    %2714 = vmatpush2.msra.mxu0 %v1136
    %2715 = vmatprep.subr.mxu0 %v1129
    %2716 = vmatpush2.msra.mxu0 %v1128
    %2717 = vmatprep.subr.mxu0 %v1121
    %2718 = vmatpush2.msra.mxu0 %v1120
    %2719 = vmatprep.subr.mxu0 %v1113
    %2720 = vmatpush2.msra.mxu0 %v1112
    %2721 = vmatprep.subr.mxu0 %v1105
    %2722 = vmatpush2.msra.mxu0 %v1104
    %2723 = vmatprep.subr.mxu0 %v1097
    %2724 = vmatpush2.msra.mxu0 %v1096
    %2725 = vmatprep.subr.mxu0 %v1089
    %2726 = vmatpush2.msra.mxu0 %v1088
    %2727 = vmatprep.subr.mxu0 %v1081
    %2728 = vmatpush2.msra.mxu0 %v1080
    %2729 = vmatprep.subr.mxu0 %v1073
    %2730 = vmatpush2.msra.mxu0 %v1072
    %2731 = vmatprep.subr.mxu0 %v1065
    %2732 = vmatpush2.msra.mxu0 %v1064
    %2733 = vmatprep.subr.mxu0 %v1057
    %2734 = vmatpush2.msra.mxu0 %v1056
    %2735 = vmatprep.mubr.f32.mxu0 %v152
    %2736 = vmatmul.mubr.f32.gmra.mxu0 %v151
    %v2737 = vpop.f32.mrf.mxu0
    %v2738 = vadd.f32 %v2667, %v2737
    %v2739 = vpop.f32.mrf.mxu0
    %v2740 = vadd.f32 %v2669, %v2739
    %2741 = vdwg.mxu0
    %2742 = vmatprep.subr.mxu0 %v1305
    %2743 = vmatpush1.msra.mxu0 %v1304
    %2744 = vmatprep.subr.mxu0 %v1297
    %2745 = vmatpush1.msra.mxu0 %v1296
    %2746 = vmatprep.subr.mxu0 %v1289
    %2747 = vmatpush1.msra.mxu0 %v1288
    %2748 = vmatprep.subr.mxu0 %v1281
    %2749 = vmatpush1.msra.mxu0 %v1280
    %2750 = vmatprep.subr.mxu0 %v1273
    %2751 = vmatpush1.msra.mxu0 %v1272
    %2752 = vmatprep.subr.mxu0 %v1265
    %2753 = vmatpush1.msra.mxu0 %v1264
    %2754 = vmatprep.subr.mxu0 %v1257
    %2755 = vmatpush1.msra.mxu0 %v1256
    %2756 = vmatprep.subr.mxu0 %v1249
    %2757 = vmatpush1.msra.mxu0 %v1248
    %2758 = vmatprep.subr.mxu0 %v1241
    %2759 = vmatpush1.msra.mxu0 %v1240
    %2760 = vmatprep.subr.mxu0 %v1233
    %2761 = vmatpush1.msra.mxu0 %v1232
    %2762 = vmatprep.subr.mxu0 %v1225
    %2763 = vmatpush1.msra.mxu0 %v1224
    %2764 = vmatprep.subr.mxu0 %v1217
    %2765 = vmatpush1.msra.mxu0 %v1216
    %2766 = vmatprep.subr.mxu0 %v1209
    %2767 = vmatpush1.msra.mxu0 %v1208
    %2768 = vmatprep.subr.mxu0 %v1201
    %2769 = vmatpush1.msra.mxu0 %v1200
    %2770 = vmatprep.subr.mxu0 %v1193
    %2771 = vmatpush1.msra.mxu0 %v1192
    %2772 = vmatprep.subr.mxu0 %v1185
    %2773 = vmatpush1.msra.mxu0 %v1184
    %2774 = vmatprep.subr.mxu0 %v1433
    %2775 = vmatpush2.msra.mxu0 %v1432
    %2776 = vmatprep.subr.mxu0 %v1425
    %2777 = vmatpush2.msra.mxu0 %v1424
    %2778 = vmatprep.subr.mxu0 %v1417
    %2779 = vmatpush2.msra.mxu0 %v1416
    %2780 = vmatprep.subr.mxu0 %v1409
    %2781 = vmatpush2.msra.mxu0 %v1408
    %2782 = vmatprep.subr.mxu0 %v1401
    %2783 = vmatpush2.msra.mxu0 %v1400
    %2784 = vmatprep.subr.mxu0 %v1393
    %2785 = vmatpush2.msra.mxu0 %v1392
    %2786 = vmatprep.subr.mxu0 %v1385
    %2787 = vmatpush2.msra.mxu0 %v1384
    %2788 = vmatprep.subr.mxu0 %v1377
    %2789 = vmatpush2.msra.mxu0 %v1376
    %2790 = vmatprep.subr.mxu0 %v1369
    %2791 = vmatpush2.msra.mxu0 %v1368
    %2792 = vmatprep.subr.mxu0 %v1361
    %2793 = vmatpush2.msra.mxu0 %v1360
    %2794 = vmatprep.subr.mxu0 %v1353
    %2795 = vmatpush2.msra.mxu0 %v1352
    %2796 = vmatprep.subr.mxu0 %v1345
    %2797 = vmatpush2.msra.mxu0 %v1344
    %2798 = vmatprep.subr.mxu0 %v1337
    %2799 = vmatpush2.msra.mxu0 %v1336
    %2800 = vmatprep.subr.mxu0 %v1329
    %2801 = vmatpush2.msra.mxu0 %v1328
    %2802 = vmatprep.subr.mxu0 %v1321
    %2803 = vmatpush2.msra.mxu0 %v1320
    %2804 = vmatprep.subr.mxu0 %v1313
    %2805 = vmatpush2.msra.mxu0 %v1312
    %2806 = vmatprep.mubr.f32.mxu0 %v154
    %2807 = vmatmul.mubr.f32.gmra.mxu0 %v153
    %v2808 = vpop.f32.mrf.mxu0
    %v2809 = vadd.f32 %v2738, %v2808
    %v2810 = vpop.f32.mrf.mxu0
    %v2811 = vadd.f32 %v2740, %v2810
    %2812 = vdwg.mxu0
    %2813 = vmatprep.subr.mxu0 %v1561
    %2814 = vmatpush1.msra.mxu0 %v1560
    %2815 = vmatprep.subr.mxu0 %v1553
    %2816 = vmatpush1.msra.mxu0 %v1552
    %2817 = vmatprep.subr.mxu0 %v1545
    %2818 = vmatpush1.msra.mxu0 %v1544
    %2819 = vmatprep.subr.mxu0 %v1537
    %2820 = vmatpush1.msra.mxu0 %v1536
    %2821 = vmatprep.subr.mxu0 %v1529
    %2822 = vmatpush1.msra.mxu0 %v1528
    %2823 = vmatprep.subr.mxu0 %v1521
    %2824 = vmatpush1.msra.mxu0 %v1520
    %2825 = vmatprep.subr.mxu0 %v1513
    %2826 = vmatpush1.msra.mxu0 %v1512
    %2827 = vmatprep.subr.mxu0 %v1505
    %2828 = vmatpush1.msra.mxu0 %v1504
    %2829 = vmatprep.subr.mxu0 %v1497
    %2830 = vmatpush1.msra.mxu0 %v1496
    %2831 = vmatprep.subr.mxu0 %v1489
    %2832 = vmatpush1.msra.mxu0 %v1488
    %2833 = vmatprep.subr.mxu0 %v1481
    %2834 = vmatpush1.msra.mxu0 %v1480
    %2835 = vmatprep.subr.mxu0 %v1473
    %2836 = vmatpush1.msra.mxu0 %v1472
    %2837 = vmatprep.subr.mxu0 %v1465
    %2838 = vmatpush1.msra.mxu0 %v1464
    %2839 = vmatprep.subr.mxu0 %v1457
    %2840 = vmatpush1.msra.mxu0 %v1456
    %2841 = vmatprep.subr.mxu0 %v1449
    %2842 = vmatpush1.msra.mxu0 %v1448
    %2843 = vmatprep.subr.mxu0 %v1441
    %2844 = vmatpush1.msra.mxu0 %v1440
    %2845 = vmatprep.subr.mxu0 0.0
    %2846 = vmatpush2.msra.mxu0 0.0
    %2847 = vmatprep.subr.mxu0 0.0
    %2848 = vmatpush2.msra.mxu0 0.0
    %2849 = vmatprep.subr.mxu0 0.0
    %2850 = vmatpush2.msra.mxu0 0.0
    %2851 = vmatprep.subr.mxu0 0.0
    %2852 = vmatpush2.msra.mxu0 0.0
    %2853 = vmatprep.subr.mxu0 0.0
    %2854 = vmatpush2.msra.mxu0 0.0
    %2855 = vmatprep.subr.mxu0 0.0
    %2856 = vmatpush2.msra.mxu0 0.0
    %2857 = vmatprep.subr.mxu0 0.0
    %2858 = vmatpush2.msra.mxu0 0.0
    %2859 = vmatprep.subr.mxu0 0.0
    %2860 = vmatpush2.msra.mxu0 0.0
    %2861 = vmatprep.subr.mxu0 0.0
    %2862 = vmatpush2.msra.mxu0 0.0
    %2863 = vmatprep.subr.mxu0 0.0
    %2864 = vmatpush2.msra.mxu0 0.0
    %2865 = vmatprep.subr.mxu0 0.0
    %2866 = vmatpush2.msra.mxu0 0.0
    %2867 = vmatprep.subr.mxu0 0.0
    %2868 = vmatpush2.msra.mxu0 0.0
    %2869 = vmatprep.subr.mxu0 0.0
    %2870 = vmatpush2.msra.mxu0 0.0
    %2871 = vmatprep.subr.mxu0 0.0
    %2872 = vmatpush2.msra.mxu0 0.0
    %2873 = vmatprep.subr.mxu0 0.0
    %2874 = vmatpush2.msra.mxu0 0.0
    %2875 = vmatprep.subr.mxu0 0.0
    %2876 = vmatpush2.msra.mxu0 0.0
    %2877 = vmatprep.mubr.f32.mxu0 0.0
    %2878 = vmatmul.mubr.f32.gmra.mxu0 %v155
    %v2879 = vpop.f32.mrf.mxu0
    %v2880 = vadd.f32 %v2809, %v2879
    %v2881 = vpop.f32.mrf.mxu0
    %v2882 = vadd.f32 %v2811, %v2881
    %2883 = vdwg.mxu0
    %2884 = vmatprep.subr.mxu0 %v283
    %2885 = vmatpush1.msra.mxu0 %v282
    %2886 = vmatprep.subr.mxu0 %v275
    %2887 = vmatpush1.msra.mxu0 %v274
    %2888 = vmatprep.subr.mxu0 %v267
    %2889 = vmatpush1.msra.mxu0 %v266
    %2890 = vmatprep.subr.mxu0 %v259
    %2891 = vmatpush1.msra.mxu0 %v258
    %2892 = vmatprep.subr.mxu0 %v251
    %2893 = vmatpush1.msra.mxu0 %v250
    %2894 = vmatprep.subr.mxu0 %v243
    %2895 = vmatpush1.msra.mxu0 %v242
    %2896 = vmatprep.subr.mxu0 %v235
    %2897 = vmatpush1.msra.mxu0 %v234
    %2898 = vmatprep.subr.mxu0 %v227
    %2899 = vmatpush1.msra.mxu0 %v226
    %2900 = vmatprep.subr.mxu0 %v219
    %2901 = vmatpush1.msra.mxu0 %v218
    %2902 = vmatprep.subr.mxu0 %v211
    %2903 = vmatpush1.msra.mxu0 %v210
    %2904 = vmatprep.subr.mxu0 %v203
    %2905 = vmatpush1.msra.mxu0 %v202
    %2906 = vmatprep.subr.mxu0 %v195
    %2907 = vmatpush1.msra.mxu0 %v194
    %2908 = vmatprep.subr.mxu0 %v187
    %2909 = vmatpush1.msra.mxu0 %v186
    %2910 = vmatprep.subr.mxu0 %v179
    %2911 = vmatpush1.msra.mxu0 %v178
    %2912 = vmatprep.subr.mxu0 %v171
    %2913 = vmatpush1.msra.mxu0 %v170
    %2914 = vmatprep.subr.mxu0 %v163
    %2915 = vmatpush1.msra.mxu0 %v162
    %2916 = vmatprep.subr.mxu0 %v411
    %2917 = vmatpush2.msra.mxu0 %v410
    %2918 = vmatprep.subr.mxu0 %v403
    %2919 = vmatpush2.msra.mxu0 %v402
    %2920 = vmatprep.subr.mxu0 %v395
    %2921 = vmatpush2.msra.mxu0 %v394
    %2922 = vmatprep.subr.mxu0 %v387
    %2923 = vmatpush2.msra.mxu0 %v386
    %2924 = vmatprep.subr.mxu0 %v379
    %2925 = vmatpush2.msra.mxu0 %v378
    %2926 = vmatprep.subr.mxu0 %v371
    %2927 = vmatpush2.msra.mxu0 %v370
    %2928 = vmatprep.subr.mxu0 %v363
    %2929 = vmatpush2.msra.mxu0 %v362
    %2930 = vmatprep.subr.mxu0 %v355
    %2931 = vmatpush2.msra.mxu0 %v354
    %2932 = vmatprep.subr.mxu0 %v347
    %2933 = vmatpush2.msra.mxu0 %v346
    %2934 = vmatprep.subr.mxu0 %v339
    %2935 = vmatpush2.msra.mxu0 %v338
    %2936 = vmatprep.subr.mxu0 %v331
    %2937 = vmatpush2.msra.mxu0 %v330
    %2938 = vmatprep.subr.mxu0 %v323
    %2939 = vmatpush2.msra.mxu0 %v322
    %2940 = vmatprep.subr.mxu0 %v315
    %2941 = vmatpush2.msra.mxu0 %v314
    %2942 = vmatprep.subr.mxu0 %v307
    %2943 = vmatpush2.msra.mxu0 %v306
    %2944 = vmatprep.subr.mxu0 %v299
    %2945 = vmatpush2.msra.mxu0 %v298
    %2946 = vmatprep.subr.mxu0 %v291
    %2947 = vmatpush2.msra.mxu0 %v290
    %2948 = vmatprep.mubr.f32.mxu0 %v146
    %2949 = vmatmul.mubr.f32.gmra.mxu0 %v145
    %v2950 = vpop.f32.mrf.mxu0
    %v2951 = vadd.f32 %v1593, %v2950
    %v2952 = vpop.f32.mrf.mxu0
    %v2953 = vadd.f32 %v1597, %v2952
    %2954 = vdwg.mxu0
    %2955 = vmatprep.subr.mxu0 %v539
    %2956 = vmatpush1.msra.mxu0 %v538
    %2957 = vmatprep.subr.mxu0 %v531
    %2958 = vmatpush1.msra.mxu0 %v530
    %2959 = vmatprep.subr.mxu0 %v523
    %2960 = vmatpush1.msra.mxu0 %v522
    %2961 = vmatprep.subr.mxu0 %v515
    %2962 = vmatpush1.msra.mxu0 %v514
    %2963 = vmatprep.subr.mxu0 %v507
    %2964 = vmatpush1.msra.mxu0 %v506
    %2965 = vmatprep.subr.mxu0 %v499
    %2966 = vmatpush1.msra.mxu0 %v498
    %2967 = vmatprep.subr.mxu0 %v491
    %2968 = vmatpush1.msra.mxu0 %v490
    %2969 = vmatprep.subr.mxu0 %v483
    %2970 = vmatpush1.msra.mxu0 %v482
    %2971 = vmatprep.subr.mxu0 %v475
    %2972 = vmatpush1.msra.mxu0 %v474
    %2973 = vmatprep.subr.mxu0 %v467
    %2974 = vmatpush1.msra.mxu0 %v466
    %2975 = vmatprep.subr.mxu0 %v459
    %2976 = vmatpush1.msra.mxu0 %v458
    %2977 = vmatprep.subr.mxu0 %v451
    %2978 = vmatpush1.msra.mxu0 %v450
    %2979 = vmatprep.subr.mxu0 %v443
    %2980 = vmatpush1.msra.mxu0 %v442
    %2981 = vmatprep.subr.mxu0 %v435
    %2982 = vmatpush1.msra.mxu0 %v434
    %2983 = vmatprep.subr.mxu0 %v427
    %2984 = vmatpush1.msra.mxu0 %v426
    %2985 = vmatprep.subr.mxu0 %v419
    %2986 = vmatpush1.msra.mxu0 %v418
    %2987 = vmatprep.subr.mxu0 %v667
    %2988 = vmatpush2.msra.mxu0 %v666
    %2989 = vmatprep.subr.mxu0 %v659
    %2990 = vmatpush2.msra.mxu0 %v658
    %2991 = vmatprep.subr.mxu0 %v651
    %2992 = vmatpush2.msra.mxu0 %v650
    %2993 = vmatprep.subr.mxu0 %v643
    %2994 = vmatpush2.msra.mxu0 %v642
    %2995 = vmatprep.subr.mxu0 %v635
    %2996 = vmatpush2.msra.mxu0 %v634
    %2997 = vmatprep.subr.mxu0 %v627
    %2998 = vmatpush2.msra.mxu0 %v626
    %2999 = vmatprep.subr.mxu0 %v619
    %3000 = vmatpush2.msra.mxu0 %v618
    %3001 = vmatprep.subr.mxu0 %v611
    %3002 = vmatpush2.msra.mxu0 %v610
    %3003 = vmatprep.subr.mxu0 %v603
    %3004 = vmatpush2.msra.mxu0 %v602
    %3005 = vmatprep.subr.mxu0 %v595
    %3006 = vmatpush2.msra.mxu0 %v594
    %3007 = vmatprep.subr.mxu0 %v587
    %3008 = vmatpush2.msra.mxu0 %v586
    %3009 = vmatprep.subr.mxu0 %v579
    %3010 = vmatpush2.msra.mxu0 %v578
    %3011 = vmatprep.subr.mxu0 %v571
    %3012 = vmatpush2.msra.mxu0 %v570
    %3013 = vmatprep.subr.mxu0 %v563
    %3014 = vmatpush2.msra.mxu0 %v562
    %3015 = vmatprep.subr.mxu0 %v555
    %3016 = vmatpush2.msra.mxu0 %v554
    %3017 = vmatprep.subr.mxu0 %v547
    %3018 = vmatpush2.msra.mxu0 %v546
    %3019 = vmatprep.mubr.f32.mxu0 %v148
    %3020 = vmatmul.mubr.f32.gmra.mxu0 %v147
    %v3021 = vpop.f32.mrf.mxu0
    %v3022 = vadd.f32 %v2951, %v3021
    %v3023 = vpop.f32.mrf.mxu0
    %v3024 = vadd.f32 %v2953, %v3023
    %3025 = vdwg.mxu0
    %3026 = vmatprep.subr.mxu0 %v795
    %3027 = vmatpush1.msra.mxu0 %v794
    %3028 = vmatprep.subr.mxu0 %v787
    %3029 = vmatpush1.msra.mxu0 %v786
    %3030 = vmatprep.subr.mxu0 %v779
    %3031 = vmatpush1.msra.mxu0 %v778
    %3032 = vmatprep.subr.mxu0 %v771
    %3033 = vmatpush1.msra.mxu0 %v770
    %3034 = vmatprep.subr.mxu0 %v763
    %3035 = vmatpush1.msra.mxu0 %v762
    %3036 = vmatprep.subr.mxu0 %v755
    %3037 = vmatpush1.msra.mxu0 %v754
    %3038 = vmatprep.subr.mxu0 %v747
    %3039 = vmatpush1.msra.mxu0 %v746
    %3040 = vmatprep.subr.mxu0 %v739
    %3041 = vmatpush1.msra.mxu0 %v738
    %3042 = vmatprep.subr.mxu0 %v731
    %3043 = vmatpush1.msra.mxu0 %v730
    %3044 = vmatprep.subr.mxu0 %v723
    %3045 = vmatpush1.msra.mxu0 %v722
    %3046 = vmatprep.subr.mxu0 %v715
    %3047 = vmatpush1.msra.mxu0 %v714
    %3048 = vmatprep.subr.mxu0 %v707
    %3049 = vmatpush1.msra.mxu0 %v706
    %3050 = vmatprep.subr.mxu0 %v699
    %3051 = vmatpush1.msra.mxu0 %v698
    %3052 = vmatprep.subr.mxu0 %v691
    %3053 = vmatpush1.msra.mxu0 %v690
    %3054 = vmatprep.subr.mxu0 %v683
    %3055 = vmatpush1.msra.mxu0 %v682
    %3056 = vmatprep.subr.mxu0 %v675
    %3057 = vmatpush1.msra.mxu0 %v674
    %3058 = vmatprep.subr.mxu0 %v923
    %3059 = vmatpush2.msra.mxu0 %v922
    %3060 = vmatprep.subr.mxu0 %v915
    %3061 = vmatpush2.msra.mxu0 %v914
    %3062 = vmatprep.subr.mxu0 %v907
    %3063 = vmatpush2.msra.mxu0 %v906
    %3064 = vmatprep.subr.mxu0 %v899
    %3065 = vmatpush2.msra.mxu0 %v898
    %3066 = vmatprep.subr.mxu0 %v891
    %3067 = vmatpush2.msra.mxu0 %v890
    %3068 = vmatprep.subr.mxu0 %v883
    %3069 = vmatpush2.msra.mxu0 %v882
    %3070 = vmatprep.subr.mxu0 %v875
    %3071 = vmatpush2.msra.mxu0 %v874
    %3072 = vmatprep.subr.mxu0 %v867
    %3073 = vmatpush2.msra.mxu0 %v866
    %3074 = vmatprep.subr.mxu0 %v859
    %3075 = vmatpush2.msra.mxu0 %v858
    %3076 = vmatprep.subr.mxu0 %v851
    %3077 = vmatpush2.msra.mxu0 %v850
    %3078 = vmatprep.subr.mxu0 %v843
    %3079 = vmatpush2.msra.mxu0 %v842
    %3080 = vmatprep.subr.mxu0 %v835
    %3081 = vmatpush2.msra.mxu0 %v834
    %3082 = vmatprep.subr.mxu0 %v827
    %3083 = vmatpush2.msra.mxu0 %v826
    %3084 = vmatprep.subr.mxu0 %v819
    %3085 = vmatpush2.msra.mxu0 %v818
    %3086 = vmatprep.subr.mxu0 %v811
    %3087 = vmatpush2.msra.mxu0 %v810
    %3088 = vmatprep.subr.mxu0 %v803
    %3089 = vmatpush2.msra.mxu0 %v802
    %3090 = vmatprep.mubr.f32.mxu0 %v150
    %3091 = vmatmul.mubr.f32.gmra.mxu0 %v149
    %v3092 = vpop.f32.mrf.mxu0
    %v3093 = vadd.f32 %v3022, %v3092
    %v3094 = vpop.f32.mrf.mxu0
    %v3095 = vadd.f32 %v3024, %v3094
    %3096 = vdwg.mxu0
    %3097 = vmatprep.subr.mxu0 %v1051
    %3098 = vmatpush1.msra.mxu0 %v1050
    %3099 = vmatprep.subr.mxu0 %v1043
    %3100 = vmatpush1.msra.mxu0 %v1042
    %3101 = vmatprep.subr.mxu0 %v1035
    %3102 = vmatpush1.msra.mxu0 %v1034
    %3103 = vmatprep.subr.mxu0 %v1027
    %3104 = vmatpush1.msra.mxu0 %v1026
    %3105 = vmatprep.subr.mxu0 %v1019
    %3106 = vmatpush1.msra.mxu0 %v1018
    %3107 = vmatprep.subr.mxu0 %v1011
    %3108 = vmatpush1.msra.mxu0 %v1010
    %3109 = vmatprep.subr.mxu0 %v1003
    %3110 = vmatpush1.msra.mxu0 %v1002
    %3111 = vmatprep.subr.mxu0 %v995
    %3112 = vmatpush1.msra.mxu0 %v994
    %3113 = vmatprep.subr.mxu0 %v987
    %3114 = vmatpush1.msra.mxu0 %v986
    %3115 = vmatprep.subr.mxu0 %v979
    %3116 = vmatpush1.msra.mxu0 %v978
    %3117 = vmatprep.subr.mxu0 %v971
    %3118 = vmatpush1.msra.mxu0 %v970
    %3119 = vmatprep.subr.mxu0 %v963
    %3120 = vmatpush1.msra.mxu0 %v962
    %3121 = vmatprep.subr.mxu0 %v955
    %3122 = vmatpush1.msra.mxu0 %v954
    %3123 = vmatprep.subr.mxu0 %v947
    %3124 = vmatpush1.msra.mxu0 %v946
    %3125 = vmatprep.subr.mxu0 %v939
    %3126 = vmatpush1.msra.mxu0 %v938
    %3127 = vmatprep.subr.mxu0 %v931
    %3128 = vmatpush1.msra.mxu0 %v930
    %3129 = vmatprep.subr.mxu0 %v1179
    %3130 = vmatpush2.msra.mxu0 %v1178
    %3131 = vmatprep.subr.mxu0 %v1171
    %3132 = vmatpush2.msra.mxu0 %v1170
    %3133 = vmatprep.subr.mxu0 %v1163
    %3134 = vmatpush2.msra.mxu0 %v1162
    %3135 = vmatprep.subr.mxu0 %v1155
    %3136 = vmatpush2.msra.mxu0 %v1154
    %3137 = vmatprep.subr.mxu0 %v1147
    %3138 = vmatpush2.msra.mxu0 %v1146
    %3139 = vmatprep.subr.mxu0 %v1139
    %3140 = vmatpush2.msra.mxu0 %v1138
    %3141 = vmatprep.subr.mxu0 %v1131
    %3142 = vmatpush2.msra.mxu0 %v1130
    %3143 = vmatprep.subr.mxu0 %v1123
    %3144 = vmatpush2.msra.mxu0 %v1122
    %3145 = vmatprep.subr.mxu0 %v1115
    %3146 = vmatpush2.msra.mxu0 %v1114
    %3147 = vmatprep.subr.mxu0 %v1107
    %3148 = vmatpush2.msra.mxu0 %v1106
    %3149 = vmatprep.subr.mxu0 %v1099
    %3150 = vmatpush2.msra.mxu0 %v1098
    %3151 = vmatprep.subr.mxu0 %v1091
    %3152 = vmatpush2.msra.mxu0 %v1090
    %3153 = vmatprep.subr.mxu0 %v1083
    %3154 = vmatpush2.msra.mxu0 %v1082
    %3155 = vmatprep.subr.mxu0 %v1075
    %3156 = vmatpush2.msra.mxu0 %v1074
    %3157 = vmatprep.subr.mxu0 %v1067
    %3158 = vmatpush2.msra.mxu0 %v1066
    %3159 = vmatprep.subr.mxu0 %v1059
    %3160 = vmatpush2.msra.mxu0 %v1058
    %3161 = vmatprep.mubr.f32.mxu0 %v152
    %3162 = vmatmul.mubr.f32.gmra.mxu0 %v151
    %v3163 = vpop.f32.mrf.mxu0
    %v3164 = vadd.f32 %v3093, %v3163
    %v3165 = vpop.f32.mrf.mxu0
    %v3166 = vadd.f32 %v3095, %v3165
    %3167 = vdwg.mxu0
    %3168 = vmatprep.subr.mxu0 %v1307
    %3169 = vmatpush1.msra.mxu0 %v1306
    %3170 = vmatprep.subr.mxu0 %v1299
    %3171 = vmatpush1.msra.mxu0 %v1298
    %3172 = vmatprep.subr.mxu0 %v1291
    %3173 = vmatpush1.msra.mxu0 %v1290
    %3174 = vmatprep.subr.mxu0 %v1283
    %3175 = vmatpush1.msra.mxu0 %v1282
    %3176 = vmatprep.subr.mxu0 %v1275
    %3177 = vmatpush1.msra.mxu0 %v1274
    %3178 = vmatprep.subr.mxu0 %v1267
    %3179 = vmatpush1.msra.mxu0 %v1266
    %3180 = vmatprep.subr.mxu0 %v1259
    %3181 = vmatpush1.msra.mxu0 %v1258
    %3182 = vmatprep.subr.mxu0 %v1251
    %3183 = vmatpush1.msra.mxu0 %v1250
    %3184 = vmatprep.subr.mxu0 %v1243
    %3185 = vmatpush1.msra.mxu0 %v1242
    %3186 = vmatprep.subr.mxu0 %v1235
    %3187 = vmatpush1.msra.mxu0 %v1234
    %3188 = vmatprep.subr.mxu0 %v1227
    %3189 = vmatpush1.msra.mxu0 %v1226
    %3190 = vmatprep.subr.mxu0 %v1219
    %3191 = vmatpush1.msra.mxu0 %v1218
    %3192 = vmatprep.subr.mxu0 %v1211
    %3193 = vmatpush1.msra.mxu0 %v1210
    %3194 = vmatprep.subr.mxu0 %v1203
    %3195 = vmatpush1.msra.mxu0 %v1202
    %3196 = vmatprep.subr.mxu0 %v1195
    %3197 = vmatpush1.msra.mxu0 %v1194
    %3198 = vmatprep.subr.mxu0 %v1187
    %3199 = vmatpush1.msra.mxu0 %v1186
    %3200 = vmatprep.subr.mxu0 %v1435
    %3201 = vmatpush2.msra.mxu0 %v1434
    %3202 = vmatprep.subr.mxu0 %v1427
    %3203 = vmatpush2.msra.mxu0 %v1426
    %3204 = vmatprep.subr.mxu0 %v1419
    %3205 = vmatpush2.msra.mxu0 %v1418
    %3206 = vmatprep.subr.mxu0 %v1411
    %3207 = vmatpush2.msra.mxu0 %v1410
    %3208 = vmatprep.subr.mxu0 %v1403
    %3209 = vmatpush2.msra.mxu0 %v1402
    %3210 = vmatprep.subr.mxu0 %v1395
    %3211 = vmatpush2.msra.mxu0 %v1394
    %3212 = vmatprep.subr.mxu0 %v1387
    %3213 = vmatpush2.msra.mxu0 %v1386
    %3214 = vmatprep.subr.mxu0 %v1379
    %3215 = vmatpush2.msra.mxu0 %v1378
    %3216 = vmatprep.subr.mxu0 %v1371
    %3217 = vmatpush2.msra.mxu0 %v1370
    %3218 = vmatprep.subr.mxu0 %v1363
    %3219 = vmatpush2.msra.mxu0 %v1362
    %3220 = vmatprep.subr.mxu0 %v1355
    %3221 = vmatpush2.msra.mxu0 %v1354
    %3222 = vmatprep.subr.mxu0 %v1347
    %3223 = vmatpush2.msra.mxu0 %v1346
    %3224 = vmatprep.subr.mxu0 %v1339
    %3225 = vmatpush2.msra.mxu0 %v1338
    %3226 = vmatprep.subr.mxu0 %v1331
    %3227 = vmatpush2.msra.mxu0 %v1330
    %3228 = vmatprep.subr.mxu0 %v1323
    %3229 = vmatpush2.msra.mxu0 %v1322
    %3230 = vmatprep.subr.mxu0 %v1315
    %3231 = vmatpush2.msra.mxu0 %v1314
    %3232 = vmatprep.mubr.f32.mxu0 %v154
    %3233 = vmatmul.mubr.f32.gmra.mxu0 %v153
    %v3234 = vpop.f32.mrf.mxu0
    %v3235 = vadd.f32 %v3164, %v3234
    %v3236 = vpop.f32.mrf.mxu0
    %v3237 = vadd.f32 %v3166, %v3236
    %3238 = vdwg.mxu0
    %3239 = vmatprep.subr.mxu0 %v1563
    %3240 = vmatpush1.msra.mxu0 %v1562
    %3241 = vmatprep.subr.mxu0 %v1555
    %3242 = vmatpush1.msra.mxu0 %v1554
    %3243 = vmatprep.subr.mxu0 %v1547
    %3244 = vmatpush1.msra.mxu0 %v1546
    %3245 = vmatprep.subr.mxu0 %v1539
    %3246 = vmatpush1.msra.mxu0 %v1538
    %3247 = vmatprep.subr.mxu0 %v1531
    %3248 = vmatpush1.msra.mxu0 %v1530
    %3249 = vmatprep.subr.mxu0 %v1523
    %3250 = vmatpush1.msra.mxu0 %v1522
    %3251 = vmatprep.subr.mxu0 %v1515
    %3252 = vmatpush1.msra.mxu0 %v1514
    %3253 = vmatprep.subr.mxu0 %v1507
    %3254 = vmatpush1.msra.mxu0 %v1506
    %3255 = vmatprep.subr.mxu0 %v1499
    %3256 = vmatpush1.msra.mxu0 %v1498
    %3257 = vmatprep.subr.mxu0 %v1491
    %3258 = vmatpush1.msra.mxu0 %v1490
    %3259 = vmatprep.subr.mxu0 %v1483
    %3260 = vmatpush1.msra.mxu0 %v1482
    %3261 = vmatprep.subr.mxu0 %v1475
    %3262 = vmatpush1.msra.mxu0 %v1474
    %3263 = vmatprep.subr.mxu0 %v1467
    %3264 = vmatpush1.msra.mxu0 %v1466
    %3265 = vmatprep.subr.mxu0 %v1459
    %3266 = vmatpush1.msra.mxu0 %v1458
    %3267 = vmatprep.subr.mxu0 %v1451
    %3268 = vmatpush1.msra.mxu0 %v1450
    %3269 = vmatprep.subr.mxu0 %v1443
    %3270 = vmatpush1.msra.mxu0 %v1442
    %3271 = vmatprep.subr.mxu0 0.0
    %3272 = vmatpush2.msra.mxu0 0.0
    %3273 = vmatprep.subr.mxu0 0.0
    %3274 = vmatpush2.msra.mxu0 0.0
    %3275 = vmatprep.subr.mxu0 0.0
    %3276 = vmatpush2.msra.mxu0 0.0
    %3277 = vmatprep.subr.mxu0 0.0
    %3278 = vmatpush2.msra.mxu0 0.0
    %3279 = vmatprep.subr.mxu0 0.0
    %3280 = vmatpush2.msra.mxu0 0.0
    %3281 = vmatprep.subr.mxu0 0.0
    %3282 = vmatpush2.msra.mxu0 0.0
    %3283 = vmatprep.subr.mxu0 0.0
    %3284 = vmatpush2.msra.mxu0 0.0
    %3285 = vmatprep.subr.mxu0 0.0
    %3286 = vmatpush2.msra.mxu0 0.0
    %3287 = vmatprep.subr.mxu0 0.0
    %3288 = vmatpush2.msra.mxu0 0.0
    %3289 = vmatprep.subr.mxu0 0.0
    %3290 = vmatpush2.msra.mxu0 0.0
    %3291 = vmatprep.subr.mxu0 0.0
    %3292 = vmatpush2.msra.mxu0 0.0
    %3293 = vmatprep.subr.mxu0 0.0
    %3294 = vmatpush2.msra.mxu0 0.0
    %3295 = vmatprep.subr.mxu0 0.0
    %3296 = vmatpush2.msra.mxu0 0.0
    %3297 = vmatprep.subr.mxu0 0.0
    %3298 = vmatpush2.msra.mxu0 0.0
    %3299 = vmatprep.subr.mxu0 0.0
    %3300 = vmatpush2.msra.mxu0 0.0
    %3301 = vmatprep.subr.mxu0 0.0
    %3302 = vmatpush2.msra.mxu0 0.0
    %3303 = vmatprep.mubr.f32.mxu0 0.0
    %3304 = vmatmul.mubr.f32.gmra.mxu0 %v155
    %v3305 = vpop.f32.mrf.mxu0
    %v3306 = vadd.f32 %v3235, %v3305
    %v3307 = vpop.f32.mrf.mxu0
    %v3308 = vadd.f32 %v3237, %v3307
    %3309 = vdwg.mxu0
    %v3310 = vmin.f32 %v2028, 0.0
    %v3311 = vmin.f32 %v2030, 0.0
    %v3312 = vmin.f32 %v2454, 0.0
    %v3313 = vmin.f32 %v2456, 0.0
    %v3314 = vmin.f32 %v2880, 0.0
    %v3315 = vmin.f32 %v2882, 0.0
    %v3316 = vmin.f32 %v3306, 0.0
    %v3317 = vmin.f32 %v3308, 0.0
    %v3318 = vmul.f32 %v3310, 1.442695
    %v3319 = vpow.pop %v3318
    %v3320 = vmul.f32 %v3311, 1.442695
    %v3321 = vpow.pop %v3320
    %v3322 = vmul.f32 %v3312, 1.442695
    %v3323 = vpow.pop %v3322
    %v3324 = vmul.f32 %v3313, 1.442695
    %v3325 = vpow.pop %v3324
    %v3326 = vmul.f32 %v3314, 1.442695
    %v3327 = vpow.pop %v3326
    %v3328 = vmul.f32 %v3315, 1.442695
    %v3329 = vpow.pop %v3328
    %v3330 = vmul.f32 %v3316, 1.442695
    %v3331 = vpow.pop %v3330
    %v3332 = vmul.f32 %v3317, 1.442695
    %v3333 = vpow.pop %v3332
    %v3334 = vsub.f32 %v3319, 1.0
    %v3335 = vsub.f32 %v3321, 1.0
    %v3336 = vsub.f32 %v3323, 1.0
    %v3337 = vsub.f32 %v3325, 1.0
    %v3338 = vsub.f32 %v3327, 1.0
    %v3339 = vsub.f32 %v3329, 1.0
    %v3340 = vsub.f32 %v3331, 1.0
    %v3341 = vsub.f32 %v3333, 1.0
    %v3342 = vmul.f32 %v3334, 1.6732632
    %v3343 = vmul.f32 %v3335, 1.6732632
    %v3344 = vmul.f32 %v3336, 1.6732632
    %v3345 = vmul.f32 %v3337, 1.6732632
    %v3346 = vmul.f32 %v3338, 1.6732632
    %v3347 = vmul.f32 %v3339, 1.6732632
    %v3348 = vmul.f32 %v3340, 1.6732632
    %v3349 = vmul.f32 %v3341, 1.6732632
    %vm3350 = vcmp.gt.f32.partialorder %v2028, 0.0
    %vm3351 = vcmp.gt.f32.partialorder %v2030, 0.0
    %vm3352 = vcmp.gt.f32.partialorder %v2454, 0.0
    %vm3353 = vcmp.gt.f32.partialorder %v2456, 0.0
    %vm3354 = vcmp.gt.f32.partialorder %v2880, 0.0
    %vm3355 = vcmp.gt.f32.partialorder %v2882, 0.0
    %vm3356 = vcmp.gt.f32.partialorder %v3306, 0.0
    %vm3357 = vcmp.gt.f32.partialorder %v3308, 0.0
    %v3358 = vsel %vm3350, %v2028, %v3342
    %v3359 = vsel %vm3351, %v2030, %v3343
    %v3360 = vsel %vm3352, %v2454, %v3344
    %v3361 = vsel %vm3353, %v2456, %v3345
    %v3362 = vsel %vm3354, %v2880, %v3346
    %v3363 = vsel %vm3355, %v2882, %v3347
    %v3364 = vsel %vm3356, %v3306, %v3348
    %v3365 = vsel %vm3357, %v3308, %v3349
    %v3366 = vmul.f32 %v3358, 1.050701
    %v3367 = vmul.f32 %v3359, 1.050701
    %v3368 = vmul.f32 %v3360, 1.050701
    %v3369 = vmul.f32 %v3361, 1.050701
    %v3370 = vmul.f32 %v3362, 1.050701
    %v3371 = vmul.f32 %v3363, 1.050701
    %v3372 = vmul.f32 %v3364, 1.050701
    %v3373 = vmul.f32 %v3365, 1.050701
    %v3374 = vld [vmem:[#allocation8] sm:$0xff]
    %v3375 = vld [vmem:[#allocation8 + $0x8] sm:$0xff]
    %v3376 = vld [vmem:[#allocation8 + $0x10] sm:$0xff]
    %v3377 = vld [vmem:[#allocation8 + $0x18] sm:$0xff]
    %v3378 = vld [vmem:[#allocation8 + $0x20] sm:$0xff]
    %v3379 = vld [vmem:[#allocation8 + $0x28] sm:$0xff]
    %v3380 = vld [vmem:[#allocation8 + $0x30] sm:$0xff]
    %v3381 = vld [vmem:[#allocation8 + $0x38] sm:$0xff]
    %v3382 = vld [vmem:[#allocation8 + $0x40] sm:$0xff]
    %v3383 = vld [vmem:[#allocation8 + $0x48] sm:$0xff]
    %v3384 = vld [vmem:[#allocation8 + $0x50] sm:$0xff]
    %v3385 = vld [vmem:[#allocation8 + $0x58] sm:$0xff]
    %v3386 = vld [vmem:[#allocation8 + $0x60] sm:$0xff]
    %v3387 = vld [vmem:[#allocation8 + $0x68] sm:$0xff]
    %v3388 = vld [vmem:[#allocation8 + $0x70] sm:$0xff]
    %v3389 = vld [vmem:[#allocation8 + $0x78] sm:$0xff]
    %v3390 = vld [vmem:[#allocation8 + $0x80] sm:$0xff]
    %v3391 = vld [vmem:[#allocation8 + $0x88] sm:$0xff]
    %v3392 = vld [vmem:[#allocation8 + $0x90] sm:$0xff]
    %v3393 = vld [vmem:[#allocation8 + $0x98] sm:$0xff]
    %v3394 = vld [vmem:[#allocation8 + $0xa0] sm:$0xff]
    %v3395 = vld [vmem:[#allocation8 + $0xa8] sm:$0xff]
    %v3396 = vld [vmem:[#allocation8 + $0xb0] sm:$0xff]
    %v3397 = vld [vmem:[#allocation8 + $0xb8] sm:$0xff]
    %v3398 = vld [vmem:[#allocation8 + $0xc0] sm:$0xff]
    %v3399 = vld [vmem:[#allocation8 + $0xc8] sm:$0xff]
    %v3400 = vld [vmem:[#allocation8 + $0xd0] sm:$0xff]
    %v3401 = vld [vmem:[#allocation8 + $0xd8] sm:$0xff]
    %v3402 = vld [vmem:[#allocation8 + $0xe0] sm:$0xff]
    %v3403 = vld [vmem:[#allocation8 + $0xe8] sm:$0xff]
    %v3404 = vld [vmem:[#allocation8 + $0xf0] sm:$0xff]
    %v3405 = vld [vmem:[#allocation8 + $0xf8] sm:$0xff]
    %v3406 = vld [vmem:[#allocation8 + $0x100] sm:$0xff]
    %v3407 = vld [vmem:[#allocation8 + $0x108] sm:$0xff]
    %v3408 = vld [vmem:[#allocation8 + $0x110] sm:$0xff]
    %v3409 = vld [vmem:[#allocation8 + $0x118] sm:$0xff]
    %v3410 = vld [vmem:[#allocation8 + $0x120] sm:$0xff]
    %v3411 = vld [vmem:[#allocation8 + $0x128] sm:$0xff]
    %v3412 = vld [vmem:[#allocation8 + $0x130] sm:$0xff]
    %v3413 = vld [vmem:[#allocation8 + $0x138] sm:$0xff]
    %v3414 = vld [vmem:[#allocation8 + $0x140] sm:$0xff]
    %v3415 = vld [vmem:[#allocation8 + $0x148] sm:$0xff]
    %v3416 = vld [vmem:[#allocation8 + $0x150] sm:$0xff]
    %v3417 = vld [vmem:[#allocation8 + $0x158] sm:$0xff]
    %v3418 = vld [vmem:[#allocation8 + $0x160] sm:$0xff]
    %v3419 = vld [vmem:[#allocation8 + $0x168] sm:$0xff]
    %v3420 = vld [vmem:[#allocation8 + $0x170] sm:$0xff]
    %v3421 = vld [vmem:[#allocation8 + $0x178] sm:$0xff]
    %v3422 = vld [vmem:[#allocation8 + $0x180] sm:$0xff]
    %v3423 = vld [vmem:[#allocation8 + $0x188] sm:$0xff]
    %v3424 = vld [vmem:[#allocation8 + $0x190] sm:$0xff]
    %v3425 = vld [vmem:[#allocation8 + $0x198] sm:$0xff]
    %v3426 = vld [vmem:[#allocation8 + $0x1a0] sm:$0xff]
    %v3427 = vld [vmem:[#allocation8 + $0x1a8] sm:$0xff]
    %v3428 = vld [vmem:[#allocation8 + $0x1b0] sm:$0xff]
    %v3429 = vld [vmem:[#allocation8 + $0x1b8] sm:$0xff]
    %v3430 = vld [vmem:[#allocation8 + $0x1c0] sm:$0xff]
    %v3431 = vld [vmem:[#allocation8 + $0x1c8] sm:$0xff]
    %v3432 = vld [vmem:[#allocation8 + $0x1d0] sm:$0xff]
    %v3433 = vld [vmem:[#allocation8 + $0x1d8] sm:$0xff]
    %v3434 = vld [vmem:[#allocation8 + $0x1e0] sm:$0xff]
    %v3435 = vld [vmem:[#allocation8 + $0x1e8] sm:$0xff]
    %v3436 = vld [vmem:[#allocation8 + $0x1f0] sm:$0xff]
    %v3437 = vld [vmem:[#allocation8 + $0x1f8] sm:$0xff]
    %v3438 = vld [vmem:[#allocation8 + $0x200] sm:$0xff]
    %v3439 = vld [vmem:[#allocation8 + $0x208] sm:$0xff]
    %v3440 = vld [vmem:[#allocation8 + $0x210] sm:$0xff]
    %v3441 = vld [vmem:[#allocation8 + $0x218] sm:$0xff]
    %v3442 = vld [vmem:[#allocation8 + $0x220] sm:$0xff]
    %v3443 = vld [vmem:[#allocation8 + $0x228] sm:$0xff]
    %v3444 = vld [vmem:[#allocation8 + $0x230] sm:$0xff]
    %v3445 = vld [vmem:[#allocation8 + $0x238] sm:$0xff]
    %v3446 = vld [vmem:[#allocation8 + $0x240] sm:$0xff]
    %v3447 = vld [vmem:[#allocation8 + $0x248] sm:$0xff]
    %v3448 = vld [vmem:[#allocation8 + $0x250] sm:$0xff]
    %v3449 = vld [vmem:[#allocation8 + $0x258] sm:$0xff]
    %v3450 = vld [vmem:[#allocation8 + $0x260] sm:$0xff]
    %v3451 = vld [vmem:[#allocation8 + $0x268] sm:$0xff]
    %v3452 = vld [vmem:[#allocation8 + $0x270] sm:$0xff]
    %v3453 = vld [vmem:[#allocation8 + $0x278] sm:$0xff]
    %v3454 = vld [vmem:[#allocation8 + $0x280] sm:$0xff]
    %v3455 = vld [vmem:[#allocation8 + $0x288] sm:$0xff]
    %v3456 = vld [vmem:[#allocation8 + $0x290] sm:$0xff]
    %v3457 = vld [vmem:[#allocation8 + $0x298] sm:$0xff]
    %v3458 = vld [vmem:[#allocation8 + $0x2a0] sm:$0xff]
    %v3459 = vld [vmem:[#allocation8 + $0x2a8] sm:$0xff]
    %v3460 = vld [vmem:[#allocation8 + $0x2b0] sm:$0xff]
    %v3461 = vld [vmem:[#allocation8 + $0x2b8] sm:$0xff]
    %v3462 = vld [vmem:[#allocation8 + $0x2c0] sm:$0xff]
    %v3463 = vld [vmem:[#allocation8 + $0x2c8] sm:$0xff]
    %v3464 = vld [vmem:[#allocation8 + $0x2d0] sm:$0xff]
    %v3465 = vld [vmem:[#allocation8 + $0x2d8] sm:$0xff]
    %v3466 = vld [vmem:[#allocation8 + $0x2e0] sm:$0xff]
    %v3467 = vld [vmem:[#allocation8 + $0x2e8] sm:$0xff]
    %v3468 = vld [vmem:[#allocation8 + $0x2f0] sm:$0xff]
    %v3469 = vld [vmem:[#allocation8 + $0x2f8] sm:$0xff]
    %v3470 = vld [vmem:[#allocation8 + $0x300] sm:$0xff]
    %v3471 = vld [vmem:[#allocation8 + $0x308] sm:$0xff]
    %v3472 = vld [vmem:[#allocation8 + $0x310] sm:$0xff]
    %v3473 = vld [vmem:[#allocation8 + $0x318] sm:$0xff]
    %v3474 = vld [vmem:[#allocation8 + $0x320] sm:$0xff]
    %v3475 = vld [vmem:[#allocation8 + $0x328] sm:$0xff]
    %v3476 = vld [vmem:[#allocation8 + $0x330] sm:$0xff]
    %v3477 = vld [vmem:[#allocation8 + $0x338] sm:$0xff]
    %v3478 = vld [vmem:[#allocation8 + $0x340] sm:$0xff]
    %v3479 = vld [vmem:[#allocation8 + $0x348] sm:$0xff]
    %v3480 = vld [vmem:[#allocation8 + $0x350] sm:$0xff]
    %v3481 = vld [vmem:[#allocation8 + $0x358] sm:$0xff]
    %v3482 = vld [vmem:[#allocation8 + $0x360] sm:$0xff]
    %v3483 = vld [vmem:[#allocation8 + $0x368] sm:$0xff]
    %v3484 = vld [vmem:[#allocation8 + $0x370] sm:$0xff]
    %v3485 = vld [vmem:[#allocation8 + $0x378] sm:$0xff]
    %v3486 = vld [vmem:[#allocation8 + $0x380] sm:$0xff]
    %v3487 = vld [vmem:[#allocation8 + $0x388] sm:$0xff]
    %v3488 = vld [vmem:[#allocation8 + $0x390] sm:$0xff]
    %v3489 = vld [vmem:[#allocation8 + $0x398] sm:$0xff]
    %v3490 = vld [vmem:[#allocation8 + $0x3a0] sm:$0xff]
    %v3491 = vld [vmem:[#allocation8 + $0x3a8] sm:$0xff]
    %v3492 = vld [vmem:[#allocation8 + $0x3b0] sm:$0xff]
    %v3493 = vld [vmem:[#allocation8 + $0x3b8] sm:$0xff]
    %v3494 = vld [vmem:[#allocation8 + $0x3c0] sm:$0xff]
    %v3495 = vld [vmem:[#allocation8 + $0x3c8] sm:$0xff]
    %v3496 = vld [vmem:[#allocation8 + $0x3d0] sm:$0xff]
    %v3497 = vld [vmem:[#allocation8 + $0x3d8] sm:$0xff]
    %v3498 = vld [vmem:[#allocation8 + $0x3e0] sm:$0xff]
    %v3499 = vld [vmem:[#allocation8 + $0x3e8] sm:$0xff]
    %v3500 = vld [vmem:[#allocation8 + $0x3f0] sm:$0xff]
    %v3501 = vld [vmem:[#allocation8 + $0x3f8] sm:$0xff]
    %v3502 = vld [vmem:[#allocation8 + $0x400] sm:$0xff]
    %v3503 = vld [vmem:[#allocation8 + $0x408] sm:$0xff]
    %v3504 = vld [vmem:[#allocation8 + $0x410] sm:$0xff]
    %v3505 = vld [vmem:[#allocation8 + $0x418] sm:$0xff]
    %v3506 = vld [vmem:[#allocation8 + $0x420] sm:$0xff]
    %v3507 = vld [vmem:[#allocation8 + $0x428] sm:$0xff]
    %v3508 = vld [vmem:[#allocation8 + $0x430] sm:$0xff]
    %v3509 = vld [vmem:[#allocation8 + $0x438] sm:$0xff]
    %v3510 = vld [vmem:[#allocation8 + $0x440] sm:$0xff]
    %v3511 = vld [vmem:[#allocation8 + $0x448] sm:$0xff]
    %v3512 = vld [vmem:[#allocation8 + $0x450] sm:$0xff]
    %v3513 = vld [vmem:[#allocation8 + $0x458] sm:$0xff]
    %v3514 = vld [vmem:[#allocation8 + $0x460] sm:$0xff]
    %v3515 = vld [vmem:[#allocation8 + $0x468] sm:$0xff]
    %v3516 = vld [vmem:[#allocation8 + $0x470] sm:$0xff]
    %v3517 = vld [vmem:[#allocation8 + $0x478] sm:$0xff]
    %v3518 = vld [vmem:[#allocation8 + $0x480] sm:$0xff]
    %v3519 = vld [vmem:[#allocation8 + $0x488] sm:$0xff]
    %v3520 = vld [vmem:[#allocation8 + $0x490] sm:$0xff]
    %v3521 = vld [vmem:[#allocation8 + $0x498] sm:$0xff]
    %v3522 = vld [vmem:[#allocation8 + $0x4a0] sm:$0xff]
    %v3523 = vld [vmem:[#allocation8 + $0x4a8] sm:$0xff]
    %v3524 = vld [vmem:[#allocation8 + $0x4b0] sm:$0xff]
    %v3525 = vld [vmem:[#allocation8 + $0x4b8] sm:$0xff]
    %v3526 = vld [vmem:[#allocation8 + $0x4c0] sm:$0xff]
    %v3527 = vld [vmem:[#allocation8 + $0x4c8] sm:$0xff]
    %v3528 = vld [vmem:[#allocation8 + $0x4d0] sm:$0xff]
    %v3529 = vld [vmem:[#allocation8 + $0x4d8] sm:$0xff]
    %v3530 = vld [vmem:[#allocation8 + $0x4e0] sm:$0xff]
    %v3531 = vld [vmem:[#allocation8 + $0x4e8] sm:$0xff]
    %v3532 = vld [vmem:[#allocation8 + $0x4f0] sm:$0xff]
    %v3533 = vld [vmem:[#allocation8 + $0x4f8] sm:$0xff]
    %v3534 = vld [vmem:[#allocation8 + $0x500] sm:$0xff]
    %v3535 = vld [vmem:[#allocation8 + $0x508] sm:$0xff]
    %v3536 = vld [vmem:[#allocation8 + $0x510] sm:$0xff]
    %v3537 = vld [vmem:[#allocation8 + $0x518] sm:$0xff]
    %v3538 = vld [vmem:[#allocation8 + $0x520] sm:$0xff]
    %v3539 = vld [vmem:[#allocation8 + $0x528] sm:$0xff]
    %v3540 = vld [vmem:[#allocation8 + $0x530] sm:$0xff]
    %v3541 = vld [vmem:[#allocation8 + $0x538] sm:$0xff]
    %v3542 = vld [vmem:[#allocation8 + $0x540] sm:$0xff]
    %v3543 = vld [vmem:[#allocation8 + $0x548] sm:$0xff]
    %v3544 = vld [vmem:[#allocation8 + $0x550] sm:$0xff]
    %v3545 = vld [vmem:[#allocation8 + $0x558] sm:$0xff]
    %v3546 = vld [vmem:[#allocation8 + $0x560] sm:$0xff]
    %v3547 = vld [vmem:[#allocation8 + $0x568] sm:$0xff]
    %v3548 = vld [vmem:[#allocation8 + $0x570] sm:$0xff]
    %v3549 = vld [vmem:[#allocation8 + $0x578] sm:$0xff]
    %v3550 = vld [vmem:[#allocation8 + $0x580] sm:$0xff]
    %v3551 = vld [vmem:[#allocation8 + $0x588] sm:$0xff]
    %v3552 = vld [vmem:[#allocation8 + $0x590] sm:$0xff]
    %v3553 = vld [vmem:[#allocation8 + $0x598] sm:$0xff]
    %v3554 = vld [vmem:[#allocation8 + $0x5a0] sm:$0xff]
    %v3555 = vld [vmem:[#allocation8 + $0x5a8] sm:$0xff]
    %v3556 = vld [vmem:[#allocation8 + $0x5b0] sm:$0xff]
    %v3557 = vld [vmem:[#allocation8 + $0x5b8] sm:$0xff]
    %v3558 = vld [vmem:[#allocation8 + $0x5c0] sm:$0xff]
    %v3559 = vld [vmem:[#allocation8 + $0x5c8] sm:$0xff]
    %v3560 = vld [vmem:[#allocation8 + $0x5d0] sm:$0xff]
    %v3561 = vld [vmem:[#allocation8 + $0x5d8] sm:$0xff]
    %v3562 = vld [vmem:[#allocation8 + $0x5e0] sm:$0xff]
    %v3563 = vld [vmem:[#allocation8 + $0x5e8] sm:$0xff]
    %v3564 = vld [vmem:[#allocation8 + $0x5f0] sm:$0xff]
    %v3565 = vld [vmem:[#allocation8 + $0x5f8] sm:$0xff]
    %v3566 = vld [vmem:[#allocation8 + $0x600] sm:$0xff]
    %v3567 = vld [vmem:[#allocation8 + $0x608] sm:$0xff]
    %v3568 = vld [vmem:[#allocation8 + $0x610] sm:$0xff]
    %v3569 = vld [vmem:[#allocation8 + $0x618] sm:$0xff]
    %v3570 = vld [vmem:[#allocation8 + $0x620] sm:$0xff]
    %v3571 = vld [vmem:[#allocation8 + $0x628] sm:$0xff]
    %v3572 = vld [vmem:[#allocation8 + $0x630] sm:$0xff]
    %v3573 = vld [vmem:[#allocation8 + $0x638] sm:$0xff]
    %v3574 = vld [vmem:[#allocation8 + $0x640] sm:$0xff]
    %v3575 = vld [vmem:[#allocation8 + $0x648] sm:$0xff]
    %v3576 = vld [vmem:[#allocation8 + $0x650] sm:$0xff]
    %v3577 = vld [vmem:[#allocation8 + $0x658] sm:$0xff]
    %v3578 = vld [vmem:[#allocation8 + $0x660] sm:$0xff]
    %v3579 = vld [vmem:[#allocation8 + $0x668] sm:$0xff]
    %v3580 = vld [vmem:[#allocation8 + $0x670] sm:$0xff]
    %v3581 = vld [vmem:[#allocation8 + $0x678] sm:$0xff]
    %v3582 = vld [vmem:[#allocation8 + $0x680] sm:$0xff]
    %v3583 = vld [vmem:[#allocation8 + $0x688] sm:$0xff]
    %v3584 = vld [vmem:[#allocation8 + $0x690] sm:$0xff]
    %v3585 = vld [vmem:[#allocation8 + $0x698] sm:$0xff]
    %v3586 = vld [vmem:[#allocation8 + $0x6a0] sm:$0xff]
    %v3587 = vld [vmem:[#allocation8 + $0x6a8] sm:$0xff]
    %v3588 = vld [vmem:[#allocation8 + $0x6b0] sm:$0xff]
    %v3589 = vld [vmem:[#allocation8 + $0x6b8] sm:$0xff]
    %v3590 = vld [vmem:[#allocation8 + $0x6c0] sm:$0xff]
    %v3591 = vld [vmem:[#allocation8 + $0x6c8] sm:$0xff]
    %v3592 = vld [vmem:[#allocation8 + $0x6d0] sm:$0xff]
    %v3593 = vld [vmem:[#allocation8 + $0x6d8] sm:$0xff]
    %v3594 = vld [vmem:[#allocation8 + $0x6e0] sm:$0xff]
    %v3595 = vld [vmem:[#allocation8 + $0x6e8] sm:$0xff]
    %v3596 = vld [vmem:[#allocation8 + $0x6f0] sm:$0xff]
    %v3597 = vld [vmem:[#allocation8 + $0x6f8] sm:$0xff]
    %v3598 = vld [vmem:[#allocation8 + $0x700] sm:$0xff]
    %v3599 = vld [vmem:[#allocation8 + $0x708] sm:$0xff]
    %v3600 = vld [vmem:[#allocation8 + $0x710] sm:$0xff]
    %v3601 = vld [vmem:[#allocation8 + $0x718] sm:$0xff]
    %v3602 = vld [vmem:[#allocation8 + $0x720] sm:$0xff]
    %v3603 = vld [vmem:[#allocation8 + $0x728] sm:$0xff]
    %v3604 = vld [vmem:[#allocation8 + $0x730] sm:$0xff]
    %v3605 = vld [vmem:[#allocation8 + $0x738] sm:$0xff]
    %v3606 = vld [vmem:[#allocation8 + $0x740] sm:$0xff]
    %v3607 = vld [vmem:[#allocation8 + $0x748] sm:$0xff]
    %v3608 = vld [vmem:[#allocation8 + $0x750] sm:$0xff]
    %v3609 = vld [vmem:[#allocation8 + $0x758] sm:$0xff]
    %v3610 = vld [vmem:[#allocation8 + $0x760] sm:$0xff]
    %v3611 = vld [vmem:[#allocation8 + $0x768] sm:$0xff]
    %v3612 = vld [vmem:[#allocation8 + $0x770] sm:$0xff]
    %v3613 = vld [vmem:[#allocation8 + $0x778] sm:$0xff]
    %v3614 = vld [vmem:[#allocation8 + $0x780] sm:$0xff]
    %v3615 = vld [vmem:[#allocation8 + $0x788] sm:$0xff]
    %v3616 = vld [vmem:[#allocation8 + $0x790] sm:$0xff]
    %v3617 = vld [vmem:[#allocation8 + $0x798] sm:$0xff]
    %v3618 = vld [vmem:[#allocation8 + $0x7a0] sm:$0xff]
    %v3619 = vld [vmem:[#allocation8 + $0x7a8] sm:$0xff]
    %v3620 = vld [vmem:[#allocation8 + $0x7b0] sm:$0xff]
    %v3621 = vld [vmem:[#allocation8 + $0x7b8] sm:$0xff]
    %v3622 = vld [vmem:[#allocation8 + $0x7c0] sm:$0xff]
    %v3623 = vld [vmem:[#allocation8 + $0x7c8] sm:$0xff]
    %v3624 = vld [vmem:[#allocation8 + $0x7d0] sm:$0xff]
    %v3625 = vld [vmem:[#allocation8 + $0x7d8] sm:$0xff]
    %v3626 = vld [vmem:[#allocation8 + $0x7e0] sm:$0xff]
    %v3627 = vld [vmem:[#allocation8 + $0x7e8] sm:$0xff]
    %v3628 = vld [vmem:[#allocation8 + $0x7f0] sm:$0xff]
    %v3629 = vld [vmem:[#allocation8 + $0x7f8] sm:$0xff]
    %v3630 = vld [vmem:[#allocation10] sm:$0x3]
    %v3632 = vlaneseq
    %v3633 = vshrl.u32 %v3632, 7
    %v3634 = vsub.s32 0, %v3633
    %v3635 = vrot.slane %v3630, %v3634
    %v3636 = vlaneseq
    %v3637 = vshrl.u32 %v3636, 7
    %v3638 = vsub.s32 1, %v3637
    %v3639 = vrot.slane %v3630, %v3638
    %3642 = vmatprep.subr.mxu0 %v3405
    %3643 = vmatpush1.msra.mxu0 %v3404
    %3644 = vmatprep.subr.mxu0 %v3403
    %3645 = vmatpush1.msra.mxu0 %v3402
    %3646 = vmatprep.subr.mxu0 %v3401
    %3647 = vmatpush1.msra.mxu0 %v3400
    %3648 = vmatprep.subr.mxu0 %v3399
    %3649 = vmatpush1.msra.mxu0 %v3398
    %3650 = vmatprep.subr.mxu0 %v3397
    %3651 = vmatpush1.msra.mxu0 %v3396
    %3652 = vmatprep.subr.mxu0 %v3395
    %3653 = vmatpush1.msra.mxu0 %v3394
    %3654 = vmatprep.subr.mxu0 %v3393
    %3655 = vmatpush1.msra.mxu0 %v3392
    %3656 = vmatprep.subr.mxu0 %v3391
    %3657 = vmatpush1.msra.mxu0 %v3390
    %3658 = vmatprep.subr.mxu0 %v3389
    %3659 = vmatpush1.msra.mxu0 %v3388
    %3660 = vmatprep.subr.mxu0 %v3387
    %3661 = vmatpush1.msra.mxu0 %v3386
    %3662 = vmatprep.subr.mxu0 %v3385
    %3663 = vmatpush1.msra.mxu0 %v3384
    %3664 = vmatprep.subr.mxu0 %v3383
    %3665 = vmatpush1.msra.mxu0 %v3382
    %3666 = vmatprep.subr.mxu0 %v3381
    %3667 = vmatpush1.msra.mxu0 %v3380
    %3668 = vmatprep.subr.mxu0 %v3379
    %3669 = vmatpush1.msra.mxu0 %v3378
    %3670 = vmatprep.subr.mxu0 %v3377
    %3671 = vmatpush1.msra.mxu0 %v3376
    %3672 = vmatprep.subr.mxu0 %v3375
    %3673 = vmatpush1.msra.mxu0 %v3374
    %3674 = vmatprep.subr.mxu0 %v3437
    %3675 = vmatpush2.msra.mxu0 %v3436
    %3676 = vmatprep.subr.mxu0 %v3435
    %3677 = vmatpush2.msra.mxu0 %v3434
    %3678 = vmatprep.subr.mxu0 %v3433
    %3679 = vmatpush2.msra.mxu0 %v3432
    %3680 = vmatprep.subr.mxu0 %v3431
    %3681 = vmatpush2.msra.mxu0 %v3430
    %3682 = vmatprep.subr.mxu0 %v3429
    %3683 = vmatpush2.msra.mxu0 %v3428
    %3684 = vmatprep.subr.mxu0 %v3427
    %3685 = vmatpush2.msra.mxu0 %v3426
    %3686 = vmatprep.subr.mxu0 %v3425
    %3687 = vmatpush2.msra.mxu0 %v3424
    %3688 = vmatprep.subr.mxu0 %v3423
    %3689 = vmatpush2.msra.mxu0 %v3422
    %3690 = vmatprep.subr.mxu0 %v3421
    %3691 = vmatpush2.msra.mxu0 %v3420
    %3692 = vmatprep.subr.mxu0 %v3419
    %3693 = vmatpush2.msra.mxu0 %v3418
    %3694 = vmatprep.subr.mxu0 %v3417
    %3695 = vmatpush2.msra.mxu0 %v3416
    %3696 = vmatprep.subr.mxu0 %v3415
    %3697 = vmatpush2.msra.mxu0 %v3414
    %3698 = vmatprep.subr.mxu0 %v3413
    %3699 = vmatpush2.msra.mxu0 %v3412
    %3700 = vmatprep.subr.mxu0 %v3411
    %3701 = vmatpush2.msra.mxu0 %v3410
    %3702 = vmatprep.subr.mxu0 %v3409
    %3703 = vmatpush2.msra.mxu0 %v3408
    %3704 = vmatprep.subr.mxu0 %v3407
    %3705 = vmatpush2.msra.mxu0 %v3406
    %3706 = vmatprep.mubr.f32.mxu0 %v3367
    %3707 = vmatmul.mubr.f32.gmra.mxu0 %v3366
    %v3708 = vpop.f32.mrf.mxu0
    %v3709 = vadd.f32 %v3635, %v3708
    %v3710 = vpop.f32.mrf.mxu0
    %v3711 = vadd.f32 %v3639, %v3710
    %3712 = vdwg.mxu0
    %3713 = vmatprep.subr.mxu0 %v3469
    %3714 = vmatpush1.msra.mxu0 %v3468
    %3715 = vmatprep.subr.mxu0 %v3467
    %3716 = vmatpush1.msra.mxu0 %v3466
    %3717 = vmatprep.subr.mxu0 %v3465
    %3718 = vmatpush1.msra.mxu0 %v3464
    %3719 = vmatprep.subr.mxu0 %v3463
    %3720 = vmatpush1.msra.mxu0 %v3462
    %3721 = vmatprep.subr.mxu0 %v3461
    %3722 = vmatpush1.msra.mxu0 %v3460
    %3723 = vmatprep.subr.mxu0 %v3459
    %3724 = vmatpush1.msra.mxu0 %v3458
    %3725 = vmatprep.subr.mxu0 %v3457
    %3726 = vmatpush1.msra.mxu0 %v3456
    %3727 = vmatprep.subr.mxu0 %v3455
    %3728 = vmatpush1.msra.mxu0 %v3454
    %3729 = vmatprep.subr.mxu0 %v3453
    %3730 = vmatpush1.msra.mxu0 %v3452
    %3731 = vmatprep.subr.mxu0 %v3451
    %3732 = vmatpush1.msra.mxu0 %v3450
    %3733 = vmatprep.subr.mxu0 %v3449
    %3734 = vmatpush1.msra.mxu0 %v3448
    %3735 = vmatprep.subr.mxu0 %v3447
    %3736 = vmatpush1.msra.mxu0 %v3446
    %3737 = vmatprep.subr.mxu0 %v3445
    %3738 = vmatpush1.msra.mxu0 %v3444
    %3739 = vmatprep.subr.mxu0 %v3443
    %3740 = vmatpush1.msra.mxu0 %v3442
    %3741 = vmatprep.subr.mxu0 %v3441
    %3742 = vmatpush1.msra.mxu0 %v3440
    %3743 = vmatprep.subr.mxu0 %v3439
    %3744 = vmatpush1.msra.mxu0 %v3438
    %3745 = vmatprep.subr.mxu0 %v3501
    %3746 = vmatpush2.msra.mxu0 %v3500
    %3747 = vmatprep.subr.mxu0 %v3499
    %3748 = vmatpush2.msra.mxu0 %v3498
    %3749 = vmatprep.subr.mxu0 %v3497
    %3750 = vmatpush2.msra.mxu0 %v3496
    %3751 = vmatprep.subr.mxu0 %v3495
    %3752 = vmatpush2.msra.mxu0 %v3494
    %3753 = vmatprep.subr.mxu0 %v3493
    %3754 = vmatpush2.msra.mxu0 %v3492
    %3755 = vmatprep.subr.mxu0 %v3491
    %3756 = vmatpush2.msra.mxu0 %v3490
    %3757 = vmatprep.subr.mxu0 %v3489
    %3758 = vmatpush2.msra.mxu0 %v3488
    %3759 = vmatprep.subr.mxu0 %v3487
    %3760 = vmatpush2.msra.mxu0 %v3486
    %3761 = vmatprep.subr.mxu0 %v3485
    %3762 = vmatpush2.msra.mxu0 %v3484
    %3763 = vmatprep.subr.mxu0 %v3483
    %3764 = vmatpush2.msra.mxu0 %v3482
    %3765 = vmatprep.subr.mxu0 %v3481
    %3766 = vmatpush2.msra.mxu0 %v3480
    %3767 = vmatprep.subr.mxu0 %v3479
    %3768 = vmatpush2.msra.mxu0 %v3478
    %3769 = vmatprep.subr.mxu0 %v3477
    %3770 = vmatpush2.msra.mxu0 %v3476
    %3771 = vmatprep.subr.mxu0 %v3475
    %3772 = vmatpush2.msra.mxu0 %v3474
    %3773 = vmatprep.subr.mxu0 %v3473
    %3774 = vmatpush2.msra.mxu0 %v3472
    %3775 = vmatprep.subr.mxu0 %v3471
    %3776 = vmatpush2.msra.mxu0 %v3470
    %3777 = vmatprep.mubr.f32.mxu0 %v3369
    %3778 = vmatmul.mubr.f32.gmra.mxu0 %v3368
    %v3779 = vpop.f32.mrf.mxu0
    %v3780 = vadd.f32 %v3709, %v3779
    %v3781 = vpop.f32.mrf.mxu0
    %v3782 = vadd.f32 %v3711, %v3781
    %3783 = vdwg.mxu0
    %3784 = vmatprep.subr.mxu0 %v3533
    %3785 = vmatpush1.msra.mxu0 %v3532
    %3786 = vmatprep.subr.mxu0 %v3531
    %3787 = vmatpush1.msra.mxu0 %v3530
    %3788 = vmatprep.subr.mxu0 %v3529
    %3789 = vmatpush1.msra.mxu0 %v3528
    %3790 = vmatprep.subr.mxu0 %v3527
    %3791 = vmatpush1.msra.mxu0 %v3526
    %3792 = vmatprep.subr.mxu0 %v3525
    %3793 = vmatpush1.msra.mxu0 %v3524
    %3794 = vmatprep.subr.mxu0 %v3523
    %3795 = vmatpush1.msra.mxu0 %v3522
    %3796 = vmatprep.subr.mxu0 %v3521
    %3797 = vmatpush1.msra.mxu0 %v3520
    %3798 = vmatprep.subr.mxu0 %v3519
    %3799 = vmatpush1.msra.mxu0 %v3518
    %3800 = vmatprep.subr.mxu0 %v3517
    %3801 = vmatpush1.msra.mxu0 %v3516
    %3802 = vmatprep.subr.mxu0 %v3515
    %3803 = vmatpush1.msra.mxu0 %v3514
    %3804 = vmatprep.subr.mxu0 %v3513
    %3805 = vmatpush1.msra.mxu0 %v3512
    %3806 = vmatprep.subr.mxu0 %v3511
    %3807 = vmatpush1.msra.mxu0 %v3510
    %3808 = vmatprep.subr.mxu0 %v3509
    %3809 = vmatpush1.msra.mxu0 %v3508
    %3810 = vmatprep.subr.mxu0 %v3507
    %3811 = vmatpush1.msra.mxu0 %v3506
    %3812 = vmatprep.subr.mxu0 %v3505
    %3813 = vmatpush1.msra.mxu0 %v3504
    %3814 = vmatprep.subr.mxu0 %v3503
    %3815 = vmatpush1.msra.mxu0 %v3502
    %3816 = vmatprep.subr.mxu0 %v3565
    %3817 = vmatpush2.msra.mxu0 %v3564
    %3818 = vmatprep.subr.mxu0 %v3563
    %3819 = vmatpush2.msra.mxu0 %v3562
    %3820 = vmatprep.subr.mxu0 %v3561
    %3821 = vmatpush2.msra.mxu0 %v3560
    %3822 = vmatprep.subr.mxu0 %v3559
    %3823 = vmatpush2.msra.mxu0 %v3558
    %3824 = vmatprep.subr.mxu0 %v3557
    %3825 = vmatpush2.msra.mxu0 %v3556
    %3826 = vmatprep.subr.mxu0 %v3555
    %3827 = vmatpush2.msra.mxu0 %v3554
    %3828 = vmatprep.subr.mxu0 %v3553
    %3829 = vmatpush2.msra.mxu0 %v3552
    %3830 = vmatprep.subr.mxu0 %v3551
    %3831 = vmatpush2.msra.mxu0 %v3550
    %3832 = vmatprep.subr.mxu0 %v3549
    %3833 = vmatpush2.msra.mxu0 %v3548
    %3834 = vmatprep.subr.mxu0 %v3547
    %3835 = vmatpush2.msra.mxu0 %v3546
    %3836 = vmatprep.subr.mxu0 %v3545
    %3837 = vmatpush2.msra.mxu0 %v3544
    %3838 = vmatprep.subr.mxu0 %v3543
    %3839 = vmatpush2.msra.mxu0 %v3542
    %3840 = vmatprep.subr.mxu0 %v3541
    %3841 = vmatpush2.msra.mxu0 %v3540
    %3842 = vmatprep.subr.mxu0 %v3539
    %3843 = vmatpush2.msra.mxu0 %v3538
    %3844 = vmatprep.subr.mxu0 %v3537
    %3845 = vmatpush2.msra.mxu0 %v3536
    %3846 = vmatprep.subr.mxu0 %v3535
    %3847 = vmatpush2.msra.mxu0 %v3534
    %3848 = vmatprep.mubr.f32.mxu0 %v3371
    %3849 = vmatmul.mubr.f32.gmra.mxu0 %v3370
    %v3850 = vpop.f32.mrf.mxu0
    %v3851 = vadd.f32 %v3780, %v3850
    %v3852 = vpop.f32.mrf.mxu0
    %v3853 = vadd.f32 %v3782, %v3852
    %3854 = vdwg.mxu0
    %3855 = vmatprep.subr.mxu0 %v3597
    %3856 = vmatpush1.msra.mxu0 %v3596
    %3857 = vmatprep.subr.mxu0 %v3595
    %3858 = vmatpush1.msra.mxu0 %v3594
    %3859 = vmatprep.subr.mxu0 %v3593
    %3860 = vmatpush1.msra.mxu0 %v3592
    %3861 = vmatprep.subr.mxu0 %v3591
    %3862 = vmatpush1.msra.mxu0 %v3590
    %3863 = vmatprep.subr.mxu0 %v3589
    %3864 = vmatpush1.msra.mxu0 %v3588
    %3865 = vmatprep.subr.mxu0 %v3587
    %3866 = vmatpush1.msra.mxu0 %v3586
    %3867 = vmatprep.subr.mxu0 %v3585
    %3868 = vmatpush1.msra.mxu0 %v3584
    %3869 = vmatprep.subr.mxu0 %v3583
    %3870 = vmatpush1.msra.mxu0 %v3582
    %3871 = vmatprep.subr.mxu0 %v3581
    %3872 = vmatpush1.msra.mxu0 %v3580
    %3873 = vmatprep.subr.mxu0 %v3579
    %3874 = vmatpush1.msra.mxu0 %v3578
    %3875 = vmatprep.subr.mxu0 %v3577
    %3876 = vmatpush1.msra.mxu0 %v3576
    %3877 = vmatprep.subr.mxu0 %v3575
    %3878 = vmatpush1.msra.mxu0 %v3574
    %3879 = vmatprep.subr.mxu0 %v3573
    %3880 = vmatpush1.msra.mxu0 %v3572
    %3881 = vmatprep.subr.mxu0 %v3571
    %3882 = vmatpush1.msra.mxu0 %v3570
    %3883 = vmatprep.subr.mxu0 %v3569
    %3884 = vmatpush1.msra.mxu0 %v3568
    %3885 = vmatprep.subr.mxu0 %v3567
    %3886 = vmatpush1.msra.mxu0 %v3566
    %3887 = vmatprep.subr.mxu0 %v3629
    %3888 = vmatpush2.msra.mxu0 %v3628
    %3889 = vmatprep.subr.mxu0 %v3627
    %3890 = vmatpush2.msra.mxu0 %v3626
    %3891 = vmatprep.subr.mxu0 %v3625
    %3892 = vmatpush2.msra.mxu0 %v3624
    %3893 = vmatprep.subr.mxu0 %v3623
    %3894 = vmatpush2.msra.mxu0 %v3622
    %3895 = vmatprep.subr.mxu0 %v3621
    %3896 = vmatpush2.msra.mxu0 %v3620
    %3897 = vmatprep.subr.mxu0 %v3619
    %3898 = vmatpush2.msra.mxu0 %v3618
    %3899 = vmatprep.subr.mxu0 %v3617
    %3900 = vmatpush2.msra.mxu0 %v3616
    %3901 = vmatprep.subr.mxu0 %v3615
    %3902 = vmatpush2.msra.mxu0 %v3614
    %3903 = vmatprep.subr.mxu0 %v3613
    %3904 = vmatpush2.msra.mxu0 %v3612
    %3905 = vmatprep.subr.mxu0 %v3611
    %3906 = vmatpush2.msra.mxu0 %v3610
    %3907 = vmatprep.subr.mxu0 %v3609
    %3908 = vmatpush2.msra.mxu0 %v3608
    %3909 = vmatprep.subr.mxu0 %v3607
    %3910 = vmatpush2.msra.mxu0 %v3606
    %3911 = vmatprep.subr.mxu0 %v3605
    %3912 = vmatpush2.msra.mxu0 %v3604
    %3913 = vmatprep.subr.mxu0 %v3603
    %3914 = vmatpush2.msra.mxu0 %v3602
    %3915 = vmatprep.subr.mxu0 %v3601
    %3916 = vmatpush2.msra.mxu0 %v3600
    %3917 = vmatprep.subr.mxu0 %v3599
    %3918 = vmatpush2.msra.mxu0 %v3598
    %3919 = vmatprep.mubr.f32.mxu0 %v3373
    %3920 = vmatmul.mubr.f32.gmra.mxu0 %v3372
    %v3921 = vpop.f32.mrf.mxu0
    %v3922 = vadd.f32 %v3851, %v3921
    %v3923 = vpop.f32.mrf.mxu0
    %v3924 = vadd.f32 %v3853, %v3923
    %3925 = vdwg.mxu0
    %v3926 = vmin.f32 %v3922, 0.0
    %v3927 = vmin.f32 %v3924, 0.0
    %v3928 = vmul.f32 %v3926, 1.442695
    %v3929 = vpow.pop %v3928
    %v3930 = vmul.f32 %v3927, 1.442695
    %v3931 = vpow.pop %v3930
    %v3932 = vsub.f32 %v3929, 1.0
    %v3933 = vsub.f32 %v3931, 1.0
    %v3934 = vmul.f32 %v3932, 1.6732632
    %v3935 = vmul.f32 %v3933, 1.6732632
    %vm3936 = vcmp.gt.f32.partialorder %v3922, 0.0
    %vm3937 = vcmp.gt.f32.partialorder %v3924, 0.0
    %v3938 = vsel %vm3936, %v3922, %v3934
    %v3939 = vsel %vm3937, %v3924, %v3935
    %v3940 = vmul.f32 %v3938, 1.050701
    %v3941 = vmul.f32 %v3939, 1.050701
    %v3942 = vld [vmem:[#allocation11] sm:$0xff]
    %v3943 = vld [vmem:[#allocation11 + $0x8] sm:$0xff]
    %v3944 = vld [vmem:[#allocation11 + $0x10] sm:$0xff]
    %v3945 = vld [vmem:[#allocation11 + $0x18] sm:$0xff]
    %v3946 = vld [vmem:[#allocation11 + $0x20] sm:$0xff]
    %v3947 = vld [vmem:[#allocation11 + $0x28] sm:$0xff]
    %v3948 = vld [vmem:[#allocation11 + $0x30] sm:$0xff]
    %v3949 = vld [vmem:[#allocation11 + $0x38] sm:$0xff]
    %v3950 = vld [vmem:[#allocation11 + $0x40] sm:$0xff]
    %v3951 = vld [vmem:[#allocation11 + $0x48] sm:$0xff]
    %v3952 = vld [vmem:[#allocation11 + $0x50] sm:$0xff]
    %v3953 = vld [vmem:[#allocation11 + $0x58] sm:$0xff]
    %v3954 = vld [vmem:[#allocation11 + $0x60] sm:$0xff]
    %v3955 = vld [vmem:[#allocation11 + $0x68] sm:$0xff]
    %v3956 = vld [vmem:[#allocation11 + $0x70] sm:$0xff]
    %v3957 = vld [vmem:[#allocation11 + $0x78] sm:$0xff]
    %v3958 = vld [vmem:[#allocation11 + $0x80] sm:$0xff]
    %v3959 = vld [vmem:[#allocation11 + $0x88] sm:$0xff]
    %v3960 = vld [vmem:[#allocation11 + $0x90] sm:$0xff]
    %v3961 = vld [vmem:[#allocation11 + $0x98] sm:$0xff]
    %v3962 = vld [vmem:[#allocation11 + $0xa0] sm:$0xff]
    %v3963 = vld [vmem:[#allocation11 + $0xa8] sm:$0xff]
    %v3964 = vld [vmem:[#allocation11 + $0xb0] sm:$0xff]
    %v3965 = vld [vmem:[#allocation11 + $0xb8] sm:$0xff]
    %v3966 = vld [vmem:[#allocation11 + $0xc0] sm:$0xff]
    %v3967 = vld [vmem:[#allocation11 + $0xc8] sm:$0xff]
    %v3968 = vld [vmem:[#allocation11 + $0xd0] sm:$0xff]
    %v3969 = vld [vmem:[#allocation11 + $0xd8] sm:$0xff]
    %v3970 = vld [vmem:[#allocation11 + $0xe0] sm:$0xff]
    %v3971 = vld [vmem:[#allocation11 + $0xe8] sm:$0xff]
    %v3972 = vld [vmem:[#allocation11 + $0xf0] sm:$0xff]
    %v3973 = vld [vmem:[#allocation11 + $0xf8] sm:$0xff]
    %v3974 = vld [vmem:[#allocation13] sm:$0x1]
    %v3976 = vlaneseq
    %v3977 = vshrl.u32 %v3976, 7
    %v3978 = vsub.s32 0, %v3977
    %v3979 = vrot.slane %v3974, %v3978
    %3981 = vmatprep.subr.mxu0 0.0
    %3982 = vmatpush1.msra.mxu0 %v3957
    %3983 = vmatprep.subr.mxu0 0.0
    %3984 = vmatpush1.msra.mxu0 %v3956
    %3985 = vmatprep.subr.mxu0 0.0
    %3986 = vmatpush1.msra.mxu0 %v3955
    %3987 = vmatprep.subr.mxu0 0.0
    %3988 = vmatpush1.msra.mxu0 %v3954
    %3989 = vmatprep.subr.mxu0 0.0
    %3990 = vmatpush1.msra.mxu0 %v3953
    %3991 = vmatprep.subr.mxu0 0.0
    %3992 = vmatpush1.msra.mxu0 %v3952
    %3993 = vmatprep.subr.mxu0 0.0
    %3994 = vmatpush1.msra.mxu0 %v3951
    %3995 = vmatprep.subr.mxu0 0.0
    %3996 = vmatpush1.msra.mxu0 %v3950
    %3997 = vmatprep.subr.mxu0 0.0
    %3998 = vmatpush1.msra.mxu0 %v3949
    %3999 = vmatprep.subr.mxu0 0.0
    %4000 = vmatpush1.msra.mxu0 %v3948
    %4001 = vmatprep.subr.mxu0 0.0
    %4002 = vmatpush1.msra.mxu0 %v3947
    %4003 = vmatprep.subr.mxu0 0.0
    %4004 = vmatpush1.msra.mxu0 %v3946
    %4005 = vmatprep.subr.mxu0 0.0
    %4006 = vmatpush1.msra.mxu0 %v3945
    %4007 = vmatprep.subr.mxu0 0.0
    %4008 = vmatpush1.msra.mxu0 %v3944
    %4009 = vmatprep.subr.mxu0 0.0
    %4010 = vmatpush1.msra.mxu0 %v3943
    %4011 = vmatprep.subr.mxu0 0.0
    %4012 = vmatpush1.msra.mxu0 %v3942
    %4013 = vmatprep.subr.mxu0 0.0
    %4014 = vmatpush2.msra.mxu0 %v3973
    %4015 = vmatprep.subr.mxu0 0.0
    %4016 = vmatpush2.msra.mxu0 %v3972
    %4017 = vmatprep.subr.mxu0 0.0
    %4018 = vmatpush2.msra.mxu0 %v3971
    %4019 = vmatprep.subr.mxu0 0.0
    %4020 = vmatpush2.msra.mxu0 %v3970
    %4021 = vmatprep.subr.mxu0 0.0
    %4022 = vmatpush2.msra.mxu0 %v3969
    %4023 = vmatprep.subr.mxu0 0.0
    %4024 = vmatpush2.msra.mxu0 %v3968
    %4025 = vmatprep.subr.mxu0 0.0
    %4026 = vmatpush2.msra.mxu0 %v3967
    %4027 = vmatprep.subr.mxu0 0.0
    %4028 = vmatpush2.msra.mxu0 %v3966
    %4029 = vmatprep.subr.mxu0 0.0
    %4030 = vmatpush2.msra.mxu0 %v3965
    %4031 = vmatprep.subr.mxu0 0.0
    %4032 = vmatpush2.msra.mxu0 %v3964
    %4033 = vmatprep.subr.mxu0 0.0
    %4034 = vmatpush2.msra.mxu0 %v3963
    %4035 = vmatprep.subr.mxu0 0.0
    %4036 = vmatpush2.msra.mxu0 %v3962
    %4037 = vmatprep.subr.mxu0 0.0
    %4038 = vmatpush2.msra.mxu0 %v3961
    %4039 = vmatprep.subr.mxu0 0.0
    %4040 = vmatpush2.msra.mxu0 %v3960
    %4041 = vmatprep.subr.mxu0 0.0
    %4042 = vmatpush2.msra.mxu0 %v3959
    %4043 = vmatprep.subr.mxu0 0.0
    %4044 = vmatpush2.msra.mxu0 %v3958
    %4045 = vmatprep.mubr.f32.mxu0 %v3941
    %4046 = vmatmul.mubr.f32.gmra.mxu0 %v3940
    %v4047 = vpop.f32.mrf.mxu0
    %v4048 = vadd.f32 %v3979, %v4047
    %v4049 = vpop.f32.mrf.mxu0
    %4050 = vdwg.mxu0
    %v4051 = vmin.f32 %v4048, 0.0
    %v4052 = vmul.f32 %v4051, 1.442695
    %v4053 = vpow.pop %v4052
    %v4054 = vsub.f32 %v4053, 1.0
    %v4055 = vmul.f32 %v4054, 1.6732632
    %vm4056 = vcmp.gt.f32.partialorder %v4048, 0.0
    %v4057 = vsel %vm4056, %v4048, %v4055
    %v4058 = vmul.f32 %v4057, 1.050701
    %v4059 = vld [vmem:[#allocation14] sm:$0xff]
    %v4060 = vld [vmem:[#allocation14 + $0x8] sm:$0xff]
    %v4061 = vld [vmem:[#allocation14 + $0x10] sm:$0xff]
    %v4062 = vld [vmem:[#allocation14 + $0x18] sm:$0xff]
    %v4063 = vld [vmem:[#allocation14 + $0x20] sm:$0xff]
    %v4064 = vld [vmem:[#allocation14 + $0x28] sm:$0xff]
    %v4065 = vld [vmem:[#allocation14 + $0x30] sm:$0xff]
    %v4066 = vld [vmem:[#allocation14 + $0x38] sm:$0xff]
    %v4067 = vld [vmem:[#allocation14 + $0x40] sm:$0xff]
    %v4068 = vld [vmem:[#allocation14 + $0x48] sm:$0xff]
    %v4069 = vld [vmem:[#allocation14 + $0x50] sm:$0xff]
    %v4070 = vld [vmem:[#allocation14 + $0x58] sm:$0xff]
    %v4071 = vld [vmem:[#allocation14 + $0x60] sm:$0xff]
    %v4072 = vld [vmem:[#allocation14 + $0x68] sm:$0xff]
    %v4073 = vld [vmem:[#allocation14 + $0x70] sm:$0xff]
    %v4074 = vld [vmem:[#allocation14 + $0x78] sm:$0xff]
    %v4075 = vld [vmem:[#allocation16] sm:$0x1]
    %v4077 = vlaneseq
    %v4078 = vshrl.u32 %v4077, 7
    %v4079 = vsub.s32 0, %v4078
    %v4080 = vrot.slane %v4075, %v4079
    %4082 = vmatprep.subr.mxu0 0.0
    %4083 = vmatpush1.msra.mxu0 %v4074
    %4084 = vmatprep.subr.mxu0 0.0
    %4085 = vmatpush1.msra.mxu0 %v4073
    %4086 = vmatprep.subr.mxu0 0.0
    %4087 = vmatpush1.msra.mxu0 %v4072
    %4088 = vmatprep.subr.mxu0 0.0
    %4089 = vmatpush1.msra.mxu0 %v4071
    %4090 = vmatprep.subr.mxu0 0.0
    %4091 = vmatpush1.msra.mxu0 %v4070
    %4092 = vmatprep.subr.mxu0 0.0
    %4093 = vmatpush1.msra.mxu0 %v4069
    %4094 = vmatprep.subr.mxu0 0.0
    %4095 = vmatpush1.msra.mxu0 %v4068
    %4096 = vmatprep.subr.mxu0 0.0
    %4097 = vmatpush1.msra.mxu0 %v4067
    %4098 = vmatprep.subr.mxu0 0.0
    %4099 = vmatpush1.msra.mxu0 %v4066
    %4100 = vmatprep.subr.mxu0 0.0
    %4101 = vmatpush1.msra.mxu0 %v4065
    %4102 = vmatprep.subr.mxu0 0.0
    %4103 = vmatpush1.msra.mxu0 %v4064
    %4104 = vmatprep.subr.mxu0 0.0
    %4105 = vmatpush1.msra.mxu0 %v4063
    %4106 = vmatprep.subr.mxu0 0.0
    %4107 = vmatpush1.msra.mxu0 %v4062
    %4108 = vmatprep.subr.mxu0 0.0
    %4109 = vmatpush1.msra.mxu0 %v4061
    %4110 = vmatprep.subr.mxu0 0.0
    %4111 = vmatpush1.msra.mxu0 %v4060
    %4112 = vmatprep.subr.mxu0 0.0
    %4113 = vmatpush1.msra.mxu0 %v4059
    %4114 = vmatprep.subr.mxu0 0.0
    %4115 = vmatpush2.msra.mxu0 0.0
    %4116 = vmatprep.subr.mxu0 0.0
    %4117 = vmatpush2.msra.mxu0 0.0
    %4118 = vmatprep.subr.mxu0 0.0
    %4119 = vmatpush2.msra.mxu0 0.0
    %4120 = vmatprep.subr.mxu0 0.0
    %4121 = vmatpush2.msra.mxu0 0.0
    %4122 = vmatprep.subr.mxu0 0.0
    %4123 = vmatpush2.msra.mxu0 0.0
    %4124 = vmatprep.subr.mxu0 0.0
    %4125 = vmatpush2.msra.mxu0 0.0
    %4126 = vmatprep.subr.mxu0 0.0
    %4127 = vmatpush2.msra.mxu0 0.0
    %4128 = vmatprep.subr.mxu0 0.0
    %4129 = vmatpush2.msra.mxu0 0.0
    %4130 = vmatprep.subr.mxu0 0.0
    %4131 = vmatpush2.msra.mxu0 0.0
    %4132 = vmatprep.subr.mxu0 0.0
    %4133 = vmatpush2.msra.mxu0 0.0
    %4134 = vmatprep.subr.mxu0 0.0
    %4135 = vmatpush2.msra.mxu0 0.0
    %4136 = vmatprep.subr.mxu0 0.0
    %4137 = vmatpush2.msra.mxu0 0.0
    %4138 = vmatprep.subr.mxu0 0.0
    %4139 = vmatpush2.msra.mxu0 0.0
    %4140 = vmatprep.subr.mxu0 0.0
    %4141 = vmatpush2.msra.mxu0 0.0
    %4142 = vmatprep.subr.mxu0 0.0
    %4143 = vmatpush2.msra.mxu0 0.0
    %4144 = vmatprep.subr.mxu0 0.0
    %4145 = vmatpush2.msra.mxu0 0.0
    %4146 = vmatprep.mubr.f32.mxu0 0.0
    %4147 = vmatmul.mubr.f32.gmra.mxu0 %v4058
    %v4148 = vpop.f32.mrf.mxu0
    %v4149 = vadd.f32 %v4080, %v4148
    %v4150 = vpop.f32.mrf.mxu0
    %4151 = vdwg.mxu0
    %4152 = vst [vmem:[#allocation17] sm:$0xff] %v4149
    // Predicated region
    $region74: #{tpu_custom_call.1} parent=1 // pred_check
      _
    $region75: #{tpu_custom_call.1} parent=1 // pred_check_branch
      %4154 = sbr.rel (0) target = $region77
    $region76: #{tpu_custom_call.1} parent=1 // pred_region
      %s4156 = ssub.s32 128, 128
      %4157 = vsyncadd [#allocation4], %s4156
      %s4159 = sshll.u32 [#allocation17], 4
      %s4160 = int_to_ptr.vmem [resolvable:$true] %s4159
      %4162 = dma.vmem_to_hbm [thread:$0]  %s4160, 128, %s9, [#allocation4]
    $region77: #{tpu_custom_call.1} parent=1 // pred_fallthru
      _
    // Predicated region
    $region78: #{tpu_custom_call.1} parent=1 // pred_check
      _
    $region79: #{tpu_custom_call.1} parent=1 // pred_check_branch
      %4164 = sbr.rel (0) target = $region81
    $region80: #{tpu_custom_call.1} parent=1 // pred_region
      %4165 = dma.done [#allocation4], 128
    $region81: #{tpu_custom_call.1} parent=1 // pred_fallthru
      _
    %4166 = vsyncpa [#allocation3], 1
    %4167 = vsyncpa [#allocation6], 1
    %4168 = vsyncpa [#allocation9], 1
    %4169 = vsyncpa [#allocation12], 1
    %4170 = vsyncpa [#allocation15], 1
    %4171 = vsyncpa [#allocation4], 1

</llo_original>
